<compile_context>
chip_gen: v6e
topology: v6e:2x2x1
jax: 0.10.0
libtpu: 0.0.40
codegen_flags: <defaults>
</compile_context>

<pallas_src>
import math
import numpy as np
import jax
import jax.numpy as jnp
from jax.experimental import pallas as pl
from jax.experimental.pallas import tpu as pltpu

SHIFT = 0
REDUCE = 1
SUB = 8        # sublanes per node slot (one full tile row-group)
LANES = 128    # lane width of the state buffer


# ---------------------------------------------------------------------------
# Host-side schedule compilation (pure index bookkeeping, no tensor compute)
# ---------------------------------------------------------------------------

def build_schedule(transitions, T, B):
    """Simulates the shift-reduce stacks on node *indices* only.

    Node ids per batch b (N_slots = 2*T ids per batch, plus one global dummy id):
      id b*N_slots + t       for t in [0, T)    : leaf (buffer) node t
      id b*N_slots + T + r   for r in [0, T-1)  : r-th reduce result of batch b
    Returns [R, B] node-id arrays for left child / right child / output of every
    transition row containing at least one REDUCE (masked batches point at the
    dummy id), the per-batch root node id, and N_slots.
    """
    N_slots = 2 * T
    dummy = B * N_slots                      # masked lanes read/write here (never read by real rows)
    buffers = [list(range(T)) for _ in range(B)]
    stacks = [[] for _ in range(B)]
    red_cnt = [0] * B
    li_rows, ri_rows, oi_rows = [], [], []
    for t_batch in np.asarray(transitions):
        li_row = [dummy] * B
        ri_row = [dummy] * B
        oi_row = [dummy] * B
        any_reduce = False
        for b in range(B):
            tr = int(t_batch[b])
            if tr == SHIFT:
                stacks[b].append(buffers[b].pop())
            elif tr == REDUCE:
                assert len(stacks[b]) >= 2, "Stack too small!"
                r = stacks[b].pop()
                l = stacks[b].pop()
                new_id = T + red_cnt[b]
                red_cnt[b] += 1
                stacks[b].append(new_id)
                li_row[b] = b * N_slots + l
                ri_row[b] = b * N_slots + r
                oi_row[b] = b * N_slots + new_id
                any_reduce = True
        if any_reduce:
            li_rows.append(li_row)
            ri_rows.append(ri_row)
            oi_rows.append(oi_row)
    root = [b * N_slots + stacks[b][-1] for b in range(B)]
    return (np.asarray(li_rows, np.int32), np.asarray(ri_rows, np.int32),
            np.asarray(oi_rows, np.int32), np.asarray(root, np.int32), N_slots)


# ---------------------------------------------------------------------------
# Fused Pallas kernel (single invocation, in-kernel unrolled step loop)
# ---------------------------------------------------------------------------

def make_tree_lstm_kernel(B, T, H, N_slots, R):
    def kernel(li_ref, ri_ref, oi_ref, root_ref,                 # scalar prefetch (SMEM, 1-D, row offsets)
               x_ref, wcg_ref, bcg_ref, wl_ref, wr_ref, br_ref,  # inputs (VMEM, fully resident)
               out_ref,                                          # output (VMEM)
               state_ref):                                       # node state scratch (VMEM)
        # ---- zero-init node state (deterministic dummy/unused rows) ----
        state_ref[...] = jnp.zeros_like(state_ref)

        # ---- leaf/buffer projection: one fused [B*T, E] @ [E, 2H] matmul ----
        proj0 = jnp.dot(x_ref[...], wcg_ref[...],
                        preferred_element_type=jnp.float32) + bcg_ref[...]      # [B*T, 2H]
        c0 = proj0[:, :H]
        h0 = jax.nn.sigmoid(proj0[:, H:]) * jnp.tanh(c0)
        hc0 = jnp.concatenate([h0, c0], axis=1)                                 # [B*T, 2H]  (h | c)
        for b in range(B):                                   # one-time static leaf scatter
            for t in range(T):
                row = (b * N_slots + t) * SUB                 # static row offset
                idx = b * T + t
                state_ref[pl.ds(row, 1), pl.ds(0, 2 * H)] = hc0[idx:idx + 1, :]

        # ---- loop-invariant loads / broadcasts (hoisted out of the step loop) ----
        wl = wl_ref[...]                                      # [H, 5H]
        wr = wr_ref[...]                                      # [H, 5H]
        bias = jnp.broadcast_to(br_ref[...], (B * SUB, 5 * H))

        # ---- R sequential reduce steps, fully unrolled in-kernel ----
        for s in range(R):
            ltiles, rtiles = [], []
            for b in range(B):                                # static unroll over batch
                lo = pl.multiple_of(li_ref[s * B + b], SUB)   # pre-scaled row offsets from SMEM
                ro = pl.multiple_of(ri_ref[s * B + b], SUB)
                ltiles.append(state_ref[pl.ds(lo, SUB), :])   # aligned (8,128) tile load
                rtiles.append(state_ref[pl.ds(ro, SUB), :])
            L = jnp.concatenate(ltiles, axis=0)               # [B*8, 128]; row b*8 is the real row
            Rm = jnp.concatenate(rtiles, axis=0)
            hl, cl = L[:, :H], L[:, H:2 * H]
            hr, cr = Rm[:, :H], Rm[:, H:2 * H]

            # Tree-LSTM reduce cell: [h_l | h_r] @ W + b as two MXU dots (no lane concat)
            proj = (jnp.dot(hl, wl, preferred_element_type=jnp.float32)
                    + jnp.dot(hr, wr, preferred_element_type=jnp.float32)
                    + bias)                                   # [B*8, 5H]
            i_g = proj[:, 0 * H:1 * H]
            f_l = proj[:, 1 * H:2 * H]
            f_r = proj[:, 2 * H:3 * H]
            g_g = proj[:, 3 * H:4 * H]
            o_g = proj[:, 4 * H:5 * H]
            c_new = (jax.nn.sigmoid(i_g) * jnp.tanh(g_g)
                     + jax.nn.sigmoid(f_l) * cl
                     + jax.nn.sigmoid(f_r) * cr)
            h_new = jax.nn.sigmoid(o_g) * jnp.tanh(c_new)
            hc_new = jnp.concatenate([h_new, c_new], axis=1)  # [B*8, 2H]

            for b in range(B):                                # aligned 8-sublane scatter
                oo = pl.multiple_of(oi_ref[s * B + b], SUB)
                state_ref[pl.ds(oo, SUB), pl.ds(0, 2 * H)] = hc_new[b * SUB:(b + 1) * SUB, :]

        # ---- gather the roots' h into the output ----
        roots = []
        for b in range(B):
            ro = pl.multiple_of(root_ref[b], SUB)
            roots.append(state_ref[pl.ds(ro, 1), pl.ds(0, H)])
        out_ref[...] = jnp.concatenate(roots, axis=0)         # [B, H]

    return kernel


# ---------------------------------------------------------------------------
# TreeLSTM module
# ---------------------------------------------------------------------------

class TreeLSTMPallas:
    def __init__(self, input_size, hidden_size, key):
        self.input_size = input_size
        self.hidden_size = hidden_size
        ks = jax.random.split(key, 6)
        bx = 1.0 / math.sqrt(input_size)     # nn.Linear default-ish bound
        bh = 1.0 / math.sqrt(hidden_size)    # TreeLSTMCell.reset_parameters bound

        def u(k, shape, bound):
            return jax.random.uniform(k, shape, jnp.float32, -bound, bound)

        # proj_x / proj_x_gate stored transposed [E, H]; fused into one [E, 2H] matmul.
        wc = u(ks[0], (input_size, hidden_size), bx)
        bc = u(ks[1], (1, hidden_size), bx)
        wg = u(ks[2], (input_size, hidden_size), bx)
        bg = u(ks[3], (1, hidden_size), bx)
        self.wcg = jnp.concatenate([wc, wg], axis=1)            # [E, 2H]
        self.bcg = jnp.concatenate([bc, bg], axis=1)            # [1, 2H]
        # reduce_layer: torch weight [5H, 2H]; stored transposed [2H, 5H], split L/R.
        w_red = u(ks[4], (2 * hidden_size, 5 * hidden_size), bh)
        self.w_red_l = w_red[:hidden_size, :]                   # [H, 5H]
        self.w_red_r = w_red[hidden_size:, :]                   # [H, 5H]
        self.b_red = u(ks[5], (1, 5 * hidden_size), bh)         # [1, 5H]
        # NOTE: dropout layers in the reference are never applied in forward() -> no-ops.

    def __call__(self, x, transitions):
        """x: [B, T, E] (assumed reversed, like the reference); transitions: [2T-1, B]."""
        B, T, E = x.shape
        H = self.hidden_size

        li, ri, oi, root, N_slots = build_schedule(np.asarray(transitions), T, B)
        R = int(li.shape[0])
        assert R >= 1, "TreeLSTM needs at least one REDUCE (T >= 2)"
        nodes = B * N_slots + 1                                  # +1 dummy node
        state_rows = nodes * SUB

        # Pre-scale node ids to (8-sublane) row offsets host-side; flatten to 1-D SMEM arrays.
        li8 = jnp.asarray((li * SUB).reshape(-1), jnp.int32)     # [R*B]
        ri8 = jnp.asarray((ri * SUB).reshape(-1), jnp.int32)
        oi8 = jnp.asarray((oi * SUB).reshape(-1), jnp.int32)
        root8 = jnp.asarray(root * SUB, jnp.int32)               # [B]

        kernel = make_tree_lstm_kernel(B, T, H, N_slots, R)
        const_map = lambda i, *prefetch: (0, 0)                  # everything fully resident

        grid_spec = pltpu.PrefetchScalarGridSpec(
            num_scalar_prefetch=4,
            grid=(1,),                                           # single invocation
            in_specs=[
                pl.BlockSpec((B * T, E), const_map),             # x (flattened)
                pl.BlockSpec((E, 2 * H), const_map),             # wcg
                pl.BlockSpec((1, 2 * H), const_map),             # bcg
                pl.BlockSpec((H, 5 * H), const_map),             # w_red (left half)
                pl.BlockSpec((H, 5 * H), const_map),             # w_red (right half)
                pl.BlockSpec((1, 5 * H), const_map),             # b_red
            ],
            out_specs=pl.BlockSpec((B, H), const_map),
            scratch_shapes=[pltpu.VMEM((state_rows, LANES), jnp.float32)],  # node state (h|c per tile)
        )

        out = pl.pallas_call(
            kernel,
            grid_spec=grid_spec,
            out_shape=jax.ShapeDtypeStruct((B, H), jnp.float32),
            compiler_params=pltpu.CompilerParams(
                dimension_semantics=("arbitrary",)),
        )(li8, ri8, oi8, root8,
          x.reshape(B * T, E), self.wcg, self.bcg,
          self.w_red_l, self.w_red_r, self.b_red)
        return out


# ---------------------------------------------------------------------------
# Pure-numpy reference (mirrors the PyTorch forward) for a correctness check
# ---------------------------------------------------------------------------

def reference_forward(x, transitions, wcg, bcg, wl, wr, br, H):
    x = np.asarray(x, np.float64)
    wcg, bcg = np.asarray(wcg, np.float64), np.asarray(bcg, np.float64)
    wl, wr, br = np.asarray(wl, np.float64), np.asarray(wr, np.float64), np.asarray(br, np.float64)
    sig = lambda z: 1.0 / (1.0 + np.exp(-z))
    B, T, E = x.shape
    proj = x.reshape(B * T, E) @ wcg + bcg
    c, g = proj[:, :H], proj[:, H:]
    h = sig(g) * np.tanh(c)
    buffers = [[np.concatenate([h[b * T + t], c[b * T + t]]) for t in range(T)]
               for b in range(B)]
    stacks = [[] for _ in range(B)]
    for t_batch in np.asarray(transitions):
        for b in range(B):
            tr = int(t_batch[b])
            if tr == SHIFT:
                stacks[b].append(buffers[b].pop())
            elif tr == REDUCE:
                r = stacks[b].pop(); l = stacks[b].pop()
                hl, cl = l[:H], l[H:]
                hr, cr = r[:H], r[H:]
                p = hl @ wl + hr @ wr + br[0]
                i, f_l, f_r, g2, o = (p[0:H], p[H:2*H], p[2*H:3*H], p[3*H:4*H], p[4*H:5*H])
                c2 = sig(i) * np.tanh(g2) + sig(f_l) * cl + sig(f_r) * cr
                h2 = sig(o) * np.tanh(c2)
                stacks[b].append(np.concatenate([h2, c2]))
    return np.stack([stacks[b][-1][:H] for b in range(B)], axis=0).astype(np.float32)


# ---------------------------------------------------------------------------
# main
# ---------------------------------------------------------------------------

if __name__ == "__main__":
    key = jax.random.PRNGKey(0)
    kparam, kx = jax.random.split(key)

    B, T, E, H = 2, 8, 32, 32
    model = TreeLSTMPallas(E, H, kparam)
    x = jax.random.normal(kx, (B, T, E), jnp.float32)

    # Valid shift-reduce transition sequences (T shifts, T-1 reduces each), shape [2T-1, B].
    t0 = [SHIFT, SHIFT] + [REDUCE, SHIFT] * (T - 2) + [REDUCE]
    t1 = [SHIFT, SHIFT, SHIFT, REDUCE, SHIFT, REDUCE, REDUCE,
          SHIFT, SHIFT, REDUCE, REDUCE, SHIFT, SHIFT, REDUCE, REDUCE]
    transitions = np.stack([np.array(t0, np.int32), np.array(t1, np.int32)], axis=1)
    assert transitions.shape == (2 * T - 1, B)

    out = model(x, transitions)
    out = jax.block_until_ready(out)
    assert out.shape == (B, H)
    assert bool(jnp.all(jnp.isfinite(out)))

    ref = reference_forward(np.asarray(x), transitions, model.wcg, model.bcg,
                            model.w_red_l, model.w_red_r, model.b_red, H)
    assert np.allclose(np.asarray(out), ref, atol=1e-2, rtol=1e-2), \
        f"max abs err {np.max(np.abs(np.asarray(out) - ref))}"

    print("KERNEL_OK")
</pallas_src>

<mosaic_0001>
module attributes {stable_mosaic.version = 11 : i64} {
  func.func @kernel(%arg0: i32, %arg1: memref<22xi32, #tpu.memory_space<smem>>, %arg2: memref<22xi32, #tpu.memory_space<smem>>, %arg3: memref<22xi32, #tpu.memory_space<smem>>, %arg4: memref<2xi32, #tpu.memory_space<smem>>, %arg5: memref<16x32xf32, #tpu.memory_space<vmem>>, %arg6: memref<32x64xf32, #tpu.memory_space<vmem>>, %arg7: memref<1x64xf32, #tpu.memory_space<vmem>>, %arg8: memref<32x160xf32, #tpu.memory_space<vmem>>, %arg9: memref<32x160xf32, #tpu.memory_space<vmem>>, %arg10: memref<1x160xf32, #tpu.memory_space<vmem>>, %arg11: memref<2x32xf32, #tpu.memory_space<vmem>>, %arg12: memref<264x128xf32, #tpu.memory_space<vmem>>) attributes {dimension_semantics = [#tpu.dimension_semantics<arbitrary>], iteration_bounds = array<i64: 1>, scalar_prefetch = 4 : i64, scratch_operands = 1 : i64, tpu.core_type = #tpu.core_type<tc>, window_params = [{pipeline_mode = #tpu.pipeline_mode<synchronous>, transform_indices = @transform_0, window_bounds = array<i64: 16, 32>}, {pipeline_mode = #tpu.pipeline_mode<synchronous>, transform_indices = @transform_1, window_bounds = array<i64: 32, 64>}, {pipeline_mode = #tpu.pipeline_mode<synchronous>, transform_indices = @transform_2, window_bounds = array<i64: 1, 64>}, {pipeline_mode = #tpu.pipeline_mode<synchronous>, transform_indices = @transform_3, window_bounds = array<i64: 32, 160>}, {pipeline_mode = #tpu.pipeline_mode<synchronous>, transform_indices = @transform_4, window_bounds = array<i64: 32, 160>}, {pipeline_mode = #tpu.pipeline_mode<synchronous>, transform_indices = @transform_5, window_bounds = array<i64: 1, 160>}, {pipeline_mode = #tpu.pipeline_mode<synchronous>, transform_indices = @transform_6, window_bounds = array<i64: 2, 32>}]} {
    %cst = arith.constant 0.000000e+00 : f32
    %0 = vector.broadcast %cst : f32 to vector<264x128xf32>
    %c0 = arith.constant 0 : index
    %c0_0 = arith.constant 0 : index
    %1 = vector.load %arg12[%c0, %c0_0] : memref<264x128xf32, #tpu.memory_space<vmem>>, vector<264x128xf32>
    tpu.vector_store %arg12[%c0, %c0_0], %0 {strides = array<i32>} : memref<264x128xf32, #tpu.memory_space<vmem>>, vector<264x128xf32>,
    %c0_1 = arith.constant 0 : index
    %c0_2 = arith.constant 0 : index
    %2 = vector.load %arg5[%c0_1, %c0_2] : memref<16x32xf32, #tpu.memory_space<vmem>>, vector<16x32xf32>
    %c0_3 = arith.constant 0 : index
    %c0_4 = arith.constant 0 : index
    %3 = vector.load %arg6[%c0_3, %c0_4] : memref<32x64xf32, #tpu.memory_space<vmem>>, vector<32x64xf32>
    %cst_5 = arith.constant dense<0.000000e+00> : vector<16x64xf32>
    %4 = tpu.matmul %2, %3, %cst_5 {dimension_numbers = #tpu.dot_dimension_numbers<[1], [0], [0], [1], [0, 0, 1, 1], [], []>} : vector<16x32xf32>, vector<32x64xf32>, vector<16x64xf32> -> vector<16x64xf32>
    %c0_6 = arith.constant 0 : index
    %c0_7 = arith.constant 0 : index
    %5 = vector.load %arg7[%c0_6, %c0_7] : memref<1x64xf32, #tpu.memory_space<vmem>>, vector<1x64xf32>
    %6 = vector.broadcast %5 : vector<1x64xf32> to vector<16x64xf32>
    %7 = arith.addf %4, %6 : vector<16x64xf32>
    %8 = vector.extract_strided_slice %7 {offsets = [0, 0], sizes = [16, 32], strides = [1, 1]} : vector<16x64xf32> to vector<16x32xf32>
    %9 = vector.extract_strided_slice %7 {offsets = [0, 32], sizes = [16, 32], strides = [1, 1]} : vector<16x64xf32> to vector<16x32xf32>
    %10 = arith.negf %9 : vector<16x32xf32>
    %11 = math.exp %10 : vector<16x32xf32>
    %cst_8 = arith.constant 1.000000e+00 : f32
    %12 = vector.broadcast %cst_8 : f32 to vector<16x32xf32>
    %13 = arith.addf %12, %11 : vector<16x32xf32>
    %14 = arith.divf %12, %13 : vector<16x32xf32>
    %15 = math.tanh %8 : vector<16x32xf32>
    %16 = arith.mulf %14, %15 : vector<16x32xf32>
    %17 = tpu.concatenate %16, %8 in 1 : vector<16x32xf32>, vector<16x32xf32> -> vector<16x64xf32>
    %18 = vector.extract_strided_slice %17 {offsets = [0, 0], sizes = [1, 64], strides = [1, 1]} : vector<16x64xf32> to vector<1x64xf32>
    %c0_9 = arith.constant 0 : index
    %c0_10 = arith.constant 0 : index
    %19 = vector.load %arg12[%c0_9, %c0_10] : memref<264x128xf32, #tpu.memory_space<vmem>>, vector<1x64xf32>
    tpu.vector_store %arg12[%c0_9, %c0_10], %18 {strides = array<i32>} : memref<264x128xf32, #tpu.memory_space<vmem>>, vector<1x64xf32>,
    %20 = vector.extract_strided_slice %17 {offsets = [1, 0], sizes = [1, 64], strides = [1, 1]} : vector<16x64xf32> to vector<1x64xf32>
    %c8 = arith.constant 8 : index
    %c0_11 = arith.constant 0 : index
    %21 = vector.load %arg12[%c8, %c0_11] : memref<264x128xf32, #tpu.memory_space<vmem>>, vector<1x64xf32>
    tpu.vector_store %arg12[%c8, %c0_11], %20 {strides = array<i32>} : memref<264x128xf32, #tpu.memory_space<vmem>>, vector<1x64xf32>,
    %22 = vector.extract_strided_slice %17 {offsets = [2, 0], sizes = [1, 64], strides = [1, 1]} : vector<16x64xf32> to vector<1x64xf32>
    %c16 = arith.constant 16 : index
    %c0_12 = arith.constant 0 : index
    %23 = vector.load %arg12[%c16, %c0_12] : memref<264x128xf32, #tpu.memory_space<vmem>>, vector<1x64xf32>
    tpu.vector_store %arg12[%c16, %c0_12], %22 {strides = array<i32>} : memref<264x128xf32, #tpu.memory_space<vmem>>, vector<1x64xf32>,
    %24 = vector.extract_strided_slice %17 {offsets = [3, 0], sizes = [1, 64], strides = [1, 1]} : vector<16x64xf32> to vector<1x64xf32>
    %c24 = arith.constant 24 : index
    %c0_13 = arith.constant 0 : index
    %25 = vector.load %arg12[%c24, %c0_13] : memref<264x128xf32, #tpu.memory_space<vmem>>, vector<1x64xf32>
    tpu.vector_store %arg12[%c24, %c0_13], %24 {strides = array<i32>} : memref<264x128xf32, #tpu.memory_space<vmem>>, vector<1x64xf32>,
    %26 = vector.extract_strided_slice %17 {offsets = [4, 0], sizes = [1, 64], strides = [1, 1]} : vector<16x64xf32> to vector<1x64xf32>
    %c32 = arith.constant 32 : index
    %c0_14 = arith.constant 0 : index
    %27 = vector.load %arg12[%c32, %c0_14] : memref<264x128xf32, #tpu.memory_space<vmem>>, vector<1x64xf32>
    tpu.vector_store %arg12[%c32, %c0_14], %26 {strides = array<i32>} : memref<264x128xf32, #tpu.memory_space<vmem>>, vector<1x64xf32>,
    %28 = vector.extract_strided_slice %17 {offsets = [5, 0], sizes = [1, 64], strides = [1, 1]} : vector<16x64xf32> to vector<1x64xf32>
    %c40 = arith.constant 40 : index
    %c0_15 = arith.constant 0 : index
    %29 = vector.load %arg12[%c40, %c0_15] : memref<264x128xf32, #tpu.memory_space<vmem>>, vector<1x64xf32>
    tpu.vector_store %arg12[%c40, %c0_15], %28 {strides = array<i32>} : memref<264x128xf32, #tpu.memory_space<vmem>>, vector<1x64xf32>,
    %30 = vector.extract_strided_slice %17 {offsets = [6, 0], sizes = [1, 64], strides = [1, 1]} : vector<16x64xf32> to vector<1x64xf32>
    %c48 = arith.constant 48 : index
    %c0_16 = arith.constant 0 : index
    %31 = vector.load %arg12[%c48, %c0_16] : memref<264x128xf32, #tpu.memory_space<vmem>>, vector<1x64xf32>
    tpu.vector_store %arg12[%c48, %c0_16], %30 {strides = array<i32>} : memref<264x128xf32, #tpu.memory_space<vmem>>, vector<1x64xf32>,
    %32 = vector.extract_strided_slice %17 {offsets = [7, 0], sizes = [1, 64], strides = [1, 1]} : vector<16x64xf32> to vector<1x64xf32>
    %c56 = arith.constant 56 : index
    %c0_17 = arith.constant 0 : index
    %33 = vector.load %arg12[%c56, %c0_17] : memref<264x128xf32, #tpu.memory_space<vmem>>, vector<1x64xf32>
    tpu.vector_store %arg12[%c56, %c0_17], %32 {strides = array<i32>} : memref<264x128xf32, #tpu.memory_space<vmem>>, vector<1x64xf32>,
    %34 = vector.extract_strided_slice %17 {offsets = [8, 0], sizes = [1, 64], strides = [1, 1]} : vector<16x64xf32> to vector<1x64xf32>
    %c128 = arith.constant 128 : index
    %c0_18 = arith.constant 0 : index
    %35 = vector.load %arg12[%c128, %c0_18] : memref<264x128xf32, #tpu.memory_space<vmem>>, vector<1x64xf32>
    tpu.vector_store %arg12[%c128, %c0_18], %34 {strides = array<i32>} : memref<264x128xf32, #tpu.memory_space<vmem>>, vector<1x64xf32>,
    %36 = vector.extract_strided_slice %17 {offsets = [9, 0], sizes = [1, 64], strides = [1, 1]} : vector<16x64xf32> to vector<1x64xf32>
    %c136 = arith.constant 136 : index
    %c0_19 = arith.constant 0 : index
    %37 = vector.load %arg12[%c136, %c0_19] : memref<264x128xf32, #tpu.memory_space<vmem>>, vector<1x64xf32>
    tpu.vector_store %arg12[%c136, %c0_19], %36 {strides = array<i32>} : memref<264x128xf32, #tpu.memory_space<vmem>>, vector<1x64xf32>,
    %38 = vector.extract_strided_slice %17 {offsets = [10, 0], sizes = [1, 64], strides = [1, 1]} : vector<16x64xf32> to vector<1x64xf32>
    %c144 = arith.constant 144 : index
    %c0_20 = arith.constant 0 : index
    %39 = vector.load %arg12[%c144, %c0_20] : memref<264x128xf32, #tpu.memory_space<vmem>>, vector<1x64xf32>
    tpu.vector_store %arg12[%c144, %c0_20], %38 {strides = array<i32>} : memref<264x128xf32, #tpu.memory_space<vmem>>, vector<1x64xf32>,
    %40 = vector.extract_strided_slice %17 {offsets = [11, 0], sizes = [1, 64], strides = [1, 1]} : vector<16x64xf32> to vector<1x64xf32>
    %c152 = arith.constant 152 : index
    %c0_21 = arith.constant 0 : index
    %41 = vector.load %arg12[%c152, %c0_21] : memref<264x128xf32, #tpu.memory_space<vmem>>, vector<1x64xf32>
    tpu.vector_store %arg12[%c152, %c0_21], %40 {strides = array<i32>} : memref<264x128xf32, #tpu.memory_space<vmem>>, vector<1x64xf32>,
    %42 = vector.extract_strided_slice %17 {offsets = [12, 0], sizes = [1, 64], strides = [1, 1]} : vector<16x64xf32> to vector<1x64xf32>
    %c160 = arith.constant 160 : index
    %c0_22 = arith.constant 0 : index
    %43 = vector.load %arg12[%c160, %c0_22] : memref<264x128xf32, #tpu.memory_space<vmem>>, vector<1x64xf32>
    tpu.vector_store %arg12[%c160, %c0_22], %42 {strides = array<i32>} : memref<264x128xf32, #tpu.memory_space<vmem>>, vector<1x64xf32>,
    %44 = vector.extract_strided_slice %17 {offsets = [13, 0], sizes = [1, 64], strides = [1, 1]} : vector<16x64xf32> to vector<1x64xf32>
    %c168 = arith.constant 168 : index
    %c0_23 = arith.constant 0 : index
    %45 = vector.load %arg12[%c168, %c0_23] : memref<264x128xf32, #tpu.memory_space<vmem>>, vector<1x64xf32>
    tpu.vector_store %arg12[%c168, %c0_23], %44 {strides = array<i32>} : memref<264x128xf32, #tpu.memory_space<vmem>>, vector<1x64xf32>,
    %46 = vector.extract_strided_slice %17 {offsets = [14, 0], sizes = [1, 64], strides = [1, 1]} : vector<16x64xf32> to vector<1x64xf32>
    %c176 = arith.constant 176 : index
    %c0_24 = arith.constant 0 : index
    %47 = vector.load %arg12[%c176, %c0_24] : memref<264x128xf32, #tpu.memory_space<vmem>>, vector<1x64xf32>
    tpu.vector_store %arg12[%c176, %c0_24], %46 {strides = array<i32>} : memref<264x128xf32, #tpu.memory_space<vmem>>, vector<1x64xf32>,
    %48 = vector.extract_strided_slice %17 {offsets = [15, 0], sizes = [1, 64], strides = [1, 1]} : vector<16x64xf32> to vector<1x64xf32>
    %c184 = arith.constant 184 : index
    %c0_25 = arith.constant 0 : index
    %49 = vector.load %arg12[%c184, %c0_25] : memref<264x128xf32, #tpu.memory_space<vmem>>, vector<1x64xf32>
    tpu.vector_store %arg12[%c184, %c0_25], %48 {strides = array<i32>} : memref<264x128xf32, #tpu.memory_space<vmem>>, vector<1x64xf32>,
    %c0_26 = arith.constant 0 : index
    %c0_27 = arith.constant 0 : index
    %50 = vector.load %arg8[%c0_26, %c0_27] : memref<32x160xf32, #tpu.memory_space<vmem>>, vector<32x160xf32>
    %c0_28 = arith.constant 0 : index
    %c0_29 = arith.constant 0 : index
    %51 = vector.load %arg9[%c0_28, %c0_29] : memref<32x160xf32, #tpu.memory_space<vmem>>, vector<32x160xf32>
    %c0_30 = arith.constant 0 : index
    %c0_31 = arith.constant 0 : index
    %52 = vector.load %arg10[%c0_30, %c0_31] : memref<1x160xf32, #tpu.memory_space<vmem>>, vector<1x160xf32>
    %53 = vector.shape_cast %52 : vector<1x160xf32> to vector<1x160xf32>
    %54 = vector.broadcast %53 : vector<1x160xf32> to vector<16x160xf32>
    %c0_32 = arith.constant 0 : index
    %55 = memref.load %arg1[%c0_32] : memref<22xi32, #tpu.memory_space<smem>>
    %56 = tpu.assume_multiple %55, 8 : i32
    %c0_33 = arith.constant 0 : index
    %57 = memref.load %arg2[%c0_33] : memref<22xi32, #tpu.memory_space<smem>>
    %58 = tpu.assume_multiple %57, 8 : i32
    %59 = arith.index_cast %56 : i32 to index
    %c0_34 = arith.constant 0 : index
    %60 = vector.load %arg12[%59, %c0_34] : memref<264x128xf32, #tpu.memory_space<vmem>>, vector<8x128xf32>
    %61 = arith.index_cast %58 : i32 to index
    %c0_35 = arith.constant 0 : index
    %62 = vector.load %arg12[%61, %c0_35] : memref<264x128xf32, #tpu.memory_space<vmem>>, vector<8x128xf32>
    %c1 = arith.constant 1 : index
    %63 = memref.load %arg1[%c1] : memref<22xi32, #tpu.memory_space<smem>>
    %64 = tpu.assume_multiple %63, 8 : i32
    %c1_36 = arith.constant 1 : index
    %65 = memref.load %arg2[%c1_36] : memref<22xi32, #tpu.memory_space<smem>>
    %66 = tpu.assume_multiple %65, 8 : i32
    %67 = arith.index_cast %64 : i32 to index
    %c0_37 = arith.constant 0 : index
    %68 = vector.load %arg12[%67, %c0_37] : memref<264x128xf32, #tpu.memory_space<vmem>>, vector<8x128xf32>
    %69 = arith.index_cast %66 : i32 to index
    %c0_38 = arith.constant 0 : index
    %70 = vector.load %arg12[%69, %c0_38] : memref<264x128xf32, #tpu.memory_space<vmem>>, vector<8x128xf32>
    %71 = tpu.concatenate %60, %68 in 0 : vector<8x128xf32>, vector<8x128xf32> -> vector<16x128xf32>
    %72 = tpu.concatenate %62, %70 in 0 : vector<8x128xf32>, vector<8x128xf32> -> vector<16x128xf32>
    %73 = vector.extract_strided_slice %71 {offsets = [0, 0], sizes = [16, 32], strides = [1, 1]} : vector<16x128xf32> to vector<16x32xf32>
    %74 = vector.extract_strided_slice %71 {offsets = [0, 32], sizes = [16, 32], strides = [1, 1]} : vector<16x128xf32> to vector<16x32xf32>
    %75 = vector.extract_strided_slice %72 {offsets = [0, 0], sizes = [16, 32], strides = [1, 1]} : vector<16x128xf32> to vector<16x32xf32>
    %76 = vector.extract_strided_slice %72 {offsets = [0, 32], sizes = [16, 32], strides = [1, 1]} : vector<16x128xf32> to vector<16x32xf32>
    %cst_39 = arith.constant dense<0.000000e+00> : vector<16x160xf32>
    %77 = tpu.matmul %73, %50, %cst_39 {dimension_numbers = #tpu.dot_dimension_numbers<[1], [0], [0], [1], [0, 0, 1, 1], [], []>} : vector<16x32xf32>, vector<32x160xf32>, vector<16x160xf32> -> vector<16x160xf32>
    %cst_40 = arith.constant dense<0.000000e+00> : vector<16x160xf32>
    %78 = tpu.matmul %75, %51, %cst_40 {dimension_numbers = #tpu.dot_dimension_numbers<[1], [0], [0], [1], [0, 0, 1, 1], [], []>} : vector<16x32xf32>, vector<32x160xf32>, vector<16x160xf32> -> vector<16x160xf32>
    %79 = arith.addf %77, %78 : vector<16x160xf32>
    %80 = arith.addf %79, %54 : vector<16x160xf32>
    %81 = vector.extract_strided_slice %80 {offsets = [0, 0], sizes = [16, 32], strides = [1, 1]} : vector<16x160xf32> to vector<16x32xf32>
    %82 = vector.extract_strided_slice %80 {offsets = [0, 32], sizes = [16, 32], strides = [1, 1]} : vector<16x160xf32> to vector<16x32xf32>
    %83 = vector.extract_strided_slice %80 {offsets = [0, 64], sizes = [16, 32], strides = [1, 1]} : vector<16x160xf32> to vector<16x32xf32>
    %84 = vector.extract_strided_slice %80 {offsets = [0, 96], sizes = [16, 32], strides = [1, 1]} : vector<16x160xf32> to vector<16x32xf32>
    %85 = vector.extract_strided_slice %80 {offsets = [0, 128], sizes = [16, 32], strides = [1, 1]} : vector<16x160xf32> to vector<16x32xf32>
    %86 = arith.negf %81 : vector<16x32xf32>
    %87 = math.exp %86 : vector<16x32xf32>
    %cst_41 = arith.constant 1.000000e+00 : f32
    %88 = vector.broadcast %cst_41 : f32 to vector<16x32xf32>
    %89 = arith.addf %88, %87 : vector<16x32xf32>
    %90 = arith.divf %88, %89 : vector<16x32xf32>
    %91 = math.tanh %84 : vector<16x32xf32>
    %92 = arith.mulf %90, %91 : vector<16x32xf32>
    %93 = arith.negf %82 : vector<16x32xf32>
    %94 = math.exp %93 : vector<16x32xf32>
    %cst_42 = arith.constant 1.000000e+00 : f32
    %95 = vector.broadcast %cst_42 : f32 to vector<16x32xf32>
    %96 = arith.addf %95, %94 : vector<16x32xf32>
    %97 = arith.divf %95, %96 : vector<16x32xf32>
    %98 = arith.mulf %97, %74 : vector<16x32xf32>
    %99 = arith.addf %92, %98 : vector<16x32xf32>
    %100 = arith.negf %83 : vector<16x32xf32>
    %101 = math.exp %100 : vector<16x32xf32>
    %cst_43 = arith.constant 1.000000e+00 : f32
    %102 = vector.broadcast %cst_43 : f32 to vector<16x32xf32>
    %103 = arith.addf %102, %101 : vector<16x32xf32>
    %104 = arith.divf %102, %103 : vector<16x32xf32>
    %105 = arith.mulf %104, %76 : vector<16x32xf32>
    %106 = arith.addf %99, %105 : vector<16x32xf32>
    %107 = arith.negf %85 : vector<16x32xf32>
    %108 = math.exp %107 : vector<16x32xf32>
    %cst_44 = arith.constant 1.000000e+00 : f32
    %109 = vector.broadcast %cst_44 : f32 to vector<16x32xf32>
    %110 = arith.addf %109, %108 : vector<16x32xf32>
    %111 = arith.divf %109, %110 : vector<16x32xf32>
    %112 = math.tanh %106 : vector<16x32xf32>
    %113 = arith.mulf %111, %112 : vector<16x32xf32>
    %114 = tpu.concatenate %113, %106 in 1 : vector<16x32xf32>, vector<16x32xf32> -> vector<16x64xf32>
    %c0_45 = arith.constant 0 : index
    %115 = memref.load %arg3[%c0_45] : memref<22xi32, #tpu.memory_space<smem>>
    %116 = tpu.assume_multiple %115, 8 : i32
    %117 = vector.extract_strided_slice %114 {offsets = [0, 0], sizes = [8, 64], strides = [1, 1]} : vector<16x64xf32> to vector<8x64xf32>
    %118 = arith.index_cast %116 : i32 to index
    %c0_46 = arith.constant 0 : index
    %119 = vector.load %arg12[%118, %c0_46] : memref<264x128xf32, #tpu.memory_space<vmem>>, vector<8x64xf32>
    tpu.vector_store %arg12[%118, %c0_46], %117 {strides = array<i32>} : memref<264x128xf32, #tpu.memory_space<vmem>>, vector<8x64xf32>,
    %c1_47 = arith.constant 1 : index
    %120 = memref.load %arg3[%c1_47] : memref<22xi32, #tpu.memory_space<smem>>
    %121 = tpu.assume_multiple %120, 8 : i32
    %122 = vector.extract_strided_slice %114 {offsets = [8, 0], sizes = [8, 64], strides = [1, 1]} : vector<16x64xf32> to vector<8x64xf32>
    %123 = arith.index_cast %121 : i32 to index
    %c0_48 = arith.constant 0 : index
    %124 = vector.load %arg12[%123, %c0_48] : memref<264x128xf32, #tpu.memory_space<vmem>>, vector<8x64xf32>
    tpu.vector_store %arg12[%123, %c0_48], %122 {strides = array<i32>} : memref<264x128xf32, #tpu.memory_space<vmem>>, vector<8x64xf32>,
    %c2 = arith.constant 2 : index
    %125 = memref.load %arg1[%c2] : memref<22xi32, #tpu.memory_space<smem>>
    %126 = tpu.assume_multiple %125, 8 : i32
    %c2_49 = arith.constant 2 : index
    %127 = memref.load %arg2[%c2_49] : memref<22xi32, #tpu.memory_space<smem>>
    %128 = tpu.assume_multiple %127, 8 : i32
    %129 = arith.index_cast %126 : i32 to index
    %c0_50 = arith.constant 0 : index
    %130 = vector.load %arg12[%129, %c0_50] : memref<264x128xf32, #tpu.memory_space<vmem>>, vector<8x128xf32>
    %131 = arith.index_cast %128 : i32 to index
    %c0_51 = arith.constant 0 : index
    %132 = vector.load %arg12[%131, %c0_51] : memref<264x128xf32, #tpu.memory_space<vmem>>, vector<8x128xf32>
    %c3 = arith.constant 3 : index
    %133 = memref.load %arg1[%c3] : memref<22xi32, #tpu.memory_space<smem>>
    %134 = tpu.assume_multiple %133, 8 : i32
    %c3_52 = arith.constant 3 : index
    %135 = memref.load %arg2[%c3_52] : memref<22xi32, #tpu.memory_space<smem>>
    %136 = tpu.assume_multiple %135, 8 : i32
    %137 = arith.index_cast %134 : i32 to index
    %c0_53 = arith.constant 0 : index
    %138 = vector.load %arg12[%137, %c0_53] : memref<264x128xf32, #tpu.memory_space<vmem>>, vector<8x128xf32>
    %139 = arith.index_cast %136 : i32 to index
    %c0_54 = arith.constant 0 : index
    %140 = vector.load %arg12[%139, %c0_54] : memref<264x128xf32, #tpu.memory_space<vmem>>, vector<8x128xf32>
    %141 = tpu.concatenate %130, %138 in 0 : vector<8x128xf32>, vector<8x128xf32> -> vector<16x128xf32>
    %142 = tpu.concatenate %132, %140 in 0 : vector<8x128xf32>, vector<8x128xf32> -> vector<16x128xf32>
    %143 = vector.extract_strided_slice %141 {offsets = [0, 0], sizes = [16, 32], strides = [1, 1]} : vector<16x128xf32> to vector<16x32xf32>
    %144 = vector.extract_strided_slice %141 {offsets = [0, 32], sizes = [16, 32], strides = [1, 1]} : vector<16x128xf32> to vector<16x32xf32>
    %145 = vector.extract_strided_slice %142 {offsets = [0, 0], sizes = [16, 32], strides = [1, 1]} : vector<16x128xf32> to vector<16x32xf32>
    %146 = vector.extract_strided_slice %142 {offsets = [0, 32], sizes = [16, 32], strides = [1, 1]} : vector<16x128xf32> to vector<16x32xf32>
    %cst_55 = arith.constant dense<0.000000e+00> : vector<16x160xf32>
    %147 = tpu.matmul %143, %50, %cst_55 {dimension_numbers = #tpu.dot_dimension_numbers<[1], [0], [0], [1], [0, 0, 1, 1], [], []>} : vector<16x32xf32>, vector<32x160xf32>, vector<16x160xf32> -> vector<16x160xf32>
    %cst_56 = arith.constant dense<0.000000e+00> : vector<16x160xf32>
    %148 = tpu.matmul %145, %51, %cst_56 {dimension_numbers = #tpu.dot_dimension_numbers<[1], [0], [0], [1], [0, 0, 1, 1], [], []>} : vector<16x32xf32>, vector<32x160xf32>, vector<16x160xf32> -> vector<16x160xf32>
    %149 = arith.addf %147, %148 : vector<16x160xf32>
    %150 = arith.addf %149, %54 : vector<16x160xf32>
    %151 = vector.extract_strided_slice %150 {offsets = [0, 0], sizes = [16, 32], strides = [1, 1]} : vector<16x160xf32> to vector<16x32xf32>
    %152 = vector.extract_strided_slice %150 {offsets = [0, 32], sizes = [16, 32], strides = [1, 1]} : vector<16x160xf32> to vector<16x32xf32>
    %153 = vector.extract_strided_slice %150 {offsets = [0, 64], sizes = [16, 32], strides = [1, 1]} : vector<16x160xf32> to vector<16x32xf32>
    %154 = vector.extract_strided_slice %150 {offsets = [0, 96], sizes = [16, 32], strides = [1, 1]} : vector<16x160xf32> to vector<16x32xf32>
    %155 = vector.extract_strided_slice %150 {offsets = [0, 128], sizes = [16, 32], strides = [1, 1]} : vector<16x160xf32> to vector<16x32xf32>
    %156 = arith.negf %151 : vector<16x32xf32>
    %157 = math.exp %156 : vector<16x32xf32>
    %cst_57 = arith.constant 1.000000e+00 : f32
    %158 = vector.broadcast %cst_57 : f32 to vector<16x32xf32>
    %159 = arith.addf %158, %157 : vector<16x32xf32>
    %160 = arith.divf %158, %159 : vector<16x32xf32>
    %161 = math.tanh %154 : vector<16x32xf32>
    %162 = arith.mulf %160, %161 : vector<16x32xf32>
    %163 = arith.negf %152 : vector<16x32xf32>
    %164 = math.exp %163 : vector<16x32xf32>
    %cst_58 = arith.constant 1.000000e+00 : f32
    %165 = vector.broadcast %cst_58 : f32 to vector<16x32xf32>
    %166 = arith.addf %165, %164 : vector<16x32xf32>
    %167 = arith.divf %165, %166 : vector<16x32xf32>
    %168 = arith.mulf %167, %144 : vector<16x32xf32>
    %169 = arith.addf %162, %168 : vector<16x32xf32>
    %170 = arith.negf %153 : vector<16x32xf32>
    %171 = math.exp %170 : vector<16x32xf32>
    %cst_59 = arith.constant 1.000000e+00 : f32
    %172 = vector.broadcast %cst_59 : f32 to vector<16x32xf32>
    %173 = arith.addf %172, %171 : vector<16x32xf32>
    %174 = arith.divf %172, %173 : vector<16x32xf32>
    %175 = arith.mulf %174, %146 : vector<16x32xf32>
    %176 = arith.addf %169, %175 : vector<16x32xf32>
    %177 = arith.negf %155 : vector<16x32xf32>
    %178 = math.exp %177 : vector<16x32xf32>
    %cst_60 = arith.constant 1.000000e+00 : f32
    %179 = vector.broadcast %cst_60 : f32 to vector<16x32xf32>
    %180 = arith.addf %179, %178 : vector<16x32xf32>
    %181 = arith.divf %179, %180 : vector<16x32xf32>
    %182 = math.tanh %176 : vector<16x32xf32>
    %183 = arith.mulf %181, %182 : vector<16x32xf32>
    %184 = tpu.concatenate %183, %176 in 1 : vector<16x32xf32>, vector<16x32xf32> -> vector<16x64xf32>
    %c2_61 = arith.constant 2 : index
    %185 = memref.load %arg3[%c2_61] : memref<22xi32, #tpu.memory_space<smem>>
    %186 = tpu.assume_multiple %185, 8 : i32
    %187 = vector.extract_strided_slice %184 {offsets = [0, 0], sizes = [8, 64], strides = [1, 1]} : vector<16x64xf32> to vector<8x64xf32>
    %188 = arith.index_cast %186 : i32 to index
    %c0_62 = arith.constant 0 : index
    %189 = vector.load %arg12[%188, %c0_62] : memref<264x128xf32, #tpu.memory_space<vmem>>, vector<8x64xf32>
    tpu.vector_store %arg12[%188, %c0_62], %187 {strides = array<i32>} : memref<264x128xf32, #tpu.memory_space<vmem>>, vector<8x64xf32>,
    %c3_63 = arith.constant 3 : index
    %190 = memref.load %arg3[%c3_63] : memref<22xi32, #tpu.memory_space<smem>>
    %191 = tpu.assume_multiple %190, 8 : i32
    %192 = vector.extract_strided_slice %184 {offsets = [8, 0], sizes = [8, 64], strides = [1, 1]} : vector<16x64xf32> to vector<8x64xf32>
    %193 = arith.index_cast %191 : i32 to index
    %c0_64 = arith.constant 0 : index
    %194 = vector.load %arg12[%193, %c0_64] : memref<264x128xf32, #tpu.memory_space<vmem>>, vector<8x64xf32>
    tpu.vector_store %arg12[%193, %c0_64], %192 {strides = array<i32>} : memref<264x128xf32, #tpu.memory_space<vmem>>, vector<8x64xf32>,
    %c4 = arith.constant 4 : index
    %195 = memref.load %arg1[%c4] : memref<22xi32, #tpu.memory_space<smem>>
    %196 = tpu.assume_multiple %195, 8 : i32
    %c4_65 = arith.constant 4 : index
    %197 = memref.load %arg2[%c4_65] : memref<22xi32, #tpu.memory_space<smem>>
    %198 = tpu.assume_multiple %197, 8 : i32
    %199 = arith.index_cast %196 : i32 to index
    %c0_66 = arith.constant 0 : index
    %200 = vector.load %arg12[%199, %c0_66] : memref<264x128xf32, #tpu.memory_space<vmem>>, vector<8x128xf32>
    %201 = arith.index_cast %198 : i32 to index
    %c0_67 = arith.constant 0 : index
    %202 = vector.load %arg12[%201, %c0_67] : memref<264x128xf32, #tpu.memory_space<vmem>>, vector<8x128xf32>
    %c5 = arith.constant 5 : index
    %203 = memref.load %arg1[%c5] : memref<22xi32, #tpu.memory_space<smem>>
    %204 = tpu.assume_multiple %203, 8 : i32
    %c5_68 = arith.constant 5 : index
    %205 = memref.load %arg2[%c5_68] : memref<22xi32, #tpu.memory_space<smem>>
    %206 = tpu.assume_multiple %205, 8 : i32
    %207 = arith.index_cast %204 : i32 to index
    %c0_69 = arith.constant 0 : index
    %208 = vector.load %arg12[%207, %c0_69] : memref<264x128xf32, #tpu.memory_space<vmem>>, vector<8x128xf32>
    %209 = arith.index_cast %206 : i32 to index
    %c0_70 = arith.constant 0 : index
    %210 = vector.load %arg12[%209, %c0_70] : memref<264x128xf32, #tpu.memory_space<vmem>>, vector<8x128xf32>
    %211 = tpu.concatenate %200, %208 in 0 : vector<8x128xf32>, vector<8x128xf32> -> vector<16x128xf32>
    %212 = tpu.concatenate %202, %210 in 0 : vector<8x128xf32>, vector<8x128xf32> -> vector<16x128xf32>
    %213 = vector.extract_strided_slice %211 {offsets = [0, 0], sizes = [16, 32], strides = [1, 1]} : vector<16x128xf32> to vector<16x32xf32>
    %214 = vector.extract_strided_slice %211 {offsets = [0, 32], sizes = [16, 32], strides = [1, 1]} : vector<16x128xf32> to vector<16x32xf32>
    %215 = vector.extract_strided_slice %212 {offsets = [0, 0], sizes = [16, 32], strides = [1, 1]} : vector<16x128xf32> to vector<16x32xf32>
    %216 = vector.extract_strided_slice %212 {offsets = [0, 32], sizes = [16, 32], strides = [1, 1]} : vector<16x128xf32> to vector<16x32xf32>
    %cst_71 = arith.constant dense<0.000000e+00> : vector<16x160xf32>
    %217 = tpu.matmul %213, %50, %cst_71 {dimension_numbers = #tpu.dot_dimension_numbers<[1], [0], [0], [1], [0, 0, 1, 1], [], []>} : vector<16x32xf32>, vector<32x160xf32>, vector<16x160xf32> -> vector<16x160xf32>
    %cst_72 = arith.constant dense<0.000000e+00> : vector<16x160xf32>
    %218 = tpu.matmul %215, %51, %cst_72 {dimension_numbers = #tpu.dot_dimension_numbers<[1], [0], [0], [1], [0, 0, 1, 1], [], []>} : vector<16x32xf32>, vector<32x160xf32>, vector<16x160xf32> -> vector<16x160xf32>
    %219 = arith.addf %217, %218 : vector<16x160xf32>
    %220 = arith.addf %219, %54 : vector<16x160xf32>
    %221 = vector.extract_strided_slice %220 {offsets = [0, 0], sizes = [16, 32], strides = [1, 1]} : vector<16x160xf32> to vector<16x32xf32>
    %222 = vector.extract_strided_slice %220 {offsets = [0, 32], sizes = [16, 32], strides = [1, 1]} : vector<16x160xf32> to vector<16x32xf32>
    %223 = vector.extract_strided_slice %220 {offsets = [0, 64], sizes = [16, 32], strides = [1, 1]} : vector<16x160xf32> to vector<16x32xf32>
    %224 = vector.extract_strided_slice %220 {offsets = [0, 96], sizes = [16, 32], strides = [1, 1]} : vector<16x160xf32> to vector<16x32xf32>
    %225 = vector.extract_strided_slice %220 {offsets = [0, 128], sizes = [16, 32], strides = [1, 1]} : vector<16x160xf32> to vector<16x32xf32>
    %226 = arith.negf %221 : vector<16x32xf32>
    %227 = math.exp %226 : vector<16x32xf32>
    %cst_73 = arith.constant 1.000000e+00 : f32
    %228 = vector.broadcast %cst_73 : f32 to vector<16x32xf32>
    %229 = arith.addf %228, %227 : vector<16x32xf32>
    %230 = arith.divf %228, %229 : vector<16x32xf32>
    %231 = math.tanh %224 : vector<16x32xf32>
    %232 = arith.mulf %230, %231 : vector<16x32xf32>
    %233 = arith.negf %222 : vector<16x32xf32>
    %234 = math.exp %233 : vector<16x32xf32>
    %cst_74 = arith.constant 1.000000e+00 : f32
    %235 = vector.broadcast %cst_74 : f32 to vector<16x32xf32>
    %236 = arith.addf %235, %234 : vector<16x32xf32>
    %237 = arith.divf %235, %236 : vector<16x32xf32>
    %238 = arith.mulf %237, %214 : vector<16x32xf32>
    %239 = arith.addf %232, %238 : vector<16x32xf32>
    %240 = arith.negf %223 : vector<16x32xf32>
    %241 = math.exp %240 : vector<16x32xf32>
    %cst_75 = arith.constant 1.000000e+00 : f32
    %242 = vector.broadcast %cst_75 : f32 to vector<16x32xf32>
    %243 = arith.addf %242, %241 : vector<16x32xf32>
    %244 = arith.divf %242, %243 : vector<16x32xf32>
    %245 = arith.mulf %244, %216 : vector<16x32xf32>
    %246 = arith.addf %239, %245 : vector<16x32xf32>
    %247 = arith.negf %225 : vector<16x32xf32>
    %248 = math.exp %247 : vector<16x32xf32>
    %cst_76 = arith.constant 1.000000e+00 : f32
    %249 = vector.broadcast %cst_76 : f32 to vector<16x32xf32>
    %250 = arith.addf %249, %248 : vector<16x32xf32>
    %251 = arith.divf %249, %250 : vector<16x32xf32>
    %252 = math.tanh %246 : vector<16x32xf32>
    %253 = arith.mulf %251, %252 : vector<16x32xf32>
    %254 = tpu.concatenate %253, %246 in 1 : vector<16x32xf32>, vector<16x32xf32> -> vector<16x64xf32>
    %c4_77 = arith.constant 4 : index
    %255 = memref.load %arg3[%c4_77] : memref<22xi32, #tpu.memory_space<smem>>
    %256 = tpu.assume_multiple %255, 8 : i32
    %257 = vector.extract_strided_slice %254 {offsets = [0, 0], sizes = [8, 64], strides = [1, 1]} : vector<16x64xf32> to vector<8x64xf32>
    %258 = arith.index_cast %256 : i32 to index
    %c0_78 = arith.constant 0 : index
    %259 = vector.load %arg12[%258, %c0_78] : memref<264x128xf32, #tpu.memory_space<vmem>>, vector<8x64xf32>
    tpu.vector_store %arg12[%258, %c0_78], %257 {strides = array<i32>} : memref<264x128xf32, #tpu.memory_space<vmem>>, vector<8x64xf32>,
    %c5_79 = arith.constant 5 : index
    %260 = memref.load %arg3[%c5_79] : memref<22xi32, #tpu.memory_space<smem>>
    %261 = tpu.assume_multiple %260, 8 : i32
    %262 = vector.extract_strided_slice %254 {offsets = [8, 0], sizes = [8, 64], strides = [1, 1]} : vector<16x64xf32> to vector<8x64xf32>
    %263 = arith.index_cast %261 : i32 to index
    %c0_80 = arith.constant 0 : index
    %264 = vector.load %arg12[%263, %c0_80] : memref<264x128xf32, #tpu.memory_space<vmem>>, vector<8x64xf32>
    tpu.vector_store %arg12[%263, %c0_80], %262 {strides = array<i32>} : memref<264x128xf32, #tpu.memory_space<vmem>>, vector<8x64xf32>,
    %c6 = arith.constant 6 : index
    %265 = memref.load %arg1[%c6] : memref<22xi32, #tpu.memory_space<smem>>
    %266 = tpu.assume_multiple %265, 8 : i32
    %c6_81 = arith.constant 6 : index
    %267 = memref.load %arg2[%c6_81] : memref<22xi32, #tpu.memory_space<smem>>
    %268 = tpu.assume_multiple %267, 8 : i32
    %269 = arith.index_cast %266 : i32 to index
    %c0_82 = arith.constant 0 : index
    %270 = vector.load %arg12[%269, %c0_82] : memref<264x128xf32, #tpu.memory_space<vmem>>, vector<8x128xf32>
    %271 = arith.index_cast %268 : i32 to index
    %c0_83 = arith.constant 0 : index
    %272 = vector.load %arg12[%271, %c0_83] : memref<264x128xf32, #tpu.memory_space<vmem>>, vector<8x128xf32>
    %c7 = arith.constant 7 : index
    %273 = memref.load %arg1[%c7] : memref<22xi32, #tpu.memory_space<smem>>
    %274 = tpu.assume_multiple %273, 8 : i32
    %c7_84 = arith.constant 7 : index
    %275 = memref.load %arg2[%c7_84] : memref<22xi32, #tpu.memory_space<smem>>
    %276 = tpu.assume_multiple %275, 8 : i32
    %277 = arith.index_cast %274 : i32 to index
    %c0_85 = arith.constant 0 : index
    %278 = vector.load %arg12[%277, %c0_85] : memref<264x128xf32, #tpu.memory_space<vmem>>, vector<8x128xf32>
    %279 = arith.index_cast %276 : i32 to index
    %c0_86 = arith.constant 0 : index
    %280 = vector.load %arg12[%279, %c0_86] : memref<264x128xf32, #tpu.memory_space<vmem>>, vector<8x128xf32>
    %281 = tpu.concatenate %270, %278 in 0 : vector<8x128xf32>, vector<8x128xf32> -> vector<16x128xf32>
    %282 = tpu.concatenate %272, %280 in 0 : vector<8x128xf32>, vector<8x128xf32> -> vector<16x128xf32>
    %283 = vector.extract_strided_slice %281 {offsets = [0, 0], sizes = [16, 32], strides = [1, 1]} : vector<16x128xf32> to vector<16x32xf32>
    %284 = vector.extract_strided_slice %281 {offsets = [0, 32], sizes = [16, 32], strides = [1, 1]} : vector<16x128xf32> to vector<16x32xf32>
    %285 = vector.extract_strided_slice %282 {offsets = [0, 0], sizes = [16, 32], strides = [1, 1]} : vector<16x128xf32> to vector<16x32xf32>
    %286 = vector.extract_strided_slice %282 {offsets = [0, 32], sizes = [16, 32], strides = [1, 1]} : vector<16x128xf32> to vector<16x32xf32>
    %cst_87 = arith.constant dense<0.000000e+00> : vector<16x160xf32>
    %287 = tpu.matmul %283, %50, %cst_87 {dimension_numbers = #tpu.dot_dimension_numbers<[1], [0], [0], [1], [0, 0, 1, 1], [], []>} : vector<16x32xf32>, vector<32x160xf32>, vector<16x160xf32> -> vector<16x160xf32>
    %cst_88 = arith.constant dense<0.000000e+00> : vector<16x160xf32>
    %288 = tpu.matmul %285, %51, %cst_88 {dimension_numbers = #tpu.dot_dimension_numbers<[1], [0], [0], [1], [0, 0, 1, 1], [], []>} : vector<16x32xf32>, vector<32x160xf32>, vector<16x160xf32> -> vector<16x160xf32>
    %289 = arith.addf %287, %288 : vector<16x160xf32>
    %290 = arith.addf %289, %54 : vector<16x160xf32>
    %291 = vector.extract_strided_slice %290 {offsets = [0, 0], sizes = [16, 32], strides = [1, 1]} : vector<16x160xf32> to vector<16x32xf32>
    %292 = vector.extract_strided_slice %290 {offsets = [0, 32], sizes = [16, 32], strides = [1, 1]} : vector<16x160xf32> to vector<16x32xf32>
    %293 = vector.extract_strided_slice %290 {offsets = [0, 64], sizes = [16, 32], strides = [1, 1]} : vector<16x160xf32> to vector<16x32xf32>
    %294 = vector.extract_strided_slice %290 {offsets = [0, 96], sizes = [16, 32], strides = [1, 1]} : vector<16x160xf32> to vector<16x32xf32>
    %295 = vector.extract_strided_slice %290 {offsets = [0, 128], sizes = [16, 32], strides = [1, 1]} : vector<16x160xf32> to vector<16x32xf32>
    %296 = arith.negf %291 : vector<16x32xf32>
    %297 = math.exp %296 : vector<16x32xf32>
    %cst_89 = arith.constant 1.000000e+00 : f32
    %298 = vector.broadcast %cst_89 : f32 to vector<16x32xf32>
    %299 = arith.addf %298, %297 : vector<16x32xf32>
    %300 = arith.divf %298, %299 : vector<16x32xf32>
    %301 = math.tanh %294 : vector<16x32xf32>
    %302 = arith.mulf %300, %301 : vector<16x32xf32>
    %303 = arith.negf %292 : vector<16x32xf32>
    %304 = math.exp %303 : vector<16x32xf32>
    %cst_90 = arith.constant 1.000000e+00 : f32
    %305 = vector.broadcast %cst_90 : f32 to vector<16x32xf32>
    %306 = arith.addf %305, %304 : vector<16x32xf32>
    %307 = arith.divf %305, %306 : vector<16x32xf32>
    %308 = arith.mulf %307, %284 : vector<16x32xf32>
    %309 = arith.addf %302, %308 : vector<16x32xf32>
    %310 = arith.negf %293 : vector<16x32xf32>
    %311 = math.exp %310 : vector<16x32xf32>
    %cst_91 = arith.constant 1.000000e+00 : f32
    %312 = vector.broadcast %cst_91 : f32 to vector<16x32xf32>
    %313 = arith.addf %312, %311 : vector<16x32xf32>
    %314 = arith.divf %312, %313 : vector<16x32xf32>
    %315 = arith.mulf %314, %286 : vector<16x32xf32>
    %316 = arith.addf %309, %315 : vector<16x32xf32>
    %317 = arith.negf %295 : vector<16x32xf32>
    %318 = math.exp %317 : vector<16x32xf32>
    %cst_92 = arith.constant 1.000000e+00 : f32
    %319 = vector.broadcast %cst_92 : f32 to vector<16x32xf32>
    %320 = arith.addf %319, %318 : vector<16x32xf32>
    %321 = arith.divf %319, %320 : vector<16x32xf32>
    %322 = math.tanh %316 : vector<16x32xf32>
    %323 = arith.mulf %321, %322 : vector<16x32xf32>
    %324 = tpu.concatenate %323, %316 in 1 : vector<16x32xf32>, vector<16x32xf32> -> vector<16x64xf32>
    %c6_93 = arith.constant 6 : index
    %325 = memref.load %arg3[%c6_93] : memref<22xi32, #tpu.memory_space<smem>>
    %326 = tpu.assume_multiple %325, 8 : i32
    %327 = vector.extract_strided_slice %324 {offsets = [0, 0], sizes = [8, 64], strides = [1, 1]} : vector<16x64xf32> to vector<8x64xf32>
    %328 = arith.index_cast %326 : i32 to index
    %c0_94 = arith.constant 0 : index
    %329 = vector.load %arg12[%328, %c0_94] : memref<264x128xf32, #tpu.memory_space<vmem>>, vector<8x64xf32>
    tpu.vector_store %arg12[%328, %c0_94], %327 {strides = array<i32>} : memref<264x128xf32, #tpu.memory_space<vmem>>, vector<8x64xf32>,
    %c7_95 = arith.constant 7 : index
    %330 = memref.load %arg3[%c7_95] : memref<22xi32, #tpu.memory_space<smem>>
    %331 = tpu.assume_multiple %330, 8 : i32
    %332 = vector.extract_strided_slice %324 {offsets = [8, 0], sizes = [8, 64], strides = [1, 1]} : vector<16x64xf32> to vector<8x64xf32>
    %333 = arith.index_cast %331 : i32 to index
    %c0_96 = arith.constant 0 : index
    %334 = vector.load %arg12[%333, %c0_96] : memref<264x128xf32, #tpu.memory_space<vmem>>, vector<8x64xf32>
    tpu.vector_store %arg12[%333, %c0_96], %332 {strides = array<i32>} : memref<264x128xf32, #tpu.memory_space<vmem>>, vector<8x64xf32>,
    %c8_97 = arith.constant 8 : index
    %335 = memref.load %arg1[%c8_97] : memref<22xi32, #tpu.memory_space<smem>>
    %336 = tpu.assume_multiple %335, 8 : i32
    %c8_98 = arith.constant 8 : index
    %337 = memref.load %arg2[%c8_98] : memref<22xi32, #tpu.memory_space<smem>>
    %338 = tpu.assume_multiple %337, 8 : i32
    %339 = arith.index_cast %336 : i32 to index
    %c0_99 = arith.constant 0 : index
    %340 = vector.load %arg12[%339, %c0_99] : memref<264x128xf32, #tpu.memory_space<vmem>>, vector<8x128xf32>
    %341 = arith.index_cast %338 : i32 to index
    %c0_100 = arith.constant 0 : index
    %342 = vector.load %arg12[%341, %c0_100] : memref<264x128xf32, #tpu.memory_space<vmem>>, vector<8x128xf32>
    %c9 = arith.constant 9 : index
    %343 = memref.load %arg1[%c9] : memref<22xi32, #tpu.memory_space<smem>>
    %344 = tpu.assume_multiple %343, 8 : i32
    %c9_101 = arith.constant 9 : index
    %345 = memref.load %arg2[%c9_101] : memref<22xi32, #tpu.memory_space<smem>>
    %346 = tpu.assume_multiple %345, 8 : i32
    %347 = arith.index_cast %344 : i32 to index
    %c0_102 = arith.constant 0 : index
    %348 = vector.load %arg12[%347, %c0_102] : memref<264x128xf32, #tpu.memory_space<vmem>>, vector<8x128xf32>
    %349 = arith.index_cast %346 : i32 to index
    %c0_103 = arith.constant 0 : index
    %350 = vector.load %arg12[%349, %c0_103] : memref<264x128xf32, #tpu.memory_space<vmem>>, vector<8x128xf32>
    %351 = tpu.concatenate %340, %348 in 0 : vector<8x128xf32>, vector<8x128xf32> -> vector<16x128xf32>
    %352 = tpu.concatenate %342, %350 in 0 : vector<8x128xf32>, vector<8x128xf32> -> vector<16x128xf32>
    %353 = vector.extract_strided_slice %351 {offsets = [0, 0], sizes = [16, 32], strides = [1, 1]} : vector<16x128xf32> to vector<16x32xf32>
    %354 = vector.extract_strided_slice %351 {offsets = [0, 32], sizes = [16, 32], strides = [1, 1]} : vector<16x128xf32> to vector<16x32xf32>
    %355 = vector.extract_strided_slice %352 {offsets = [0, 0], sizes = [16, 32], strides = [1, 1]} : vector<16x128xf32> to vector<16x32xf32>
    %356 = vector.extract_strided_slice %352 {offsets = [0, 32], sizes = [16, 32], strides = [1, 1]} : vector<16x128xf32> to vector<16x32xf32>
    %cst_104 = arith.constant dense<0.000000e+00> : vector<16x160xf32>
    %357 = tpu.matmul %353, %50, %cst_104 {dimension_numbers = #tpu.dot_dimension_numbers<[1], [0], [0], [1], [0, 0, 1, 1], [], []>} : vector<16x32xf32>, vector<32x160xf32>, vector<16x160xf32> -> vector<16x160xf32>
    %cst_105 = arith.constant dense<0.000000e+00> : vector<16x160xf32>
    %358 = tpu.matmul %355, %51, %cst_105 {dimension_numbers = #tpu.dot_dimension_numbers<[1], [0], [0], [1], [0, 0, 1, 1], [], []>} : vector<16x32xf32>, vector<32x160xf32>, vector<16x160xf32> -> vector<16x160xf32>
    %359 = arith.addf %357, %358 : vector<16x160xf32>
    %360 = arith.addf %359, %54 : vector<16x160xf32>
    %361 = vector.extract_strided_slice %360 {offsets = [0, 0], sizes = [16, 32], strides = [1, 1]} : vector<16x160xf32> to vector<16x32xf32>
    %362 = vector.extract_strided_slice %360 {offsets = [0, 32], sizes = [16, 32], strides = [1, 1]} : vector<16x160xf32> to vector<16x32xf32>
    %363 = vector.extract_strided_slice %360 {offsets = [0, 64], sizes = [16, 32], strides = [1, 1]} : vector<16x160xf32> to vector<16x32xf32>
    %364 = vector.extract_strided_slice %360 {offsets = [0, 96], sizes = [16, 32], strides = [1, 1]} : vector<16x160xf32> to vector<16x32xf32>
    %365 = vector.extract_strided_slice %360 {offsets = [0, 128], sizes = [16, 32], strides = [1, 1]} : vector<16x160xf32> to vector<16x32xf32>
    %366 = arith.negf %361 : vector<16x32xf32>
    %367 = math.exp %366 : vector<16x32xf32>
    %cst_106 = arith.constant 1.000000e+00 : f32
    %368 = vector.broadcast %cst_106 : f32 to vector<16x32xf32>
    %369 = arith.addf %368, %367 : vector<16x32xf32>
    %370 = arith.divf %368, %369 : vector<16x32xf32>
    %371 = math.tanh %364 : vector<16x32xf32>
    %372 = arith.mulf %370, %371 : vector<16x32xf32>
    %373 = arith.negf %362 : vector<16x32xf32>
    %374 = math.exp %373 : vector<16x32xf32>
    %cst_107 = arith.constant 1.000000e+00 : f32
    %375 = vector.broadcast %cst_107 : f32 to vector<16x32xf32>
    %376 = arith.addf %375, %374 : vector<16x32xf32>
    %377 = arith.divf %375, %376 : vector<16x32xf32>
    %378 = arith.mulf %377, %354 : vector<16x32xf32>
    %379 = arith.addf %372, %378 : vector<16x32xf32>
    %380 = arith.negf %363 : vector<16x32xf32>
    %381 = math.exp %380 : vector<16x32xf32>
    %cst_108 = arith.constant 1.000000e+00 : f32
    %382 = vector.broadcast %cst_108 : f32 to vector<16x32xf32>
    %383 = arith.addf %382, %381 : vector<16x32xf32>
    %384 = arith.divf %382, %383 : vector<16x32xf32>
    %385 = arith.mulf %384, %356 : vector<16x32xf32>
    %386 = arith.addf %379, %385 : vector<16x32xf32>
    %387 = arith.negf %365 : vector<16x32xf32>
    %388 = math.exp %387 : vector<16x32xf32>
    %cst_109 = arith.constant 1.000000e+00 : f32
    %389 = vector.broadcast %cst_109 : f32 to vector<16x32xf32>
    %390 = arith.addf %389, %388 : vector<16x32xf32>
    %391 = arith.divf %389, %390 : vector<16x32xf32>
    %392 = math.tanh %386 : vector<16x32xf32>
    %393 = arith.mulf %391, %392 : vector<16x32xf32>
    %394 = tpu.concatenate %393, %386 in 1 : vector<16x32xf32>, vector<16x32xf32> -> vector<16x64xf32>
    %c8_110 = arith.constant 8 : index
    %395 = memref.load %arg3[%c8_110] : memref<22xi32, #tpu.memory_space<smem>>
    %396 = tpu.assume_multiple %395, 8 : i32
    %397 = vector.extract_strided_slice %394 {offsets = [0, 0], sizes = [8, 64], strides = [1, 1]} : vector<16x64xf32> to vector<8x64xf32>
    %398 = arith.index_cast %396 : i32 to index
    %c0_111 = arith.constant 0 : index
    %399 = vector.load %arg12[%398, %c0_111] : memref<264x128xf32, #tpu.memory_space<vmem>>, vector<8x64xf32>
    tpu.vector_store %arg12[%398, %c0_111], %397 {strides = array<i32>} : memref<264x128xf32, #tpu.memory_space<vmem>>, vector<8x64xf32>,
    %c9_112 = arith.constant 9 : index
    %400 = memref.load %arg3[%c9_112] : memref<22xi32, #tpu.memory_space<smem>>
    %401 = tpu.assume_multiple %400, 8 : i32
    %402 = vector.extract_strided_slice %394 {offsets = [8, 0], sizes = [8, 64], strides = [1, 1]} : vector<16x64xf32> to vector<8x64xf32>
    %403 = arith.index_cast %401 : i32 to index
    %c0_113 = arith.constant 0 : index
    %404 = vector.load %arg12[%403, %c0_113] : memref<264x128xf32, #tpu.memory_space<vmem>>, vector<8x64xf32>
    tpu.vector_store %arg12[%403, %c0_113], %402 {strides = array<i32>} : memref<264x128xf32, #tpu.memory_space<vmem>>, vector<8x64xf32>,
    %c10 = arith.constant 10 : index
    %405 = memref.load %arg1[%c10] : memref<22xi32, #tpu.memory_space<smem>>
    %406 = tpu.assume_multiple %405, 8 : i32
    %c10_114 = arith.constant 10 : index
    %407 = memref.load %arg2[%c10_114] : memref<22xi32, #tpu.memory_space<smem>>
    %408 = tpu.assume_multiple %407, 8 : i32
    %409 = arith.index_cast %406 : i32 to index
    %c0_115 = arith.constant 0 : index
    %410 = vector.load %arg12[%409, %c0_115] : memref<264x128xf32, #tpu.memory_space<vmem>>, vector<8x128xf32>
    %411 = arith.index_cast %408 : i32 to index
    %c0_116 = arith.constant 0 : index
    %412 = vector.load %arg12[%411, %c0_116] : memref<264x128xf32, #tpu.memory_space<vmem>>, vector<8x128xf32>
    %c11 = arith.constant 11 : index
    %413 = memref.load %arg1[%c11] : memref<22xi32, #tpu.memory_space<smem>>
    %414 = tpu.assume_multiple %413, 8 : i32
    %c11_117 = arith.constant 11 : index
    %415 = memref.load %arg2[%c11_117] : memref<22xi32, #tpu.memory_space<smem>>
    %416 = tpu.assume_multiple %415, 8 : i32
    %417 = arith.index_cast %414 : i32 to index
    %c0_118 = arith.constant 0 : index
    %418 = vector.load %arg12[%417, %c0_118] : memref<264x128xf32, #tpu.memory_space<vmem>>, vector<8x128xf32>
    %419 = arith.index_cast %416 : i32 to index
    %c0_119 = arith.constant 0 : index
    %420 = vector.load %arg12[%419, %c0_119] : memref<264x128xf32, #tpu.memory_space<vmem>>, vector<8x128xf32>
    %421 = tpu.concatenate %410, %418 in 0 : vector<8x128xf32>, vector<8x128xf32> -> vector<16x128xf32>
    %422 = tpu.concatenate %412, %420 in 0 : vector<8x128xf32>, vector<8x128xf32> -> vector<16x128xf32>
    %423 = vector.extract_strided_slice %421 {offsets = [0, 0], sizes = [16, 32], strides = [1, 1]} : vector<16x128xf32> to vector<16x32xf32>
    %424 = vector.extract_strided_slice %421 {offsets = [0, 32], sizes = [16, 32], strides = [1, 1]} : vector<16x128xf32> to vector<16x32xf32>
    %425 = vector.extract_strided_slice %422 {offsets = [0, 0], sizes = [16, 32], strides = [1, 1]} : vector<16x128xf32> to vector<16x32xf32>
    %426 = vector.extract_strided_slice %422 {offsets = [0, 32], sizes = [16, 32], strides = [1, 1]} : vector<16x128xf32> to vector<16x32xf32>
    %cst_120 = arith.constant dense<0.000000e+00> : vector<16x160xf32>
    %427 = tpu.matmul %423, %50, %cst_120 {dimension_numbers = #tpu.dot_dimension_numbers<[1], [0], [0], [1], [0, 0, 1, 1], [], []>} : vector<16x32xf32>, vector<32x160xf32>, vector<16x160xf32> -> vector<16x160xf32>
    %cst_121 = arith.constant dense<0.000000e+00> : vector<16x160xf32>
    %428 = tpu.matmul %425, %51, %cst_121 {dimension_numbers = #tpu.dot_dimension_numbers<[1], [0], [0], [1], [0, 0, 1, 1], [], []>} : vector<16x32xf32>, vector<32x160xf32>, vector<16x160xf32> -> vector<16x160xf32>
    %429 = arith.addf %427, %428 : vector<16x160xf32>
    %430 = arith.addf %429, %54 : vector<16x160xf32>
    %431 = vector.extract_strided_slice %430 {offsets = [0, 0], sizes = [16, 32], strides = [1, 1]} : vector<16x160xf32> to vector<16x32xf32>
    %432 = vector.extract_strided_slice %430 {offsets = [0, 32], sizes = [16, 32], strides = [1, 1]} : vector<16x160xf32> to vector<16x32xf32>
    %433 = vector.extract_strided_slice %430 {offsets = [0, 64], sizes = [16, 32], strides = [1, 1]} : vector<16x160xf32> to vector<16x32xf32>
    %434 = vector.extract_strided_slice %430 {offsets = [0, 96], sizes = [16, 32], strides = [1, 1]} : vector<16x160xf32> to vector<16x32xf32>
    %435 = vector.extract_strided_slice %430 {offsets = [0, 128], sizes = [16, 32], strides = [1, 1]} : vector<16x160xf32> to vector<16x32xf32>
    %436 = arith.negf %431 : vector<16x32xf32>
    %437 = math.exp %436 : vector<16x32xf32>
    %cst_122 = arith.constant 1.000000e+00 : f32
    %438 = vector.broadcast %cst_122 : f32 to vector<16x32xf32>
    %439 = arith.addf %438, %437 : vector<16x32xf32>
    %440 = arith.divf %438, %439 : vector<16x32xf32>
    %441 = math.tanh %434 : vector<16x32xf32>
    %442 = arith.mulf %440, %441 : vector<16x32xf32>
    %443 = arith.negf %432 : vector<16x32xf32>
    %444 = math.exp %443 : vector<16x32xf32>
    %cst_123 = arith.constant 1.000000e+00 : f32
    %445 = vector.broadcast %cst_123 : f32 to vector<16x32xf32>
    %446 = arith.addf %445, %444 : vector<16x32xf32>
    %447 = arith.divf %445, %446 : vector<16x32xf32>
    %448 = arith.mulf %447, %424 : vector<16x32xf32>
    %449 = arith.addf %442, %448 : vector<16x32xf32>
    %450 = arith.negf %433 : vector<16x32xf32>
    %451 = math.exp %450 : vector<16x32xf32>
    %cst_124 = arith.constant 1.000000e+00 : f32
    %452 = vector.broadcast %cst_124 : f32 to vector<16x32xf32>
    %453 = arith.addf %452, %451 : vector<16x32xf32>
    %454 = arith.divf %452, %453 : vector<16x32xf32>
    %455 = arith.mulf %454, %426 : vector<16x32xf32>
    %456 = arith.addf %449, %455 : vector<16x32xf32>
    %457 = arith.negf %435 : vector<16x32xf32>
    %458 = math.exp %457 : vector<16x32xf32>
    %cst_125 = arith.constant 1.000000e+00 : f32
    %459 = vector.broadcast %cst_125 : f32 to vector<16x32xf32>
    %460 = arith.addf %459, %458 : vector<16x32xf32>
    %461 = arith.divf %459, %460 : vector<16x32xf32>
    %462 = math.tanh %456 : vector<16x32xf32>
    %463 = arith.mulf %461, %462 : vector<16x32xf32>
    %464 = tpu.concatenate %463, %456 in 1 : vector<16x32xf32>, vector<16x32xf32> -> vector<16x64xf32>
    %c10_126 = arith.constant 10 : index
    %465 = memref.load %arg3[%c10_126] : memref<22xi32, #tpu.memory_space<smem>>
    %466 = tpu.assume_multiple %465, 8 : i32
    %467 = vector.extract_strided_slice %464 {offsets = [0, 0], sizes = [8, 64], strides = [1, 1]} : vector<16x64xf32> to vector<8x64xf32>
    %468 = arith.index_cast %466 : i32 to index
    %c0_127 = arith.constant 0 : index
    %469 = vector.load %arg12[%468, %c0_127] : memref<264x128xf32, #tpu.memory_space<vmem>>, vector<8x64xf32>
    tpu.vector_store %arg12[%468, %c0_127], %467 {strides = array<i32>} : memref<264x128xf32, #tpu.memory_space<vmem>>, vector<8x64xf32>,
    %c11_128 = arith.constant 11 : index
    %470 = memref.load %arg3[%c11_128] : memref<22xi32, #tpu.memory_space<smem>>
    %471 = tpu.assume_multiple %470, 8 : i32
    %472 = vector.extract_strided_slice %464 {offsets = [8, 0], sizes = [8, 64], strides = [1, 1]} : vector<16x64xf32> to vector<8x64xf32>
    %473 = arith.index_cast %471 : i32 to index
    %c0_129 = arith.constant 0 : index
    %474 = vector.load %arg12[%473, %c0_129] : memref<264x128xf32, #tpu.memory_space<vmem>>, vector<8x64xf32>
    tpu.vector_store %arg12[%473, %c0_129], %472 {strides = array<i32>} : memref<264x128xf32, #tpu.memory_space<vmem>>, vector<8x64xf32>,
    %c12 = arith.constant 12 : index
    %475 = memref.load %arg1[%c12] : memref<22xi32, #tpu.memory_space<smem>>
    %476 = tpu.assume_multiple %475, 8 : i32
    %c12_130 = arith.constant 12 : index
    %477 = memref.load %arg2[%c12_130] : memref<22xi32, #tpu.memory_space<smem>>
    %478 = tpu.assume_multiple %477, 8 : i32
    %479 = arith.index_cast %476 : i32 to index
    %c0_131 = arith.constant 0 : index
    %480 = vector.load %arg12[%479, %c0_131] : memref<264x128xf32, #tpu.memory_space<vmem>>, vector<8x128xf32>
    %481 = arith.index_cast %478 : i32 to index
    %c0_132 = arith.constant 0 : index
    %482 = vector.load %arg12[%481, %c0_132] : memref<264x128xf32, #tpu.memory_space<vmem>>, vector<8x128xf32>
    %c13 = arith.constant 13 : index
    %483 = memref.load %arg1[%c13] : memref<22xi32, #tpu.memory_space<smem>>
    %484 = tpu.assume_multiple %483, 8 : i32
    %c13_133 = arith.constant 13 : index
    %485 = memref.load %arg2[%c13_133] : memref<22xi32, #tpu.memory_space<smem>>
    %486 = tpu.assume_multiple %485, 8 : i32
    %487 = arith.index_cast %484 : i32 to index
    %c0_134 = arith.constant 0 : index
    %488 = vector.load %arg12[%487, %c0_134] : memref<264x128xf32, #tpu.memory_space<vmem>>, vector<8x128xf32>
    %489 = arith.index_cast %486 : i32 to index
    %c0_135 = arith.constant 0 : index
    %490 = vector.load %arg12[%489, %c0_135] : memref<264x128xf32, #tpu.memory_space<vmem>>, vector<8x128xf32>
    %491 = tpu.concatenate %480, %488 in 0 : vector<8x128xf32>, vector<8x128xf32> -> vector<16x128xf32>
    %492 = tpu.concatenate %482, %490 in 0 : vector<8x128xf32>, vector<8x128xf32> -> vector<16x128xf32>
    %493 = vector.extract_strided_slice %491 {offsets = [0, 0], sizes = [16, 32], strides = [1, 1]} : vector<16x128xf32> to vector<16x32xf32>
    %494 = vector.extract_strided_slice %491 {offsets = [0, 32], sizes = [16, 32], strides = [1, 1]} : vector<16x128xf32> to vector<16x32xf32>
    %495 = vector.extract_strided_slice %492 {offsets = [0, 0], sizes = [16, 32], strides = [1, 1]} : vector<16x128xf32> to vector<16x32xf32>
    %496 = vector.extract_strided_slice %492 {offsets = [0, 32], sizes = [16, 32], strides = [1, 1]} : vector<16x128xf32> to vector<16x32xf32>
    %cst_136 = arith.constant dense<0.000000e+00> : vector<16x160xf32>
    %497 = tpu.matmul %493, %50, %cst_136 {dimension_numbers = #tpu.dot_dimension_numbers<[1], [0], [0], [1], [0, 0, 1, 1], [], []>} : vector<16x32xf32>, vector<32x160xf32>, vector<16x160xf32> -> vector<16x160xf32>
    %cst_137 = arith.constant dense<0.000000e+00> : vector<16x160xf32>
    %498 = tpu.matmul %495, %51, %cst_137 {dimension_numbers = #tpu.dot_dimension_numbers<[1], [0], [0], [1], [0, 0, 1, 1], [], []>} : vector<16x32xf32>, vector<32x160xf32>, vector<16x160xf32> -> vector<16x160xf32>
    %499 = arith.addf %497, %498 : vector<16x160xf32>
    %500 = arith.addf %499, %54 : vector<16x160xf32>
    %501 = vector.extract_strided_slice %500 {offsets = [0, 0], sizes = [16, 32], strides = [1, 1]} : vector<16x160xf32> to vector<16x32xf32>
    %502 = vector.extract_strided_slice %500 {offsets = [0, 32], sizes = [16, 32], strides = [1, 1]} : vector<16x160xf32> to vector<16x32xf32>
    %503 = vector.extract_strided_slice %500 {offsets = [0, 64], sizes = [16, 32], strides = [1, 1]} : vector<16x160xf32> to vector<16x32xf32>
    %504 = vector.extract_strided_slice %500 {offsets = [0, 96], sizes = [16, 32], strides = [1, 1]} : vector<16x160xf32> to vector<16x32xf32>
    %505 = vector.extract_strided_slice %500 {offsets = [0, 128], sizes = [16, 32], strides = [1, 1]} : vector<16x160xf32> to vector<16x32xf32>
    %506 = arith.negf %501 : vector<16x32xf32>
    %507 = math.exp %506 : vector<16x32xf32>
    %cst_138 = arith.constant 1.000000e+00 : f32
    %508 = vector.broadcast %cst_138 : f32 to vector<16x32xf32>
    %509 = arith.addf %508, %507 : vector<16x32xf32>
    %510 = arith.divf %508, %509 : vector<16x32xf32>
    %511 = math.tanh %504 : vector<16x32xf32>
    %512 = arith.mulf %510, %511 : vector<16x32xf32>
    %513 = arith.negf %502 : vector<16x32xf32>
    %514 = math.exp %513 : vector<16x32xf32>
    %cst_139 = arith.constant 1.000000e+00 : f32
    %515 = vector.broadcast %cst_139 : f32 to vector<16x32xf32>
    %516 = arith.addf %515, %514 : vector<16x32xf32>
    %517 = arith.divf %515, %516 : vector<16x32xf32>
    %518 = arith.mulf %517, %494 : vector<16x32xf32>
    %519 = arith.addf %512, %518 : vector<16x32xf32>
    %520 = arith.negf %503 : vector<16x32xf32>
    %521 = math.exp %520 : vector<16x32xf32>
    %cst_140 = arith.constant 1.000000e+00 : f32
    %522 = vector.broadcast %cst_140 : f32 to vector<16x32xf32>
    %523 = arith.addf %522, %521 : vector<16x32xf32>
    %524 = arith.divf %522, %523 : vector<16x32xf32>
    %525 = arith.mulf %524, %496 : vector<16x32xf32>
    %526 = arith.addf %519, %525 : vector<16x32xf32>
    %527 = arith.negf %505 : vector<16x32xf32>
    %528 = math.exp %527 : vector<16x32xf32>
    %cst_141 = arith.constant 1.000000e+00 : f32
    %529 = vector.broadcast %cst_141 : f32 to vector<16x32xf32>
    %530 = arith.addf %529, %528 : vector<16x32xf32>
    %531 = arith.divf %529, %530 : vector<16x32xf32>
    %532 = math.tanh %526 : vector<16x32xf32>
    %533 = arith.mulf %531, %532 : vector<16x32xf32>
    %534 = tpu.concatenate %533, %526 in 1 : vector<16x32xf32>, vector<16x32xf32> -> vector<16x64xf32>
    %c12_142 = arith.constant 12 : index
    %535 = memref.load %arg3[%c12_142] : memref<22xi32, #tpu.memory_space<smem>>
    %536 = tpu.assume_multiple %535, 8 : i32
    %537 = vector.extract_strided_slice %534 {offsets = [0, 0], sizes = [8, 64], strides = [1, 1]} : vector<16x64xf32> to vector<8x64xf32>
    %538 = arith.index_cast %536 : i32 to index
    %c0_143 = arith.constant 0 : index
    %539 = vector.load %arg12[%538, %c0_143] : memref<264x128xf32, #tpu.memory_space<vmem>>, vector<8x64xf32>
    tpu.vector_store %arg12[%538, %c0_143], %537 {strides = array<i32>} : memref<264x128xf32, #tpu.memory_space<vmem>>, vector<8x64xf32>,
    %c13_144 = arith.constant 13 : index
    %540 = memref.load %arg3[%c13_144] : memref<22xi32, #tpu.memory_space<smem>>
    %541 = tpu.assume_multiple %540, 8 : i32
    %542 = vector.extract_strided_slice %534 {offsets = [8, 0], sizes = [8, 64], strides = [1, 1]} : vector<16x64xf32> to vector<8x64xf32>
    %543 = arith.index_cast %541 : i32 to index
    %c0_145 = arith.constant 0 : index
    %544 = vector.load %arg12[%543, %c0_145] : memref<264x128xf32, #tpu.memory_space<vmem>>, vector<8x64xf32>
    tpu.vector_store %arg12[%543, %c0_145], %542 {strides = array<i32>} : memref<264x128xf32, #tpu.memory_space<vmem>>, vector<8x64xf32>,
    %c14 = arith.constant 14 : index
    %545 = memref.load %arg1[%c14] : memref<22xi32, #tpu.memory_space<smem>>
    %546 = tpu.assume_multiple %545, 8 : i32
    %c14_146 = arith.constant 14 : index
    %547 = memref.load %arg2[%c14_146] : memref<22xi32, #tpu.memory_space<smem>>
    %548 = tpu.assume_multiple %547, 8 : i32
    %549 = arith.index_cast %546 : i32 to index
    %c0_147 = arith.constant 0 : index
    %550 = vector.load %arg12[%549, %c0_147] : memref<264x128xf32, #tpu.memory_space<vmem>>, vector<8x128xf32>
    %551 = arith.index_cast %548 : i32 to index
    %c0_148 = arith.constant 0 : index
    %552 = vector.load %arg12[%551, %c0_148] : memref<264x128xf32, #tpu.memory_space<vmem>>, vector<8x128xf32>
    %c15 = arith.constant 15 : index
    %553 = memref.load %arg1[%c15] : memref<22xi32, #tpu.memory_space<smem>>
    %554 = tpu.assume_multiple %553, 8 : i32
    %c15_149 = arith.constant 15 : index
    %555 = memref.load %arg2[%c15_149] : memref<22xi32, #tpu.memory_space<smem>>
    %556 = tpu.assume_multiple %555, 8 : i32
    %557 = arith.index_cast %554 : i32 to index
    %c0_150 = arith.constant 0 : index
    %558 = vector.load %arg12[%557, %c0_150] : memref<264x128xf32, #tpu.memory_space<vmem>>, vector<8x128xf32>
    %559 = arith.index_cast %556 : i32 to index
    %c0_151 = arith.constant 0 : index
    %560 = vector.load %arg12[%559, %c0_151] : memref<264x128xf32, #tpu.memory_space<vmem>>, vector<8x128xf32>
    %561 = tpu.concatenate %550, %558 in 0 : vector<8x128xf32>, vector<8x128xf32> -> vector<16x128xf32>
    %562 = tpu.concatenate %552, %560 in 0 : vector<8x128xf32>, vector<8x128xf32> -> vector<16x128xf32>
    %563 = vector.extract_strided_slice %561 {offsets = [0, 0], sizes = [16, 32], strides = [1, 1]} : vector<16x128xf32> to vector<16x32xf32>
    %564 = vector.extract_strided_slice %561 {offsets = [0, 32], sizes = [16, 32], strides = [1, 1]} : vector<16x128xf32> to vector<16x32xf32>
    %565 = vector.extract_strided_slice %562 {offsets = [0, 0], sizes = [16, 32], strides = [1, 1]} : vector<16x128xf32> to vector<16x32xf32>
    %566 = vector.extract_strided_slice %562 {offsets = [0, 32], sizes = [16, 32], strides = [1, 1]} : vector<16x128xf32> to vector<16x32xf32>
    %cst_152 = arith.constant dense<0.000000e+00> : vector<16x160xf32>
    %567 = tpu.matmul %563, %50, %cst_152 {dimension_numbers = #tpu.dot_dimension_numbers<[1], [0], [0], [1], [0, 0, 1, 1], [], []>} : vector<16x32xf32>, vector<32x160xf32>, vector<16x160xf32> -> vector<16x160xf32>
    %cst_153 = arith.constant dense<0.000000e+00> : vector<16x160xf32>
    %568 = tpu.matmul %565, %51, %cst_153 {dimension_numbers = #tpu.dot_dimension_numbers<[1], [0], [0], [1], [0, 0, 1, 1], [], []>} : vector<16x32xf32>, vector<32x160xf32>, vector<16x160xf32> -> vector<16x160xf32>
    %569 = arith.addf %567, %568 : vector<16x160xf32>
    %570 = arith.addf %569, %54 : vector<16x160xf32>
    %571 = vector.extract_strided_slice %570 {offsets = [0, 0], sizes = [16, 32], strides = [1, 1]} : vector<16x160xf32> to vector<16x32xf32>
    %572 = vector.extract_strided_slice %570 {offsets = [0, 32], sizes = [16, 32], strides = [1, 1]} : vector<16x160xf32> to vector<16x32xf32>
    %573 = vector.extract_strided_slice %570 {offsets = [0, 64], sizes = [16, 32], strides = [1, 1]} : vector<16x160xf32> to vector<16x32xf32>
    %574 = vector.extract_strided_slice %570 {offsets = [0, 96], sizes = [16, 32], strides = [1, 1]} : vector<16x160xf32> to vector<16x32xf32>
    %575 = vector.extract_strided_slice %570 {offsets = [0, 128], sizes = [16, 32], strides = [1, 1]} : vector<16x160xf32> to vector<16x32xf32>
    %576 = arith.negf %571 : vector<16x32xf32>
    %577 = math.exp %576 : vector<16x32xf32>
    %cst_154 = arith.constant 1.000000e+00 : f32
    %578 = vector.broadcast %cst_154 : f32 to vector<16x32xf32>
    %579 = arith.addf %578, %577 : vector<16x32xf32>
    %580 = arith.divf %578, %579 : vector<16x32xf32>
    %581 = math.tanh %574 : vector<16x32xf32>
    %582 = arith.mulf %580, %581 : vector<16x32xf32>
    %583 = arith.negf %572 : vector<16x32xf32>
    %584 = math.exp %583 : vector<16x32xf32>
    %cst_155 = arith.constant 1.000000e+00 : f32
    %585 = vector.broadcast %cst_155 : f32 to vector<16x32xf32>
    %586 = arith.addf %585, %584 : vector<16x32xf32>
    %587 = arith.divf %585, %586 : vector<16x32xf32>
    %588 = arith.mulf %587, %564 : vector<16x32xf32>
    %589 = arith.addf %582, %588 : vector<16x32xf32>
    %590 = arith.negf %573 : vector<16x32xf32>
    %591 = math.exp %590 : vector<16x32xf32>
    %cst_156 = arith.constant 1.000000e+00 : f32
    %592 = vector.broadcast %cst_156 : f32 to vector<16x32xf32>
    %593 = arith.addf %592, %591 : vector<16x32xf32>
    %594 = arith.divf %592, %593 : vector<16x32xf32>
    %595 = arith.mulf %594, %566 : vector<16x32xf32>
    %596 = arith.addf %589, %595 : vector<16x32xf32>
    %597 = arith.negf %575 : vector<16x32xf32>
    %598 = math.exp %597 : vector<16x32xf32>
    %cst_157 = arith.constant 1.000000e+00 : f32
    %599 = vector.broadcast %cst_157 : f32 to vector<16x32xf32>
    %600 = arith.addf %599, %598 : vector<16x32xf32>
    %601 = arith.divf %599, %600 : vector<16x32xf32>
    %602 = math.tanh %596 : vector<16x32xf32>
    %603 = arith.mulf %601, %602 : vector<16x32xf32>
    %604 = tpu.concatenate %603, %596 in 1 : vector<16x32xf32>, vector<16x32xf32> -> vector<16x64xf32>
    %c14_158 = arith.constant 14 : index
    %605 = memref.load %arg3[%c14_158] : memref<22xi32, #tpu.memory_space<smem>>
    %606 = tpu.assume_multiple %605, 8 : i32
    %607 = vector.extract_strided_slice %604 {offsets = [0, 0], sizes = [8, 64], strides = [1, 1]} : vector<16x64xf32> to vector<8x64xf32>
    %608 = arith.index_cast %606 : i32 to index
    %c0_159 = arith.constant 0 : index
    %609 = vector.load %arg12[%608, %c0_159] : memref<264x128xf32, #tpu.memory_space<vmem>>, vector<8x64xf32>
    tpu.vector_store %arg12[%608, %c0_159], %607 {strides = array<i32>} : memref<264x128xf32, #tpu.memory_space<vmem>>, vector<8x64xf32>,
    %c15_160 = arith.constant 15 : index
    %610 = memref.load %arg3[%c15_160] : memref<22xi32, #tpu.memory_space<smem>>
    %611 = tpu.assume_multiple %610, 8 : i32
    %612 = vector.extract_strided_slice %604 {offsets = [8, 0], sizes = [8, 64], strides = [1, 1]} : vector<16x64xf32> to vector<8x64xf32>
    %613 = arith.index_cast %611 : i32 to index
    %c0_161 = arith.constant 0 : index
    %614 = vector.load %arg12[%613, %c0_161] : memref<264x128xf32, #tpu.memory_space<vmem>>, vector<8x64xf32>
    tpu.vector_store %arg12[%613, %c0_161], %612 {strides = array<i32>} : memref<264x128xf32, #tpu.memory_space<vmem>>, vector<8x64xf32>,
    %c16_162 = arith.constant 16 : index
    %615 = memref.load %arg1[%c16_162] : memref<22xi32, #tpu.memory_space<smem>>
    %616 = tpu.assume_multiple %615, 8 : i32
    %c16_163 = arith.constant 16 : index
    %617 = memref.load %arg2[%c16_163] : memref<22xi32, #tpu.memory_space<smem>>
    %618 = tpu.assume_multiple %617, 8 : i32
    %619 = arith.index_cast %616 : i32 to index
    %c0_164 = arith.constant 0 : index
    %620 = vector.load %arg12[%619, %c0_164] : memref<264x128xf32, #tpu.memory_space<vmem>>, vector<8x128xf32>
    %621 = arith.index_cast %618 : i32 to index
    %c0_165 = arith.constant 0 : index
    %622 = vector.load %arg12[%621, %c0_165] : memref<264x128xf32, #tpu.memory_space<vmem>>, vector<8x128xf32>
    %c17 = arith.constant 17 : index
    %623 = memref.load %arg1[%c17] : memref<22xi32, #tpu.memory_space<smem>>
    %624 = tpu.assume_multiple %623, 8 : i32
    %c17_166 = arith.constant 17 : index
    %625 = memref.load %arg2[%c17_166] : memref<22xi32, #tpu.memory_space<smem>>
    %626 = tpu.assume_multiple %625, 8 : i32
    %627 = arith.index_cast %624 : i32 to index
    %c0_167 = arith.constant 0 : index
    %628 = vector.load %arg12[%627, %c0_167] : memref<264x128xf32, #tpu.memory_space<vmem>>, vector<8x128xf32>
    %629 = arith.index_cast %626 : i32 to index
    %c0_168 = arith.constant 0 : index
    %630 = vector.load %arg12[%629, %c0_168] : memref<264x128xf32, #tpu.memory_space<vmem>>, vector<8x128xf32>
    %631 = tpu.concatenate %620, %628 in 0 : vector<8x128xf32>, vector<8x128xf32> -> vector<16x128xf32>
    %632 = tpu.concatenate %622, %630 in 0 : vector<8x128xf32>, vector<8x128xf32> -> vector<16x128xf32>
    %633 = vector.extract_strided_slice %631 {offsets = [0, 0], sizes = [16, 32], strides = [1, 1]} : vector<16x128xf32> to vector<16x32xf32>
    %634 = vector.extract_strided_slice %631 {offsets = [0, 32], sizes = [16, 32], strides = [1, 1]} : vector<16x128xf32> to vector<16x32xf32>
    %635 = vector.extract_strided_slice %632 {offsets = [0, 0], sizes = [16, 32], strides = [1, 1]} : vector<16x128xf32> to vector<16x32xf32>
    %636 = vector.extract_strided_slice %632 {offsets = [0, 32], sizes = [16, 32], strides = [1, 1]} : vector<16x128xf32> to vector<16x32xf32>
    %cst_169 = arith.constant dense<0.000000e+00> : vector<16x160xf32>
    %637 = tpu.matmul %633, %50, %cst_169 {dimension_numbers = #tpu.dot_dimension_numbers<[1], [0], [0], [1], [0, 0, 1, 1], [], []>} : vector<16x32xf32>, vector<32x160xf32>, vector<16x160xf32> -> vector<16x160xf32>
    %cst_170 = arith.constant dense<0.000000e+00> : vector<16x160xf32>
    %638 = tpu.matmul %635, %51, %cst_170 {dimension_numbers = #tpu.dot_dimension_numbers<[1], [0], [0], [1], [0, 0, 1, 1], [], []>} : vector<16x32xf32>, vector<32x160xf32>, vector<16x160xf32> -> vector<16x160xf32>
    %639 = arith.addf %637, %638 : vector<16x160xf32>
    %640 = arith.addf %639, %54 : vector<16x160xf32>
    %641 = vector.extract_strided_slice %640 {offsets = [0, 0], sizes = [16, 32], strides = [1, 1]} : vector<16x160xf32> to vector<16x32xf32>
    %642 = vector.extract_strided_slice %640 {offsets = [0, 32], sizes = [16, 32], strides = [1, 1]} : vector<16x160xf32> to vector<16x32xf32>
    %643 = vector.extract_strided_slice %640 {offsets = [0, 64], sizes = [16, 32], strides = [1, 1]} : vector<16x160xf32> to vector<16x32xf32>
    %644 = vector.extract_strided_slice %640 {offsets = [0, 96], sizes = [16, 32], strides = [1, 1]} : vector<16x160xf32> to vector<16x32xf32>
    %645 = vector.extract_strided_slice %640 {offsets = [0, 128], sizes = [16, 32], strides = [1, 1]} : vector<16x160xf32> to vector<16x32xf32>
    %646 = arith.negf %641 : vector<16x32xf32>
    %647 = math.exp %646 : vector<16x32xf32>
    %cst_171 = arith.constant 1.000000e+00 : f32
    %648 = vector.broadcast %cst_171 : f32 to vector<16x32xf32>
    %649 = arith.addf %648, %647 : vector<16x32xf32>
    %650 = arith.divf %648, %649 : vector<16x32xf32>
    %651 = math.tanh %644 : vector<16x32xf32>
    %652 = arith.mulf %650, %651 : vector<16x32xf32>
    %653 = arith.negf %642 : vector<16x32xf32>
    %654 = math.exp %653 : vector<16x32xf32>
    %cst_172 = arith.constant 1.000000e+00 : f32
    %655 = vector.broadcast %cst_172 : f32 to vector<16x32xf32>
    %656 = arith.addf %655, %654 : vector<16x32xf32>
    %657 = arith.divf %655, %656 : vector<16x32xf32>
    %658 = arith.mulf %657, %634 : vector<16x32xf32>
    %659 = arith.addf %652, %658 : vector<16x32xf32>
    %660 = arith.negf %643 : vector<16x32xf32>
    %661 = math.exp %660 : vector<16x32xf32>
    %cst_173 = arith.constant 1.000000e+00 : f32
    %662 = vector.broadcast %cst_173 : f32 to vector<16x32xf32>
    %663 = arith.addf %662, %661 : vector<16x32xf32>
    %664 = arith.divf %662, %663 : vector<16x32xf32>
    %665 = arith.mulf %664, %636 : vector<16x32xf32>
    %666 = arith.addf %659, %665 : vector<16x32xf32>
    %667 = arith.negf %645 : vector<16x32xf32>
    %668 = math.exp %667 : vector<16x32xf32>
    %cst_174 = arith.constant 1.000000e+00 : f32
    %669 = vector.broadcast %cst_174 : f32 to vector<16x32xf32>
    %670 = arith.addf %669, %668 : vector<16x32xf32>
    %671 = arith.divf %669, %670 : vector<16x32xf32>
    %672 = math.tanh %666 : vector<16x32xf32>
    %673 = arith.mulf %671, %672 : vector<16x32xf32>
    %674 = tpu.concatenate %673, %666 in 1 : vector<16x32xf32>, vector<16x32xf32> -> vector<16x64xf32>
    %c16_175 = arith.constant 16 : index
    %675 = memref.load %arg3[%c16_175] : memref<22xi32, #tpu.memory_space<smem>>
    %676 = tpu.assume_multiple %675, 8 : i32
    %677 = vector.extract_strided_slice %674 {offsets = [0, 0], sizes = [8, 64], strides = [1, 1]} : vector<16x64xf32> to vector<8x64xf32>
    %678 = arith.index_cast %676 : i32 to index
    %c0_176 = arith.constant 0 : index
    %679 = vector.load %arg12[%678, %c0_176] : memref<264x128xf32, #tpu.memory_space<vmem>>, vector<8x64xf32>
    tpu.vector_store %arg12[%678, %c0_176], %677 {strides = array<i32>} : memref<264x128xf32, #tpu.memory_space<vmem>>, vector<8x64xf32>,
    %c17_177 = arith.constant 17 : index
    %680 = memref.load %arg3[%c17_177] : memref<22xi32, #tpu.memory_space<smem>>
    %681 = tpu.assume_multiple %680, 8 : i32
    %682 = vector.extract_strided_slice %674 {offsets = [8, 0], sizes = [8, 64], strides = [1, 1]} : vector<16x64xf32> to vector<8x64xf32>
    %683 = arith.index_cast %681 : i32 to index
    %c0_178 = arith.constant 0 : index
    %684 = vector.load %arg12[%683, %c0_178] : memref<264x128xf32, #tpu.memory_space<vmem>>, vector<8x64xf32>
    tpu.vector_store %arg12[%683, %c0_178], %682 {strides = array<i32>} : memref<264x128xf32, #tpu.memory_space<vmem>>, vector<8x64xf32>,
    %c18 = arith.constant 18 : index
    %685 = memref.load %arg1[%c18] : memref<22xi32, #tpu.memory_space<smem>>
    %686 = tpu.assume_multiple %685, 8 : i32
    %c18_179 = arith.constant 18 : index
    %687 = memref.load %arg2[%c18_179] : memref<22xi32, #tpu.memory_space<smem>>
    %688 = tpu.assume_multiple %687, 8 : i32
    %689 = arith.index_cast %686 : i32 to index
    %c0_180 = arith.constant 0 : index
    %690 = vector.load %arg12[%689, %c0_180] : memref<264x128xf32, #tpu.memory_space<vmem>>, vector<8x128xf32>
    %691 = arith.index_cast %688 : i32 to index
    %c0_181 = arith.constant 0 : index
    %692 = vector.load %arg12[%691, %c0_181] : memref<264x128xf32, #tpu.memory_space<vmem>>, vector<8x128xf32>
    %c19 = arith.constant 19 : index
    %693 = memref.load %arg1[%c19] : memref<22xi32, #tpu.memory_space<smem>>
    %694 = tpu.assume_multiple %693, 8 : i32
    %c19_182 = arith.constant 19 : index
    %695 = memref.load %arg2[%c19_182] : memref<22xi32, #tpu.memory_space<smem>>
    %696 = tpu.assume_multiple %695, 8 : i32
    %697 = arith.index_cast %694 : i32 to index
    %c0_183 = arith.constant 0 : index
    %698 = vector.load %arg12[%697, %c0_183] : memref<264x128xf32, #tpu.memory_space<vmem>>, vector<8x128xf32>
    %699 = arith.index_cast %696 : i32 to index
    %c0_184 = arith.constant 0 : index
    %700 = vector.load %arg12[%699, %c0_184] : memref<264x128xf32, #tpu.memory_space<vmem>>, vector<8x128xf32>
    %701 = tpu.concatenate %690, %698 in 0 : vector<8x128xf32>, vector<8x128xf32> -> vector<16x128xf32>
    %702 = tpu.concatenate %692, %700 in 0 : vector<8x128xf32>, vector<8x128xf32> -> vector<16x128xf32>
    %703 = vector.extract_strided_slice %701 {offsets = [0, 0], sizes = [16, 32], strides = [1, 1]} : vector<16x128xf32> to vector<16x32xf32>
    %704 = vector.extract_strided_slice %701 {offsets = [0, 32], sizes = [16, 32], strides = [1, 1]} : vector<16x128xf32> to vector<16x32xf32>
    %705 = vector.extract_strided_slice %702 {offsets = [0, 0], sizes = [16, 32], strides = [1, 1]} : vector<16x128xf32> to vector<16x32xf32>
    %706 = vector.extract_strided_slice %702 {offsets = [0, 32], sizes = [16, 32], strides = [1, 1]} : vector<16x128xf32> to vector<16x32xf32>
    %cst_185 = arith.constant dense<0.000000e+00> : vector<16x160xf32>
    %707 = tpu.matmul %703, %50, %cst_185 {dimension_numbers = #tpu.dot_dimension_numbers<[1], [0], [0], [1], [0, 0, 1, 1], [], []>} : vector<16x32xf32>, vector<32x160xf32>, vector<16x160xf32> -> vector<16x160xf32>
    %cst_186 = arith.constant dense<0.000000e+00> : vector<16x160xf32>
    %708 = tpu.matmul %705, %51, %cst_186 {dimension_numbers = #tpu.dot_dimension_numbers<[1], [0], [0], [1], [0, 0, 1, 1], [], []>} : vector<16x32xf32>, vector<32x160xf32>, vector<16x160xf32> -> vector<16x160xf32>
    %709 = arith.addf %707, %708 : vector<16x160xf32>
    %710 = arith.addf %709, %54 : vector<16x160xf32>
    %711 = vector.extract_strided_slice %710 {offsets = [0, 0], sizes = [16, 32], strides = [1, 1]} : vector<16x160xf32> to vector<16x32xf32>
    %712 = vector.extract_strided_slice %710 {offsets = [0, 32], sizes = [16, 32], strides = [1, 1]} : vector<16x160xf32> to vector<16x32xf32>
    %713 = vector.extract_strided_slice %710 {offsets = [0, 64], sizes = [16, 32], strides = [1, 1]} : vector<16x160xf32> to vector<16x32xf32>
    %714 = vector.extract_strided_slice %710 {offsets = [0, 96], sizes = [16, 32], strides = [1, 1]} : vector<16x160xf32> to vector<16x32xf32>
    %715 = vector.extract_strided_slice %710 {offsets = [0, 128], sizes = [16, 32], strides = [1, 1]} : vector<16x160xf32> to vector<16x32xf32>
    %716 = arith.negf %711 : vector<16x32xf32>
    %717 = math.exp %716 : vector<16x32xf32>
    %cst_187 = arith.constant 1.000000e+00 : f32
    %718 = vector.broadcast %cst_187 : f32 to vector<16x32xf32>
    %719 = arith.addf %718, %717 : vector<16x32xf32>
    %720 = arith.divf %718, %719 : vector<16x32xf32>
    %721 = math.tanh %714 : vector<16x32xf32>
    %722 = arith.mulf %720, %721 : vector<16x32xf32>
    %723 = arith.negf %712 : vector<16x32xf32>
    %724 = math.exp %723 : vector<16x32xf32>
    %cst_188 = arith.constant 1.000000e+00 : f32
    %725 = vector.broadcast %cst_188 : f32 to vector<16x32xf32>
    %726 = arith.addf %725, %724 : vector<16x32xf32>
    %727 = arith.divf %725, %726 : vector<16x32xf32>
    %728 = arith.mulf %727, %704 : vector<16x32xf32>
    %729 = arith.addf %722, %728 : vector<16x32xf32>
    %730 = arith.negf %713 : vector<16x32xf32>
    %731 = math.exp %730 : vector<16x32xf32>
    %cst_189 = arith.constant 1.000000e+00 : f32
    %732 = vector.broadcast %cst_189 : f32 to vector<16x32xf32>
    %733 = arith.addf %732, %731 : vector<16x32xf32>
    %734 = arith.divf %732, %733 : vector<16x32xf32>
    %735 = arith.mulf %734, %706 : vector<16x32xf32>
    %736 = arith.addf %729, %735 : vector<16x32xf32>
    %737 = arith.negf %715 : vector<16x32xf32>
    %738 = math.exp %737 : vector<16x32xf32>
    %cst_190 = arith.constant 1.000000e+00 : f32
    %739 = vector.broadcast %cst_190 : f32 to vector<16x32xf32>
    %740 = arith.addf %739, %738 : vector<16x32xf32>
    %741 = arith.divf %739, %740 : vector<16x32xf32>
    %742 = math.tanh %736 : vector<16x32xf32>
    %743 = arith.mulf %741, %742 : vector<16x32xf32>
    %744 = tpu.concatenate %743, %736 in 1 : vector<16x32xf32>, vector<16x32xf32> -> vector<16x64xf32>
    %c18_191 = arith.constant 18 : index
    %745 = memref.load %arg3[%c18_191] : memref<22xi32, #tpu.memory_space<smem>>
    %746 = tpu.assume_multiple %745, 8 : i32
    %747 = vector.extract_strided_slice %744 {offsets = [0, 0], sizes = [8, 64], strides = [1, 1]} : vector<16x64xf32> to vector<8x64xf32>
    %748 = arith.index_cast %746 : i32 to index
    %c0_192 = arith.constant 0 : index
    %749 = vector.load %arg12[%748, %c0_192] : memref<264x128xf32, #tpu.memory_space<vmem>>, vector<8x64xf32>
    tpu.vector_store %arg12[%748, %c0_192], %747 {strides = array<i32>} : memref<264x128xf32, #tpu.memory_space<vmem>>, vector<8x64xf32>,
    %c19_193 = arith.constant 19 : index
    %750 = memref.load %arg3[%c19_193] : memref<22xi32, #tpu.memory_space<smem>>
    %751 = tpu.assume_multiple %750, 8 : i32
    %752 = vector.extract_strided_slice %744 {offsets = [8, 0], sizes = [8, 64], strides = [1, 1]} : vector<16x64xf32> to vector<8x64xf32>
    %753 = arith.index_cast %751 : i32 to index
    %c0_194 = arith.constant 0 : index
    %754 = vector.load %arg12[%753, %c0_194] : memref<264x128xf32, #tpu.memory_space<vmem>>, vector<8x64xf32>
    tpu.vector_store %arg12[%753, %c0_194], %752 {strides = array<i32>} : memref<264x128xf32, #tpu.memory_space<vmem>>, vector<8x64xf32>,
    %c20 = arith.constant 20 : index
    %755 = memref.load %arg1[%c20] : memref<22xi32, #tpu.memory_space<smem>>
    %756 = tpu.assume_multiple %755, 8 : i32
    %c20_195 = arith.constant 20 : index
    %757 = memref.load %arg2[%c20_195] : memref<22xi32, #tpu.memory_space<smem>>
    %758 = tpu.assume_multiple %757, 8 : i32
    %759 = arith.index_cast %756 : i32 to index
    %c0_196 = arith.constant 0 : index
    %760 = vector.load %arg12[%759, %c0_196] : memref<264x128xf32, #tpu.memory_space<vmem>>, vector<8x128xf32>
    %761 = arith.index_cast %758 : i32 to index
    %c0_197 = arith.constant 0 : index
    %762 = vector.load %arg12[%761, %c0_197] : memref<264x128xf32, #tpu.memory_space<vmem>>, vector<8x128xf32>
    %c21 = arith.constant 21 : index
    %763 = memref.load %arg1[%c21] : memref<22xi32, #tpu.memory_space<smem>>
    %764 = tpu.assume_multiple %763, 8 : i32
    %c21_198 = arith.constant 21 : index
    %765 = memref.load %arg2[%c21_198] : memref<22xi32, #tpu.memory_space<smem>>
    %766 = tpu.assume_multiple %765, 8 : i32
    %767 = arith.index_cast %764 : i32 to index
    %c0_199 = arith.constant 0 : index
    %768 = vector.load %arg12[%767, %c0_199] : memref<264x128xf32, #tpu.memory_space<vmem>>, vector<8x128xf32>
    %769 = arith.index_cast %766 : i32 to index
    %c0_200 = arith.constant 0 : index
    %770 = vector.load %arg12[%769, %c0_200] : memref<264x128xf32, #tpu.memory_space<vmem>>, vector<8x128xf32>
    %771 = tpu.concatenate %760, %768 in 0 : vector<8x128xf32>, vector<8x128xf32> -> vector<16x128xf32>
    %772 = tpu.concatenate %762, %770 in 0 : vector<8x128xf32>, vector<8x128xf32> -> vector<16x128xf32>
    %773 = vector.extract_strided_slice %771 {offsets = [0, 0], sizes = [16, 32], strides = [1, 1]} : vector<16x128xf32> to vector<16x32xf32>
    %774 = vector.extract_strided_slice %771 {offsets = [0, 32], sizes = [16, 32], strides = [1, 1]} : vector<16x128xf32> to vector<16x32xf32>
    %775 = vector.extract_strided_slice %772 {offsets = [0, 0], sizes = [16, 32], strides = [1, 1]} : vector<16x128xf32> to vector<16x32xf32>
    %776 = vector.extract_strided_slice %772 {offsets = [0, 32], sizes = [16, 32], strides = [1, 1]} : vector<16x128xf32> to vector<16x32xf32>
    %cst_201 = arith.constant dense<0.000000e+00> : vector<16x160xf32>
    %777 = tpu.matmul %773, %50, %cst_201 {dimension_numbers = #tpu.dot_dimension_numbers<[1], [0], [0], [1], [0, 0, 1, 1], [], []>} : vector<16x32xf32>, vector<32x160xf32>, vector<16x160xf32> -> vector<16x160xf32>
    %cst_202 = arith.constant dense<0.000000e+00> : vector<16x160xf32>
    %778 = tpu.matmul %775, %51, %cst_202 {dimension_numbers = #tpu.dot_dimension_numbers<[1], [0], [0], [1], [0, 0, 1, 1], [], []>} : vector<16x32xf32>, vector<32x160xf32>, vector<16x160xf32> -> vector<16x160xf32>
    %779 = arith.addf %777, %778 : vector<16x160xf32>
    %780 = arith.addf %779, %54 : vector<16x160xf32>
    %781 = vector.extract_strided_slice %780 {offsets = [0, 0], sizes = [16, 32], strides = [1, 1]} : vector<16x160xf32> to vector<16x32xf32>
    %782 = vector.extract_strided_slice %780 {offsets = [0, 32], sizes = [16, 32], strides = [1, 1]} : vector<16x160xf32> to vector<16x32xf32>
    %783 = vector.extract_strided_slice %780 {offsets = [0, 64], sizes = [16, 32], strides = [1, 1]} : vector<16x160xf32> to vector<16x32xf32>
    %784 = vector.extract_strided_slice %780 {offsets = [0, 96], sizes = [16, 32], strides = [1, 1]} : vector<16x160xf32> to vector<16x32xf32>
    %785 = vector.extract_strided_slice %780 {offsets = [0, 128], sizes = [16, 32], strides = [1, 1]} : vector<16x160xf32> to vector<16x32xf32>
    %786 = arith.negf %781 : vector<16x32xf32>
    %787 = math.exp %786 : vector<16x32xf32>
    %cst_203 = arith.constant 1.000000e+00 : f32
    %788 = vector.broadcast %cst_203 : f32 to vector<16x32xf32>
    %789 = arith.addf %788, %787 : vector<16x32xf32>
    %790 = arith.divf %788, %789 : vector<16x32xf32>
    %791 = math.tanh %784 : vector<16x32xf32>
    %792 = arith.mulf %790, %791 : vector<16x32xf32>
    %793 = arith.negf %782 : vector<16x32xf32>
    %794 = math.exp %793 : vector<16x32xf32>
    %cst_204 = arith.constant 1.000000e+00 : f32
    %795 = vector.broadcast %cst_204 : f32 to vector<16x32xf32>
    %796 = arith.addf %795, %794 : vector<16x32xf32>
    %797 = arith.divf %795, %796 : vector<16x32xf32>
    %798 = arith.mulf %797, %774 : vector<16x32xf32>
    %799 = arith.addf %792, %798 : vector<16x32xf32>
    %800 = arith.negf %783 : vector<16x32xf32>
    %801 = math.exp %800 : vector<16x32xf32>
    %cst_205 = arith.constant 1.000000e+00 : f32
    %802 = vector.broadcast %cst_205 : f32 to vector<16x32xf32>
    %803 = arith.addf %802, %801 : vector<16x32xf32>
    %804 = arith.divf %802, %803 : vector<16x32xf32>
    %805 = arith.mulf %804, %776 : vector<16x32xf32>
    %806 = arith.addf %799, %805 : vector<16x32xf32>
    %807 = arith.negf %785 : vector<16x32xf32>
    %808 = math.exp %807 : vector<16x32xf32>
    %cst_206 = arith.constant 1.000000e+00 : f32
    %809 = vector.broadcast %cst_206 : f32 to vector<16x32xf32>
    %810 = arith.addf %809, %808 : vector<16x32xf32>
    %811 = arith.divf %809, %810 : vector<16x32xf32>
    %812 = math.tanh %806 : vector<16x32xf32>
    %813 = arith.mulf %811, %812 : vector<16x32xf32>
    %814 = tpu.concatenate %813, %806 in 1 : vector<16x32xf32>, vector<16x32xf32> -> vector<16x64xf32>
    %c20_207 = arith.constant 20 : index
    %815 = memref.load %arg3[%c20_207] : memref<22xi32, #tpu.memory_space<smem>>
    %816 = tpu.assume_multiple %815, 8 : i32
    %817 = vector.extract_strided_slice %814 {offsets = [0, 0], sizes = [8, 64], strides = [1, 1]} : vector<16x64xf32> to vector<8x64xf32>
    %818 = arith.index_cast %816 : i32 to index
    %c0_208 = arith.constant 0 : index
    %819 = vector.load %arg12[%818, %c0_208] : memref<264x128xf32, #tpu.memory_space<vmem>>, vector<8x64xf32>
    tpu.vector_store %arg12[%818, %c0_208], %817 {strides = array<i32>} : memref<264x128xf32, #tpu.memory_space<vmem>>, vector<8x64xf32>,
    %c21_209 = arith.constant 21 : index
    %820 = memref.load %arg3[%c21_209] : memref<22xi32, #tpu.memory_space<smem>>
    %821 = tpu.assume_multiple %820, 8 : i32
    %822 = vector.extract_strided_slice %814 {offsets = [8, 0], sizes = [8, 64], strides = [1, 1]} : vector<16x64xf32> to vector<8x64xf32>
    %823 = arith.index_cast %821 : i32 to index
    %c0_210 = arith.constant 0 : index
    %824 = vector.load %arg12[%823, %c0_210] : memref<264x128xf32, #tpu.memory_space<vmem>>, vector<8x64xf32>
    tpu.vector_store %arg12[%823, %c0_210], %822 {strides = array<i32>} : memref<264x128xf32, #tpu.memory_space<vmem>>, vector<8x64xf32>,
    %c0_211 = arith.constant 0 : index
    %825 = memref.load %arg4[%c0_211] : memref<2xi32, #tpu.memory_space<smem>>
    %826 = tpu.assume_multiple %825, 8 : i32
    %827 = arith.index_cast %826 : i32 to index
    %c0_212 = arith.constant 0 : index
    %828 = vector.load %arg12[%827, %c0_212] : memref<264x128xf32, #tpu.memory_space<vmem>>, vector<1x32xf32>
    %c1_213 = arith.constant 1 : index
    %829 = memref.load %arg4[%c1_213] : memref<2xi32, #tpu.memory_space<smem>>
    %830 = tpu.assume_multiple %829, 8 : i32
    %831 = arith.index_cast %830 : i32 to index
    %c0_214 = arith.constant 0 : index
    %832 = vector.load %arg12[%831, %c0_214] : memref<264x128xf32, #tpu.memory_space<vmem>>, vector<1x32xf32>
    %833 = tpu.concatenate %828, %832 in 0 : vector<1x32xf32>, vector<1x32xf32> -> vector<2x32xf32>
    %c0_215 = arith.constant 0 : index
    %c0_216 = arith.constant 0 : index
    %834 = vector.load %arg11[%c0_215, %c0_216] : memref<2x32xf32, #tpu.memory_space<vmem>>, vector<2x32xf32>
    tpu.vector_store %arg11[%c0_215, %c0_216], %833 {strides = array<i32>} : memref<2x32xf32, #tpu.memory_space<vmem>>, vector<2x32xf32>,
    return
  }
  func.func @transform_0(%arg0: i32, %arg1: memref<22xi32, #tpu.memory_space<smem>>, %arg2: memref<22xi32, #tpu.memory_space<smem>>, %arg3: memref<22xi32, #tpu.memory_space<smem>>, %arg4: memref<2xi32, #tpu.memory_space<smem>>) -> (i32, i32) {
    %c0_i32 = arith.constant 0 : i32
    %c0_i32_0 = arith.constant 0 : i32
    %c0_i32_1 = arith.constant 0 : i32
    return %c0_i32, %c0_i32_0 : i32, i32
  }
  func.func @transform_1(%arg0: i32, %arg1: memref<22xi32, #tpu.memory_space<smem>>, %arg2: memref<22xi32, #tpu.memory_space<smem>>, %arg3: memref<22xi32, #tpu.memory_space<smem>>, %arg4: memref<2xi32, #tpu.memory_space<smem>>) -> (i32, i32) {
    %c0_i32 = arith.constant 0 : i32
    %c0_i32_0 = arith.constant 0 : i32
    %c0_i32_1 = arith.constant 0 : i32
    return %c0_i32, %c0_i32_0 : i32, i32
  }
  func.func @transform_2(%arg0: i32, %arg1: memref<22xi32, #tpu.memory_space<smem>>, %arg2: memref<22xi32, #tpu.memory_space<smem>>, %arg3: memref<22xi32, #tpu.memory_space<smem>>, %arg4: memref<2xi32, #tpu.memory_space<smem>>) -> (i32, i32) {
    %c0_i32 = arith.constant 0 : i32
    %c0_i32_0 = arith.constant 0 : i32
    %c0_i32_1 = arith.constant 0 : i32
    return %c0_i32, %c0_i32_0 : i32, i32
  }
  func.func @transform_3(%arg0: i32, %arg1: memref<22xi32, #tpu.memory_space<smem>>, %arg2: memref<22xi32, #tpu.memory_space<smem>>, %arg3: memref<22xi32, #tpu.memory_space<smem>>, %arg4: memref<2xi32, #tpu.memory_space<smem>>) -> (i32, i32) {
    %c0_i32 = arith.constant 0 : i32
    %c0_i32_0 = arith.constant 0 : i32
    %c0_i32_1 = arith.constant 0 : i32
    return %c0_i32, %c0_i32_0 : i32, i32
  }
  func.func @transform_4(%arg0: i32, %arg1: memref<22xi32, #tpu.memory_space<smem>>, %arg2: memref<22xi32, #tpu.memory_space<smem>>, %arg3: memref<22xi32, #tpu.memory_space<smem>>, %arg4: memref<2xi32, #tpu.memory_space<smem>>) -> (i32, i32) {
    %c0_i32 = arith.constant 0 : i32
    %c0_i32_0 = arith.constant 0 : i32
    %c0_i32_1 = arith.constant 0 : i32
    return %c0_i32, %c0_i32_0 : i32, i32
  }
  func.func @transform_5(%arg0: i32, %arg1: memref<22xi32, #tpu.memory_space<smem>>, %arg2: memref<22xi32, #tpu.memory_space<smem>>, %arg3: memref<22xi32, #tpu.memory_space<smem>>, %arg4: memref<2xi32, #tpu.memory_space<smem>>) -> (i32, i32) {
    %c0_i32 = arith.constant 0 : i32
    %c0_i32_0 = arith.constant 0 : i32
    %c0_i32_1 = arith.constant 0 : i32
    return %c0_i32, %c0_i32_0 : i32, i32
  }
  func.func @transform_6(%arg0: i32, %arg1: memref<22xi32, #tpu.memory_space<smem>>, %arg2: memref<22xi32, #tpu.memory_space<smem>>, %arg3: memref<22xi32, #tpu.memory_space<smem>>, %arg4: memref<2xi32, #tpu.memory_space<smem>>) -> (i32, i32) {
    %c0_i32 = arith.constant 0 : i32
    %c0_i32_0 = arith.constant 0 : i32
    %c0_i32_1 = arith.constant 0 : i32
    return %c0_i32, %c0_i32_0 : i32, i32
  }
}

</mosaic_0001>

<llo_original>
// kernel: tpu_custom_call.1
$region0: #{tpu_custom_call.1}
  #allocation0 [shape = 'u32[]', space=smem, size = 0x4, offset = 0x4, fixed_abs, tag = 'smem constant byte address 0x4 - core index']
  #allocation1 [shape = 'u32[144,128]{1,0:T(1,128)}', space=vmem, size = 0x12000, scoped, tag = 'internal scratch']
  #allocation2 [shape = 'f32[264,128]{1,0:T(8,128)}', space=vmem, size = 0x21000, scoped, tag = 'scratch operand']
  #allocation3 [shape = 's32[1]{0}', space=sflag, size = 0x4, scoped, tag = 'scoped memory for tpu_custom_call.1']
  #allocation4 [shape = 'u8[512]{0}', space=smem, size = 0x200, scoped, tag = 'prefetched SMEM operand 0']
  #allocation5 [shape = 'u8[512]{0}', space=smem, size = 0x200, scoped, tag = 'prefetched SMEM operand 1']
  #allocation6 [shape = 'u8[512]{0}', space=smem, size = 0x200, scoped, tag = 'prefetched SMEM operand 2']
  #allocation7 [shape = 'u8[512]{0}', space=smem, size = 0x200, scoped, tag = 'prefetched SMEM operand 3']
  %s0 = inlined_call_operand.hbm [shape: s32[22], index: 0, kind: input, shape index: {}]
  %s1 = inlined_call_operand.vmem [shape: s32[22], index: 1, kind: input, shape index: {}]
  %s2 = inlined_call_operand.hbm [shape: s32[22], index: 2, kind: input, shape index: {}]
  %s3 = inlined_call_operand.vmem [shape: s32[2], index: 3, kind: input, shape index: {}]
  %s4 = inlined_call_operand.hbm [shape: f32[16,32], index: 4, kind: input, shape index: {}]
  %s5 = inlined_call_operand.hbm [shape: f32[32,64], index: 5, kind: input, shape index: {}]
  %s6 = inlined_call_operand.vmem [shape: f32[1,64], index: 6, kind: input, shape index: {}]
  %s7 = inlined_call_operand.hbm [shape: f32[32,160], index: 7, kind: input, shape index: {}]
  %s8 = inlined_call_operand.hbm [shape: f32[32,160], index: 8, kind: input, shape index: {}]
  %s9 = inlined_call_operand.vmem [shape: f32[1,160], index: 9, kind: input, shape index: {}]
  %s10 = inlined_call_operand.hbm [shape: f32[2,32], index: 10, kind: output, shape index: {}]
  %s11 = sld [smem:[#allocation0]]
  $region50: #{tpu_custom_call.1} parent=0
    _
  %s13 = ssub.s32 1, %s11
  %s14 = scalar_select 0, %s13, %s11
  %16 = dma.hbm_to_smem %s0, 16, [#allocation4], [#allocation3]
  %s17 = sshll.u32 %s1, 4
  %s18 = int_to_ptr.vmem [resolvable:$true] %s17
  %20 = dma.vmem_to_smem %s18, 16, [#allocation5], [#allocation3]
  %22 = dma.hbm_to_smem %s2, 16, [#allocation6], [#allocation3]
  %s23 = sshll.u32 %s3, 4
  %s24 = int_to_ptr.vmem [resolvable:$true] %s23
  %26 = dma.vmem_to_smem %s24, 16, [#allocation7], [#allocation3]
  %27 = dma.done [#allocation3], 64
  %28 = sfence
  $region1: #{tpu_custom_call.1} parent=0
    #allocation8 [shape = 'u8[8192]{0}', space=vmem, size = 0x2000, scoped, tag = 'input window, operand 4, single buffered']
    #allocation9 [shape = 's32[1]{0}', space=sflag, size = 0x4, scoped, tag = 'scoped memory for tpu_custom_call.1']
    #allocation10 [shape = 's32[1]{0}', space=sflag, size = 0x4, scoped, tag = 'scoped memory for tpu_custom_call.1']
    #allocation11 [shape = 'u8[16384]{0}', space=vmem, size = 0x4000, scoped, tag = 'input window, operand 5, single buffered']
    #allocation12 [shape = 's32[1]{0}', space=sflag, size = 0x4, scoped, tag = 'scoped memory for tpu_custom_call.1']
    #allocation13 [shape = 'u8[32768]{0}', space=vmem, size = 0x8000, scoped, tag = 'input window, operand 7, single buffered']
    #allocation14 [shape = 'u8[32768]{0}', space=vmem, size = 0x8000, scoped, tag = 'input window, operand 8, single buffered']
    #allocation15 [shape = 's32[1]{0}', space=sflag, size = 0x4, scoped, tag = 'scoped memory for tpu_custom_call.1']
    #allocation16 [shape = 'u8[1024]{0}', space=vmem, size = 0x400, scoped, tag = 'output window, operand 0, single buffered']
    %29 = vsyncpa [#allocation9], 0
    %30 = vsyncpa [#allocation12], 0
    %31 = vsyncpa [#allocation15], 0
    %32 = vsyncpa [#allocation10], 0
    // Predicated region
    $region2: #{tpu_custom_call.1} parent=1 // pred_check
      _
    $region3: #{tpu_custom_call.1} parent=1 // pred_check_branch
      %34 = sbr.rel (0) target = $region5
    $region4: #{tpu_custom_call.1} parent=1 // pred_region
      %s36 = ssub.s32 256, 256
      %37 = vsyncadd [#allocation9], %s36
      %s38 = sshll.u32 [#allocation8], 4
      %s39 = int_to_ptr.vmem [resolvable:$true] %s38
      %44 = dma.hbm_to_vmem [thread:$0]  %s4, 256, %s39, [#allocation9], 128, 128, 8
    $region5: #{tpu_custom_call.1} parent=1 // pred_fallthru
      _
    // Predicated region
    $region6: #{tpu_custom_call.1} parent=1 // pred_check
      _
    $region7: #{tpu_custom_call.1} parent=1 // pred_check_branch
      %46 = sbr.rel (0) target = $region9
    $region8: #{tpu_custom_call.1} parent=1 // pred_region
      %s48 = ssub.s32 512, 512
      %49 = vsyncadd [#allocation12], %s48
      %s50 = sshll.u32 [#allocation11], 4
      %s51 = int_to_ptr.vmem [resolvable:$true] %s50
      %56 = dma.hbm_to_vmem [thread:$0]  %s5, 512, %s51, [#allocation12], 128, 128, 8
    $region9: #{tpu_custom_call.1} parent=1 // pred_fallthru
      _
    // Predicated region
    $region10: #{tpu_custom_call.1} parent=1 // pred_check
      _
    $region11: #{tpu_custom_call.1} parent=1 // pred_check_branch
      %58 = sbr.rel (0) target = $region13
    $region12: #{tpu_custom_call.1} parent=1 // pred_region
      _
    $region13: #{tpu_custom_call.1} parent=1 // pred_fallthru
      _
    // Predicated region
    $region14: #{tpu_custom_call.1} parent=1 // pred_check
      _
    $region15: #{tpu_custom_call.1} parent=1 // pred_check_branch
      %60 = sbr.rel (0) target = $region17
    $region16: #{tpu_custom_call.1} parent=1 // pred_region
      %s62 = ssub.s32 1024, 1024
      %63 = vsyncadd [#allocation12], %s62
      %s64 = sshll.u32 [#allocation13], 4
      %s65 = int_to_ptr.vmem [resolvable:$true] %s64
      %70 = dma.hbm_to_vmem [thread:$0]  %s7, 1024, %s65, [#allocation12], 256, 256, 16
    $region17: #{tpu_custom_call.1} parent=1 // pred_fallthru
      _
    // Predicated region
    $region18: #{tpu_custom_call.1} parent=1 // pred_check
      _
    $region19: #{tpu_custom_call.1} parent=1 // pred_check_branch
      %72 = sbr.rel (0) target = $region21
    $region20: #{tpu_custom_call.1} parent=1 // pred_region
      %s74 = ssub.s32 1024, 1024
      %75 = vsyncadd [#allocation15], %s74
      %s76 = sshll.u32 [#allocation14], 4
      %s77 = int_to_ptr.vmem [resolvable:$true] %s76
      %82 = dma.hbm_to_vmem [thread:$0]  %s8, 1024, %s77, [#allocation15], 256, 256, 16
    $region21: #{tpu_custom_call.1} parent=1 // pred_fallthru
      _
    // Predicated region
    $region22: #{tpu_custom_call.1} parent=1 // pred_check
      _
    $region23: #{tpu_custom_call.1} parent=1 // pred_check_branch
      %84 = sbr.rel (0) target = $region25
    $region24: #{tpu_custom_call.1} parent=1 // pred_region
      _
    $region25: #{tpu_custom_call.1} parent=1 // pred_fallthru
      _
    // Predicated region
    $region26: #{tpu_custom_call.1} parent=1 // pred_check
      _
    $region27: #{tpu_custom_call.1} parent=1 // pred_check_branch
      %86 = sbr.rel (0) target = $region29
    $region28: #{tpu_custom_call.1} parent=1 // pred_region
      %87 = dma.done [#allocation9], 256
    $region29: #{tpu_custom_call.1} parent=1 // pred_fallthru
      _
    // Predicated region
    $region30: #{tpu_custom_call.1} parent=1 // pred_check
      _
    $region31: #{tpu_custom_call.1} parent=1 // pred_check_branch
      %89 = sbr.rel (0) target = $region33
    $region32: #{tpu_custom_call.1} parent=1 // pred_region
      %90 = dma.done [#allocation12], 512
    $region33: #{tpu_custom_call.1} parent=1 // pred_fallthru
      _
    // Predicated region
    $region34: #{tpu_custom_call.1} parent=1 // pred_check
      _
    $region35: #{tpu_custom_call.1} parent=1 // pred_check_branch
      %92 = sbr.rel (0) target = $region37
    $region36: #{tpu_custom_call.1} parent=1 // pred_region
      %93 = dma.done [#allocation12], 1024
    $region37: #{tpu_custom_call.1} parent=1 // pred_fallthru
      _
    // Predicated region
    $region38: #{tpu_custom_call.1} parent=1 // pred_check
      _
    $region39: #{tpu_custom_call.1} parent=1 // pred_check_branch
      %95 = sbr.rel (0) target = $region41
    $region40: #{tpu_custom_call.1} parent=1 // pred_region
      %96 = dma.done [#allocation15], 1024
    $region41: #{tpu_custom_call.1} parent=1 // pred_fallthru
      _
    %97 = vst [vmem:[#allocation2] sm:$0xff] 0.0
    %98 = vst [vmem:[#allocation2 + $0x8] sm:$0xff] 0.0
    %99 = vst [vmem:[#allocation2 + $0x10] sm:$0xff] 0.0
    %100 = vst [vmem:[#allocation2 + $0x18] sm:$0xff] 0.0
    %101 = vst [vmem:[#allocation2 + $0x20] sm:$0xff] 0.0
    %102 = vst [vmem:[#allocation2 + $0x28] sm:$0xff] 0.0
    %103 = vst [vmem:[#allocation2 + $0x30] sm:$0xff] 0.0
    %104 = vst [vmem:[#allocation2 + $0x38] sm:$0xff] 0.0
    %105 = vst [vmem:[#allocation2 + $0x40] sm:$0xff] 0.0
    %106 = vst [vmem:[#allocation2 + $0x48] sm:$0xff] 0.0
    %107 = vst [vmem:[#allocation2 + $0x50] sm:$0xff] 0.0
    %108 = vst [vmem:[#allocation2 + $0x58] sm:$0xff] 0.0
    %109 = vst [vmem:[#allocation2 + $0x60] sm:$0xff] 0.0
    %110 = vst [vmem:[#allocation2 + $0x68] sm:$0xff] 0.0
    %111 = vst [vmem:[#allocation2 + $0x70] sm:$0xff] 0.0
    %112 = vst [vmem:[#allocation2 + $0x78] sm:$0xff] 0.0
    %113 = vst [vmem:[#allocation2 + $0x80] sm:$0xff] 0.0
    %114 = vst [vmem:[#allocation2 + $0x88] sm:$0xff] 0.0
    %115 = vst [vmem:[#allocation2 + $0x90] sm:$0xff] 0.0
    %116 = vst [vmem:[#allocation2 + $0x98] sm:$0xff] 0.0
    %117 = vst [vmem:[#allocation2 + $0xa0] sm:$0xff] 0.0
    %118 = vst [vmem:[#allocation2 + $0xa8] sm:$0xff] 0.0
    %119 = vst [vmem:[#allocation2 + $0xb0] sm:$0xff] 0.0
    %120 = vst [vmem:[#allocation2 + $0xb8] sm:$0xff] 0.0
    %121 = vst [vmem:[#allocation2 + $0xc0] sm:$0xff] 0.0
    %122 = vst [vmem:[#allocation2 + $0xc8] sm:$0xff] 0.0
    %123 = vst [vmem:[#allocation2 + $0xd0] sm:$0xff] 0.0
    %124 = vst [vmem:[#allocation2 + $0xd8] sm:$0xff] 0.0
    %125 = vst [vmem:[#allocation2 + $0xe0] sm:$0xff] 0.0
    %126 = vst [vmem:[#allocation2 + $0xe8] sm:$0xff] 0.0
    %127 = vst [vmem:[#allocation2 + $0xf0] sm:$0xff] 0.0
    %128 = vst [vmem:[#allocation2 + $0xf8] sm:$0xff] 0.0
    %129 = vst [vmem:[#allocation2 + $0x100] sm:$0xff] 0.0
    %v130 = vld [vmem:[#allocation8] sm:$0xff]
    %v131 = vld [vmem:[#allocation8 + $0x8] sm:$0xff]
    %v132 = vld [vmem:[#allocation11] sm:$0xff]
    %v133 = vld [vmem:[#allocation11 + $0x8] sm:$0xff]
    %v134 = vld [vmem:[#allocation11 + $0x10] sm:$0xff]
    %v135 = vld [vmem:[#allocation11 + $0x18] sm:$0xff]
    %v136 = vld [vmem:[%s6] sm:$0x1]
    %v138 = vlaneseq
    %v139 = vshrl.u32 %v138, 7
    %v140 = vsub.s32 0, %v139
    %v141 = vrot.slane %v136, %v140
    %vm143 = vcmask 261120
    %v145 = vsel %vm143, %v130, 0
    %v148 = vsel %vm143, %v131, 0
    %150 = vmatprep.subr.mxu0 0.0
    %151 = vmatpush1.msra.mxu0 0.0
    %152 = vmatprep.subr.mxu0 0.0
    %153 = vmatpush1.msra.mxu0 0.0
    %154 = vmatprep.subr.mxu0 0.0
    %155 = vmatpush1.msra.mxu0 0.0
    %156 = vmatprep.subr.mxu0 0.0
    %157 = vmatpush1.msra.mxu0 0.0
    %158 = vmatprep.subr.mxu0 0.0
    %159 = vmatpush1.msra.mxu0 0.0
    %160 = vmatprep.subr.mxu0 0.0
    %161 = vmatpush1.msra.mxu0 0.0
    %162 = vmatprep.subr.mxu0 0.0
    %163 = vmatpush1.msra.mxu0 0.0
    %164 = vmatprep.subr.mxu0 0.0
    %165 = vmatpush1.msra.mxu0 0.0
    %166 = vmatprep.subr.mxu0 0.0
    %167 = vmatpush1.msra.mxu0 0.0
    %168 = vmatprep.subr.mxu0 0.0
    %169 = vmatpush1.msra.mxu0 0.0
    %170 = vmatprep.subr.mxu0 0.0
    %171 = vmatpush1.msra.mxu0 0.0
    %172 = vmatprep.subr.mxu0 0.0
    %173 = vmatpush1.msra.mxu0 0.0
    %174 = vmatprep.subr.mxu0 0.0
    %175 = vmatpush1.msra.mxu0 %v135
    %176 = vmatprep.subr.mxu0 0.0
    %177 = vmatpush1.msra.mxu0 %v134
    %178 = vmatprep.subr.mxu0 0.0
    %179 = vmatpush1.msra.mxu0 %v133
    %180 = vmatprep.subr.mxu0 0.0
    %181 = vmatpush1.msra.mxu0 %v132
    %182 = vmatprep.subr.mxu0 0.0
    %183 = vmatpush2.msra.mxu0 0.0
    %184 = vmatprep.subr.mxu0 0.0
    %185 = vmatpush2.msra.mxu0 0.0
    %186 = vmatprep.subr.mxu0 0.0
    %187 = vmatpush2.msra.mxu0 0.0
    %188 = vmatprep.subr.mxu0 0.0
    %189 = vmatpush2.msra.mxu0 0.0
    %190 = vmatprep.subr.mxu0 0.0
    %191 = vmatpush2.msra.mxu0 0.0
    %192 = vmatprep.subr.mxu0 0.0
    %193 = vmatpush2.msra.mxu0 0.0
    %194 = vmatprep.subr.mxu0 0.0
    %195 = vmatpush2.msra.mxu0 0.0
    %196 = vmatprep.subr.mxu0 0.0
    %197 = vmatpush2.msra.mxu0 0.0
    %198 = vmatprep.subr.mxu0 0.0
    %199 = vmatpush2.msra.mxu0 0.0
    %200 = vmatprep.subr.mxu0 0.0
    %201 = vmatpush2.msra.mxu0 0.0
    %202 = vmatprep.subr.mxu0 0.0
    %203 = vmatpush2.msra.mxu0 0.0
    %204 = vmatprep.subr.mxu0 0.0
    %205 = vmatpush2.msra.mxu0 0.0
    %206 = vmatprep.subr.mxu0 0.0
    %207 = vmatpush2.msra.mxu0 0.0
    %208 = vmatprep.subr.mxu0 0.0
    %209 = vmatpush2.msra.mxu0 0.0
    %210 = vmatprep.subr.mxu0 0.0
    %211 = vmatpush2.msra.mxu0 0.0
    %212 = vmatprep.subr.mxu0 0.0
    %213 = vmatpush2.msra.mxu0 0.0
    %214 = vmatprep.mubr.f32.mxu0 0.0
    %215 = vmatmul.mubr.f32.gmra.mxu0 %v145
    %v216 = vpop.f32.mrf.mxu0
    %v217 = vadd.f32 %v141, %v216
    %v218 = vpop.f32.mrf.mxu0
    %219 = vmatprep.mubr.f32.mxu0 0.0
    %220 = vmatmul.mubr.f32.gmra.mxu0 %v148
    %v221 = vpop.f32.mrf.mxu0
    %v222 = vadd.f32 %v141, %v221
    %v223 = vpop.f32.mrf.mxu0
    %224 = vdwg.mxu0
    %v225 = vxor.u32 %v217, 2147483648
    %v226 = vxor.u32 %v222, 2147483648
    %v227 = vmul.f32 %v225, 1.442695
    %v228 = vpow.pop %v227
    %v229 = vmul.f32 %v226, 1.442695
    %v230 = vpow.pop %v229
    %v231 = vadd.f32 %v228, 1.0
    %v232 = vadd.f32 %v230, 1.0
    %v233 = vrcp.pop %v231
    %v234 = vmul.f32 1.0, %v233
    %v235 = vrcp.pop %v232
    %v236 = vmul.f32 1.0, %v235
    %v237 = vtanh.pop %v217
    %v238 = vtanh.pop %v222
    %241 = vrot.lane.b32.xlu0 %v237, 32
    %v242 = vpop.permute.xlu0 %241
    %243 = vrot.lane.b32.xlu0 %v238, 32
    %v244 = vpop.permute.xlu0 %243
    %v247 = vmul.f32 %v234, %v242
    %v248 = vmul.f32 %v236, %v244
    %251 = vrot.lane.b32.xlu0 %v247, 96
    %v252 = vpop.permute.xlu0 %251
    %253 = vrot.lane.b32.xlu0 %v248, 96
    %v254 = vpop.permute.xlu0 %253
    %259 = vrot.lane.b32.xlu0 %v217, 32
    %v260 = vpop.permute.xlu0 %259
    %261 = vrot.lane.b32.xlu0 %v222, 32
    %v262 = vpop.permute.xlu0 %261
    %v265 = vsel %vm143, %v252, %v260
    %v266 = vsel %vm143, %v254, %v262
    %vm267 = vcmask 516096
    %268 = vst.msk [vmem:[#allocation2] sm:$0x1] %vm267, %v265
    %vm269 = vcmask 517121
    %270 = vst.msk [vmem:[#allocation2 + $0x7] sm:$0x2] %vm269, %v265
    %vm271 = vcmask 518146
    %272 = vst.msk [vmem:[#allocation2 + $0xe] sm:$0x4] %vm271, %v265
    %vm273 = vcmask 519171
    %274 = vst.msk [vmem:[#allocation2 + $0x15] sm:$0x8] %vm273, %v265
    %vm275 = vcmask 520196
    %276 = vst.msk [vmem:[#allocation2 + $0x1c] sm:$0x10] %vm275, %v265
    %vm277 = vcmask 521221
    %278 = vst.msk [vmem:[#allocation2 + $0x23] sm:$0x20] %vm277, %v265
    %vm279 = vcmask 522246
    %280 = vst.msk [vmem:[#allocation2 + $0x2a] sm:$0x40] %vm279, %v265
    %vm281 = vcmask 523271
    %282 = vst.msk [vmem:[#allocation2 + $0x31] sm:$0x80] %vm281, %v265
    %283 = vst.msk [vmem:[#allocation2 + $0x80] sm:$0x1] %vm267, %v266
    %284 = vst.msk [vmem:[#allocation2 + $0x87] sm:$0x2] %vm269, %v266
    %285 = vst.msk [vmem:[#allocation2 + $0x8e] sm:$0x4] %vm271, %v266
    %286 = vst.msk [vmem:[#allocation2 + $0x95] sm:$0x8] %vm273, %v266
    %287 = vst.msk [vmem:[#allocation2 + $0x9c] sm:$0x10] %vm275, %v266
    %288 = vst.msk [vmem:[#allocation2 + $0xa3] sm:$0x20] %vm277, %v266
    %289 = vst.msk [vmem:[#allocation2 + $0xaa] sm:$0x40] %vm279, %v266
    %290 = vst.msk [vmem:[#allocation2 + $0xb1] sm:$0x80] %vm281, %v266
    %v291 = vld [vmem:[#allocation13] sm:$0xff]
    %v292 = vld [vmem:[#allocation13 + $0x8] sm:$0xff]
    %v293 = vld [vmem:[#allocation13 + $0x10] sm:$0xff]
    %v294 = vld [vmem:[#allocation13 + $0x18] sm:$0xff]
    %v295 = vld [vmem:[#allocation13 + $0x20] sm:$0xff]
    %v296 = vld [vmem:[#allocation13 + $0x28] sm:$0xff]
    %v297 = vld [vmem:[#allocation13 + $0x30] sm:$0xff]
    %v298 = vld [vmem:[#allocation13 + $0x38] sm:$0xff]
    %v299 = vld [vmem:[#allocation14] sm:$0xff]
    %v300 = vld [vmem:[#allocation14 + $0x8] sm:$0xff]
    %v301 = vld [vmem:[#allocation14 + $0x10] sm:$0xff]
    %v302 = vld [vmem:[#allocation14 + $0x18] sm:$0xff]
    %v303 = vld [vmem:[#allocation14 + $0x20] sm:$0xff]
    %v304 = vld [vmem:[#allocation14 + $0x28] sm:$0xff]
    %v305 = vld [vmem:[#allocation14 + $0x30] sm:$0xff]
    %v306 = vld [vmem:[#allocation14 + $0x38] sm:$0xff]
    %v307 = vld [vmem:[%s9] sm:$0x3]
    %v309 = vlaneseq
    %v310 = vshrl.u32 %v309, 7
    %v311 = vsub.s32 0, %v310
    %v312 = vrot.slane %v307, %v311
    %v313 = vlaneseq
    %v314 = vshrl.u32 %v313, 7
    %v315 = vsub.s32 1, %v314
    %v316 = vrot.slane %v307, %v315
    %s319 = sld [smem:[#allocation4]]
    %s320 = sld [smem:[#allocation5]]
    %s321 = scalar_lea.vmem [#allocation2], %s319
    %v322 = vld [vmem:[%s321] sm:$0xff]
    %s323 = scalar_lea.vmem [#allocation2], %s320
    %v324 = vld [vmem:[%s323] sm:$0xff]
    %s325 = sld [smem:[#allocation4 + $0x1]]
    %s326 = sld [smem:[#allocation5 + $0x1]]
    %s327 = scalar_lea.vmem [#allocation2], %s325
    %v328 = vld [vmem:[%s327] sm:$0xff]
    %s329 = scalar_lea.vmem [#allocation2], %s326
    %v330 = vld [vmem:[%s329] sm:$0xff]
    %v332 = vsel %vm143, %v324, 0
    %v335 = vsel %vm143, %v330, 0
    %337 = vmatprep.subr.mxu0 0.0
    %338 = vmatpush1.msra.mxu0 0.0
    %339 = vmatprep.subr.mxu0 0.0
    %340 = vmatpush1.msra.mxu0 0.0
    %341 = vmatprep.subr.mxu0 0.0
    %342 = vmatpush1.msra.mxu0 0.0
    %343 = vmatprep.subr.mxu0 0.0
    %344 = vmatpush1.msra.mxu0 0.0
    %345 = vmatprep.subr.mxu0 0.0
    %346 = vmatpush1.msra.mxu0 0.0
    %347 = vmatprep.subr.mxu0 0.0
    %348 = vmatpush1.msra.mxu0 0.0
    %349 = vmatprep.subr.mxu0 0.0
    %350 = vmatpush1.msra.mxu0 0.0
    %351 = vmatprep.subr.mxu0 0.0
    %352 = vmatpush1.msra.mxu0 0.0
    %353 = vmatprep.subr.mxu0 0.0
    %354 = vmatpush1.msra.mxu0 0.0
    %355 = vmatprep.subr.mxu0 0.0
    %356 = vmatpush1.msra.mxu0 0.0
    %357 = vmatprep.subr.mxu0 0.0
    %358 = vmatpush1.msra.mxu0 0.0
    %359 = vmatprep.subr.mxu0 0.0
    %360 = vmatpush1.msra.mxu0 0.0
    %361 = vmatprep.subr.mxu0 %v306
    %362 = vmatpush1.msra.mxu0 %v305
    %363 = vmatprep.subr.mxu0 %v304
    %364 = vmatpush1.msra.mxu0 %v303
    %365 = vmatprep.subr.mxu0 %v302
    %366 = vmatpush1.msra.mxu0 %v301
    %367 = vmatprep.subr.mxu0 %v300
    %368 = vmatpush1.msra.mxu0 %v299
    %369 = vmatprep.subr.mxu0 0.0
    %370 = vmatpush2.msra.mxu0 0.0
    %371 = vmatprep.subr.mxu0 0.0
    %372 = vmatpush2.msra.mxu0 0.0
    %373 = vmatprep.subr.mxu0 0.0
    %374 = vmatpush2.msra.mxu0 0.0
    %375 = vmatprep.subr.mxu0 0.0
    %376 = vmatpush2.msra.mxu0 0.0
    %377 = vmatprep.subr.mxu0 0.0
    %378 = vmatpush2.msra.mxu0 0.0
    %379 = vmatprep.subr.mxu0 0.0
    %380 = vmatpush2.msra.mxu0 0.0
    %381 = vmatprep.subr.mxu0 0.0
    %382 = vmatpush2.msra.mxu0 0.0
    %383 = vmatprep.subr.mxu0 0.0
    %384 = vmatpush2.msra.mxu0 0.0
    %385 = vmatprep.subr.mxu0 0.0
    %386 = vmatpush2.msra.mxu0 0.0
    %387 = vmatprep.subr.mxu0 0.0
    %388 = vmatpush2.msra.mxu0 0.0
    %389 = vmatprep.subr.mxu0 0.0
    %390 = vmatpush2.msra.mxu0 0.0
    %391 = vmatprep.subr.mxu0 0.0
    %392 = vmatpush2.msra.mxu0 0.0
    %393 = vmatprep.subr.mxu0 0.0
    %394 = vmatpush2.msra.mxu0 0.0
    %395 = vmatprep.subr.mxu0 0.0
    %396 = vmatpush2.msra.mxu0 0.0
    %397 = vmatprep.subr.mxu0 0.0
    %398 = vmatpush2.msra.mxu0 0.0
    %399 = vmatprep.subr.mxu0 0.0
    %400 = vmatpush2.msra.mxu0 0.0
    %401 = vmatprep.mubr.f32.mxu0 0.0
    %402 = vmatmul.mubr.f32.gmra.mxu0 %v332
    %v403 = vpop.f32.mrf.mxu0
    %v404 = vadd.f32 0.0, %v403
    %v405 = vpop.f32.mrf.mxu0
    %v406 = vadd.f32 0.0, %v405
    %407 = vmatprep.mubr.f32.mxu0 0.0
    %408 = vmatmul.mubr.f32.gmra.mxu0 %v335
    %v409 = vpop.f32.mrf.mxu0
    %v410 = vadd.f32 0.0, %v409
    %v411 = vpop.f32.mrf.mxu0
    %v412 = vadd.f32 0.0, %v411
    %413 = vdwg.mxu0
    %v415 = vsel %vm143, %v322, 0
    %v418 = vsel %vm143, %v328, 0
    %420 = vmatprep.subr.mxu0 0.0
    %421 = vmatpush1.msra.mxu0 0.0
    %422 = vmatprep.subr.mxu0 0.0
    %423 = vmatpush1.msra.mxu0 0.0
    %424 = vmatprep.subr.mxu0 0.0
    %425 = vmatpush1.msra.mxu0 0.0
    %426 = vmatprep.subr.mxu0 0.0
    %427 = vmatpush1.msra.mxu0 0.0
    %428 = vmatprep.subr.mxu0 0.0
    %429 = vmatpush1.msra.mxu0 0.0
    %430 = vmatprep.subr.mxu0 0.0
    %431 = vmatpush1.msra.mxu0 0.0
    %432 = vmatprep.subr.mxu0 0.0
    %433 = vmatpush1.msra.mxu0 0.0
    %434 = vmatprep.subr.mxu0 0.0
    %435 = vmatpush1.msra.mxu0 0.0
    %436 = vmatprep.subr.mxu0 0.0
    %437 = vmatpush1.msra.mxu0 0.0
    %438 = vmatprep.subr.mxu0 0.0
    %439 = vmatpush1.msra.mxu0 0.0
    %440 = vmatprep.subr.mxu0 0.0
    %441 = vmatpush1.msra.mxu0 0.0
    %442 = vmatprep.subr.mxu0 0.0
    %443 = vmatpush1.msra.mxu0 0.0
    %444 = vmatprep.subr.mxu0 %v298
    %445 = vmatpush1.msra.mxu0 %v297
    %446 = vmatprep.subr.mxu0 %v296
    %447 = vmatpush1.msra.mxu0 %v295
    %448 = vmatprep.subr.mxu0 %v294
    %449 = vmatpush1.msra.mxu0 %v293
    %450 = vmatprep.subr.mxu0 %v292
    %451 = vmatpush1.msra.mxu0 %v291
    %452 = vmatprep.subr.mxu0 0.0
    %453 = vmatpush2.msra.mxu0 0.0
    %454 = vmatprep.subr.mxu0 0.0
    %455 = vmatpush2.msra.mxu0 0.0
    %456 = vmatprep.subr.mxu0 0.0
    %457 = vmatpush2.msra.mxu0 0.0
    %458 = vmatprep.subr.mxu0 0.0
    %459 = vmatpush2.msra.mxu0 0.0
    %460 = vmatprep.subr.mxu0 0.0
    %461 = vmatpush2.msra.mxu0 0.0
    %462 = vmatprep.subr.mxu0 0.0
    %463 = vmatpush2.msra.mxu0 0.0
    %464 = vmatprep.subr.mxu0 0.0
    %465 = vmatpush2.msra.mxu0 0.0
    %466 = vmatprep.subr.mxu0 0.0
    %467 = vmatpush2.msra.mxu0 0.0
    %468 = vmatprep.subr.mxu0 0.0
    %469 = vmatpush2.msra.mxu0 0.0
    %470 = vmatprep.subr.mxu0 0.0
    %471 = vmatpush2.msra.mxu0 0.0
    %472 = vmatprep.subr.mxu0 0.0
    %473 = vmatpush2.msra.mxu0 0.0
    %474 = vmatprep.subr.mxu0 0.0
    %475 = vmatpush2.msra.mxu0 0.0
    %476 = vmatprep.subr.mxu0 0.0
    %477 = vmatpush2.msra.mxu0 0.0
    %478 = vmatprep.subr.mxu0 0.0
    %479 = vmatpush2.msra.mxu0 0.0
    %480 = vmatprep.subr.mxu0 0.0
    %481 = vmatpush2.msra.mxu0 0.0
    %482 = vmatprep.subr.mxu0 0.0
    %483 = vmatpush2.msra.mxu0 0.0
    %484 = vmatprep.mubr.f32.mxu0 0.0
    %485 = vmatmul.mubr.f32.gmra.mxu0 %v415
    %v486 = vpop.f32.mrf.mxu0
    %v487 = vadd.f32 %v404, %v486
    %v488 = vpop.f32.mrf.mxu0
    %v489 = vadd.f32 %v406, %v488
    %490 = vmatprep.mubr.f32.mxu0 0.0
    %491 = vmatmul.mubr.f32.gmra.mxu0 %v418
    %v492 = vpop.f32.mrf.mxu0
    %v493 = vadd.f32 %v410, %v492
    %v494 = vpop.f32.mrf.mxu0
    %v495 = vadd.f32 %v412, %v494
    %496 = vdwg.mxu0
    %v497 = vadd.f32 %v487, %v312
    %v498 = vadd.f32 %v489, %v316
    %v499 = vadd.f32 %v493, %v312
    %v500 = vadd.f32 %v495, %v316
    %v501 = vxor.u32 %v497, 2147483648
    %v502 = vxor.u32 %v499, 2147483648
    %v503 = vmul.f32 %v501, 1.442695
    %v504 = vpow.pop %v503
    %v505 = vmul.f32 %v502, 1.442695
    %v506 = vpow.pop %v505
    %v507 = vadd.f32 %v504, 1.0
    %v508 = vadd.f32 %v506, 1.0
    %v509 = vrcp.pop %v507
    %v510 = vmul.f32 1.0, %v509
    %v511 = vrcp.pop %v508
    %v512 = vmul.f32 1.0, %v511
    %v513 = vtanh.pop %v497
    %v514 = vtanh.pop %v499
    %517 = vrot.lane.b32.xlu0 %v513, 32
    %v518 = vpop.permute.xlu0 %517
    %519 = vrot.lane.b32.xlu0 %v514, 32
    %v520 = vpop.permute.xlu0 %519
    %v523 = vmul.f32 %v510, %v518
    %v524 = vmul.f32 %v512, %v520
    %v525 = vmul.f32 %v510, %v322
    %v526 = vmul.f32 %v512, %v328
    %529 = vrot.lane.b32.xlu0 %v525, 96
    %v530 = vpop.permute.xlu0 %529
    %531 = vrot.lane.b32.xlu0 %v526, 96
    %v532 = vpop.permute.xlu0 %531
    %v535 = vadd.f32 %v523, %v530
    %v536 = vadd.f32 %v524, %v532
    %537 = vrot.lane.b32.xlu0 %v324, 32
    %v538 = vpop.permute.xlu0 %537
    %539 = vrot.lane.b32.xlu0 %v330, 32
    %v540 = vpop.permute.xlu0 %539
    %v543 = vmul.f32 %v510, %v538
    %v544 = vmul.f32 %v512, %v540
    %547 = vrot.lane.b32.xlu0 %v543, 64
    %v548 = vpop.permute.xlu0 %547
    %549 = vrot.lane.b32.xlu0 %v544, 64
    %v550 = vpop.permute.xlu0 %549
    %v553 = vadd.f32 %v535, %v548
    %v554 = vadd.f32 %v536, %v550
    %v555 = vxor.u32 %v498, 2147483648
    %v556 = vxor.u32 %v500, 2147483648
    %v557 = vmul.f32 %v555, 1.442695
    %v558 = vpow.pop %v557
    %v559 = vmul.f32 %v556, 1.442695
    %v560 = vpow.pop %v559
    %v561 = vadd.f32 %v558, 1.0
    %v562 = vadd.f32 %v560, 1.0
    %v563 = vrcp.pop %v561
    %v564 = vmul.f32 1.0, %v563
    %v565 = vrcp.pop %v562
    %v566 = vmul.f32 1.0, %v565
    %v567 = vtanh.pop %v553
    %v568 = vtanh.pop %v554
    %v569 = vmul.f32 %v564, %v567
    %v570 = vmul.f32 %v566, %v568
    %573 = vrot.lane.b32.xlu0 %v553, 32
    %v574 = vpop.permute.xlu0 %573
    %575 = vrot.lane.b32.xlu0 %v554, 32
    %v576 = vpop.permute.xlu0 %575
    %v579 = vsel %vm143, %v569, %v574
    %v580 = vsel %vm143, %v570, %v576
    %s581 = sld [smem:[#allocation6]]
    %s582 = scalar_lea.vmem [#allocation2], %s581
    %vm583 = vcmask 523264
    %584 = vst.msk [vmem:[%s582] sm:$0xff] %vm583, %v579
    %s585 = sld [smem:[#allocation6 + $0x1]]
    %s586 = scalar_lea.vmem [#allocation2], %s585
    %587 = vst.msk [vmem:[%s586] sm:$0xff] %vm583, %v580
    %s588 = sld [smem:[#allocation4 + $0x2]]
    %s589 = sld [smem:[#allocation5 + $0x2]]
    %s590 = scalar_lea.vmem [#allocation2], %s588
    %v591 = vld [vmem:[%s590] sm:$0xff]
    %s592 = scalar_lea.vmem [#allocation2], %s589
    %v593 = vld [vmem:[%s592] sm:$0xff]
    %s594 = sld [smem:[#allocation4 + $0x3]]
    %s595 = sld [smem:[#allocation5 + $0x3]]
    %s596 = scalar_lea.vmem [#allocation2], %s594
    %v597 = vld [vmem:[%s596] sm:$0xff]
    %s598 = scalar_lea.vmem [#allocation2], %s595
    %v599 = vld [vmem:[%s598] sm:$0xff]
    %v601 = vsel %vm143, %v593, 0
    %v604 = vsel %vm143, %v599, 0
    %606 = vmatprep.subr.mxu0 0.0
    %607 = vmatpush1.msra.mxu0 0.0
    %608 = vmatprep.subr.mxu0 0.0
    %609 = vmatpush1.msra.mxu0 0.0
    %610 = vmatprep.subr.mxu0 0.0
    %611 = vmatpush1.msra.mxu0 0.0
    %612 = vmatprep.subr.mxu0 0.0
    %613 = vmatpush1.msra.mxu0 0.0
    %614 = vmatprep.subr.mxu0 0.0
    %615 = vmatpush1.msra.mxu0 0.0
    %616 = vmatprep.subr.mxu0 0.0
    %617 = vmatpush1.msra.mxu0 0.0
    %618 = vmatprep.subr.mxu0 0.0
    %619 = vmatpush1.msra.mxu0 0.0
    %620 = vmatprep.subr.mxu0 0.0
    %621 = vmatpush1.msra.mxu0 0.0
    %622 = vmatprep.subr.mxu0 0.0
    %623 = vmatpush1.msra.mxu0 0.0
    %624 = vmatprep.subr.mxu0 0.0
    %625 = vmatpush1.msra.mxu0 0.0
    %626 = vmatprep.subr.mxu0 0.0
    %627 = vmatpush1.msra.mxu0 0.0
    %628 = vmatprep.subr.mxu0 0.0
    %629 = vmatpush1.msra.mxu0 0.0
    %630 = vmatprep.subr.mxu0 %v306
    %631 = vmatpush1.msra.mxu0 %v305
    %632 = vmatprep.subr.mxu0 %v304
    %633 = vmatpush1.msra.mxu0 %v303
    %634 = vmatprep.subr.mxu0 %v302
    %635 = vmatpush1.msra.mxu0 %v301
    %636 = vmatprep.subr.mxu0 %v300
    %637 = vmatpush1.msra.mxu0 %v299
    %638 = vmatprep.subr.mxu0 0.0
    %639 = vmatpush2.msra.mxu0 0.0
    %640 = vmatprep.subr.mxu0 0.0
    %641 = vmatpush2.msra.mxu0 0.0
    %642 = vmatprep.subr.mxu0 0.0
    %643 = vmatpush2.msra.mxu0 0.0
    %644 = vmatprep.subr.mxu0 0.0
    %645 = vmatpush2.msra.mxu0 0.0
    %646 = vmatprep.subr.mxu0 0.0
    %647 = vmatpush2.msra.mxu0 0.0
    %648 = vmatprep.subr.mxu0 0.0
    %649 = vmatpush2.msra.mxu0 0.0
    %650 = vmatprep.subr.mxu0 0.0
    %651 = vmatpush2.msra.mxu0 0.0
    %652 = vmatprep.subr.mxu0 0.0
    %653 = vmatpush2.msra.mxu0 0.0
    %654 = vmatprep.subr.mxu0 0.0
    %655 = vmatpush2.msra.mxu0 0.0
    %656 = vmatprep.subr.mxu0 0.0
    %657 = vmatpush2.msra.mxu0 0.0
    %658 = vmatprep.subr.mxu0 0.0
    %659 = vmatpush2.msra.mxu0 0.0
    %660 = vmatprep.subr.mxu0 0.0
    %661 = vmatpush2.msra.mxu0 0.0
    %662 = vmatprep.subr.mxu0 0.0
    %663 = vmatpush2.msra.mxu0 0.0
    %664 = vmatprep.subr.mxu0 0.0
    %665 = vmatpush2.msra.mxu0 0.0
    %666 = vmatprep.subr.mxu0 0.0
    %667 = vmatpush2.msra.mxu0 0.0
    %668 = vmatprep.subr.mxu0 0.0
    %669 = vmatpush2.msra.mxu0 0.0
    %670 = vmatprep.mubr.f32.mxu0 0.0
    %671 = vmatmul.mubr.f32.gmra.mxu0 %v601
    %v672 = vpop.f32.mrf.mxu0
    %v673 = vadd.f32 0.0, %v672
    %v674 = vpop.f32.mrf.mxu0
    %v675 = vadd.f32 0.0, %v674
    %676 = vmatprep.mubr.f32.mxu0 0.0
    %677 = vmatmul.mubr.f32.gmra.mxu0 %v604
    %v678 = vpop.f32.mrf.mxu0
    %v679 = vadd.f32 0.0, %v678
    %v680 = vpop.f32.mrf.mxu0
    %v681 = vadd.f32 0.0, %v680
    %682 = vdwg.mxu0
    %v684 = vsel %vm143, %v591, 0
    %v687 = vsel %vm143, %v597, 0
    %689 = vmatprep.subr.mxu0 0.0
    %690 = vmatpush1.msra.mxu0 0.0
    %691 = vmatprep.subr.mxu0 0.0
    %692 = vmatpush1.msra.mxu0 0.0
    %693 = vmatprep.subr.mxu0 0.0
    %694 = vmatpush1.msra.mxu0 0.0
    %695 = vmatprep.subr.mxu0 0.0
    %696 = vmatpush1.msra.mxu0 0.0
    %697 = vmatprep.subr.mxu0 0.0
    %698 = vmatpush1.msra.mxu0 0.0
    %699 = vmatprep.subr.mxu0 0.0
    %700 = vmatpush1.msra.mxu0 0.0
    %701 = vmatprep.subr.mxu0 0.0
    %702 = vmatpush1.msra.mxu0 0.0
    %703 = vmatprep.subr.mxu0 0.0
    %704 = vmatpush1.msra.mxu0 0.0
    %705 = vmatprep.subr.mxu0 0.0
    %706 = vmatpush1.msra.mxu0 0.0
    %707 = vmatprep.subr.mxu0 0.0
    %708 = vmatpush1.msra.mxu0 0.0
    %709 = vmatprep.subr.mxu0 0.0
    %710 = vmatpush1.msra.mxu0 0.0
    %711 = vmatprep.subr.mxu0 0.0
    %712 = vmatpush1.msra.mxu0 0.0
    %713 = vmatprep.subr.mxu0 %v298
    %714 = vmatpush1.msra.mxu0 %v297
    %715 = vmatprep.subr.mxu0 %v296
    %716 = vmatpush1.msra.mxu0 %v295
    %717 = vmatprep.subr.mxu0 %v294
    %718 = vmatpush1.msra.mxu0 %v293
    %719 = vmatprep.subr.mxu0 %v292
    %720 = vmatpush1.msra.mxu0 %v291
    %721 = vmatprep.subr.mxu0 0.0
    %722 = vmatpush2.msra.mxu0 0.0
    %723 = vmatprep.subr.mxu0 0.0
    %724 = vmatpush2.msra.mxu0 0.0
    %725 = vmatprep.subr.mxu0 0.0
    %726 = vmatpush2.msra.mxu0 0.0
    %727 = vmatprep.subr.mxu0 0.0
    %728 = vmatpush2.msra.mxu0 0.0
    %729 = vmatprep.subr.mxu0 0.0
    %730 = vmatpush2.msra.mxu0 0.0
    %731 = vmatprep.subr.mxu0 0.0
    %732 = vmatpush2.msra.mxu0 0.0
    %733 = vmatprep.subr.mxu0 0.0
    %734 = vmatpush2.msra.mxu0 0.0
    %735 = vmatprep.subr.mxu0 0.0
    %736 = vmatpush2.msra.mxu0 0.0
    %737 = vmatprep.subr.mxu0 0.0
    %738 = vmatpush2.msra.mxu0 0.0
    %739 = vmatprep.subr.mxu0 0.0
    %740 = vmatpush2.msra.mxu0 0.0
    %741 = vmatprep.subr.mxu0 0.0
    %742 = vmatpush2.msra.mxu0 0.0
    %743 = vmatprep.subr.mxu0 0.0
    %744 = vmatpush2.msra.mxu0 0.0
    %745 = vmatprep.subr.mxu0 0.0
    %746 = vmatpush2.msra.mxu0 0.0
    %747 = vmatprep.subr.mxu0 0.0
    %748 = vmatpush2.msra.mxu0 0.0
    %749 = vmatprep.subr.mxu0 0.0
    %750 = vmatpush2.msra.mxu0 0.0
    %751 = vmatprep.subr.mxu0 0.0
    %752 = vmatpush2.msra.mxu0 0.0
    %753 = vmatprep.mubr.f32.mxu0 0.0
    %754 = vmatmul.mubr.f32.gmra.mxu0 %v684
    %v755 = vpop.f32.mrf.mxu0
    %v756 = vadd.f32 %v673, %v755
    %v757 = vpop.f32.mrf.mxu0
    %v758 = vadd.f32 %v675, %v757
    %759 = vmatprep.mubr.f32.mxu0 0.0
    %760 = vmatmul.mubr.f32.gmra.mxu0 %v687
    %v761 = vpop.f32.mrf.mxu0
    %v762 = vadd.f32 %v679, %v761
    %v763 = vpop.f32.mrf.mxu0
    %v764 = vadd.f32 %v681, %v763
    %765 = vdwg.mxu0
    %v766 = vadd.f32 %v756, %v312
    %v767 = vadd.f32 %v758, %v316
    %v768 = vadd.f32 %v762, %v312
    %v769 = vadd.f32 %v764, %v316
    %v770 = vxor.u32 %v766, 2147483648
    %v771 = vxor.u32 %v768, 2147483648
    %v772 = vmul.f32 %v770, 1.442695
    %v773 = vpow.pop %v772
    %v774 = vmul.f32 %v771, 1.442695
    %v775 = vpow.pop %v774
    %v776 = vadd.f32 %v773, 1.0
    %v777 = vadd.f32 %v775, 1.0
    %v778 = vrcp.pop %v776
    %v779 = vmul.f32 1.0, %v778
    %v780 = vrcp.pop %v777
    %v781 = vmul.f32 1.0, %v780
    %v782 = vtanh.pop %v766
    %v783 = vtanh.pop %v768
    %786 = vrot.lane.b32.xlu0 %v782, 32
    %v787 = vpop.permute.xlu0 %786
    %788 = vrot.lane.b32.xlu0 %v783, 32
    %v789 = vpop.permute.xlu0 %788
    %v792 = vmul.f32 %v779, %v787
    %v793 = vmul.f32 %v781, %v789
    %v794 = vmul.f32 %v779, %v591
    %v795 = vmul.f32 %v781, %v597
    %798 = vrot.lane.b32.xlu0 %v794, 96
    %v799 = vpop.permute.xlu0 %798
    %800 = vrot.lane.b32.xlu0 %v795, 96
    %v801 = vpop.permute.xlu0 %800
    %v804 = vadd.f32 %v792, %v799
    %v805 = vadd.f32 %v793, %v801
    %806 = vrot.lane.b32.xlu0 %v593, 32
    %v807 = vpop.permute.xlu0 %806
    %808 = vrot.lane.b32.xlu0 %v599, 32
    %v809 = vpop.permute.xlu0 %808
    %v812 = vmul.f32 %v779, %v807
    %v813 = vmul.f32 %v781, %v809
    %816 = vrot.lane.b32.xlu0 %v812, 64
    %v817 = vpop.permute.xlu0 %816
    %818 = vrot.lane.b32.xlu0 %v813, 64
    %v819 = vpop.permute.xlu0 %818
    %v822 = vadd.f32 %v804, %v817
    %v823 = vadd.f32 %v805, %v819
    %v824 = vxor.u32 %v767, 2147483648
    %v825 = vxor.u32 %v769, 2147483648
    %v826 = vmul.f32 %v824, 1.442695
    %v827 = vpow.pop %v826
    %v828 = vmul.f32 %v825, 1.442695
    %v829 = vpow.pop %v828
    %v830 = vadd.f32 %v827, 1.0
    %v831 = vadd.f32 %v829, 1.0
    %v832 = vrcp.pop %v830
    %v833 = vmul.f32 1.0, %v832
    %v834 = vrcp.pop %v831
    %v835 = vmul.f32 1.0, %v834
    %v836 = vtanh.pop %v822
    %v837 = vtanh.pop %v823
    %v838 = vmul.f32 %v833, %v836
    %v839 = vmul.f32 %v835, %v837
    %842 = vrot.lane.b32.xlu0 %v822, 32
    %v843 = vpop.permute.xlu0 %842
    %844 = vrot.lane.b32.xlu0 %v823, 32
    %v845 = vpop.permute.xlu0 %844
    %v848 = vsel %vm143, %v838, %v843
    %v849 = vsel %vm143, %v839, %v845
    %s850 = sld [smem:[#allocation6 + $0x2]]
    %s851 = scalar_lea.vmem [#allocation2], %s850
    %852 = vst.msk [vmem:[%s851] sm:$0xff] %vm583, %v848
    %s853 = sld [smem:[#allocation6 + $0x3]]
    %s854 = scalar_lea.vmem [#allocation2], %s853
    %855 = vst.msk [vmem:[%s854] sm:$0xff] %vm583, %v849
    %s856 = sld [smem:[#allocation4 + $0x4]]
    %s857 = sld [smem:[#allocation5 + $0x4]]
    %s858 = scalar_lea.vmem [#allocation2], %s856
    %v859 = vld [vmem:[%s858] sm:$0xff]
    %s860 = scalar_lea.vmem [#allocation2], %s857
    %v861 = vld [vmem:[%s860] sm:$0xff]
    %s862 = sld [smem:[#allocation4 + $0x5]]
    %s863 = sld [smem:[#allocation5 + $0x5]]
    %s864 = scalar_lea.vmem [#allocation2], %s862
    %v865 = vld [vmem:[%s864] sm:$0xff]
    %s866 = scalar_lea.vmem [#allocation2], %s863
    %v867 = vld [vmem:[%s866] sm:$0xff]
    %v869 = vsel %vm143, %v861, 0
    %v872 = vsel %vm143, %v867, 0
    %874 = vmatprep.subr.mxu0 0.0
    %875 = vmatpush1.msra.mxu0 0.0
    %876 = vmatprep.subr.mxu0 0.0
    %877 = vmatpush1.msra.mxu0 0.0
    %878 = vmatprep.subr.mxu0 0.0
    %879 = vmatpush1.msra.mxu0 0.0
    %880 = vmatprep.subr.mxu0 0.0
    %881 = vmatpush1.msra.mxu0 0.0
    %882 = vmatprep.subr.mxu0 0.0
    %883 = vmatpush1.msra.mxu0 0.0
    %884 = vmatprep.subr.mxu0 0.0
    %885 = vmatpush1.msra.mxu0 0.0
    %886 = vmatprep.subr.mxu0 0.0
    %887 = vmatpush1.msra.mxu0 0.0
    %888 = vmatprep.subr.mxu0 0.0
    %889 = vmatpush1.msra.mxu0 0.0
    %890 = vmatprep.subr.mxu0 0.0
    %891 = vmatpush1.msra.mxu0 0.0
    %892 = vmatprep.subr.mxu0 0.0
    %893 = vmatpush1.msra.mxu0 0.0
    %894 = vmatprep.subr.mxu0 0.0
    %895 = vmatpush1.msra.mxu0 0.0
    %896 = vmatprep.subr.mxu0 0.0
    %897 = vmatpush1.msra.mxu0 0.0
    %898 = vmatprep.subr.mxu0 %v306
    %899 = vmatpush1.msra.mxu0 %v305
    %900 = vmatprep.subr.mxu0 %v304
    %901 = vmatpush1.msra.mxu0 %v303
    %902 = vmatprep.subr.mxu0 %v302
    %903 = vmatpush1.msra.mxu0 %v301
    %904 = vmatprep.subr.mxu0 %v300
    %905 = vmatpush1.msra.mxu0 %v299
    %906 = vmatprep.subr.mxu0 0.0
    %907 = vmatpush2.msra.mxu0 0.0
    %908 = vmatprep.subr.mxu0 0.0
    %909 = vmatpush2.msra.mxu0 0.0
    %910 = vmatprep.subr.mxu0 0.0
    %911 = vmatpush2.msra.mxu0 0.0
    %912 = vmatprep.subr.mxu0 0.0
    %913 = vmatpush2.msra.mxu0 0.0
    %914 = vmatprep.subr.mxu0 0.0
    %915 = vmatpush2.msra.mxu0 0.0
    %916 = vmatprep.subr.mxu0 0.0
    %917 = vmatpush2.msra.mxu0 0.0
    %918 = vmatprep.subr.mxu0 0.0
    %919 = vmatpush2.msra.mxu0 0.0
    %920 = vmatprep.subr.mxu0 0.0
    %921 = vmatpush2.msra.mxu0 0.0
    %922 = vmatprep.subr.mxu0 0.0
    %923 = vmatpush2.msra.mxu0 0.0
    %924 = vmatprep.subr.mxu0 0.0
    %925 = vmatpush2.msra.mxu0 0.0
    %926 = vmatprep.subr.mxu0 0.0
    %927 = vmatpush2.msra.mxu0 0.0
    %928 = vmatprep.subr.mxu0 0.0
    %929 = vmatpush2.msra.mxu0 0.0
    %930 = vmatprep.subr.mxu0 0.0
    %931 = vmatpush2.msra.mxu0 0.0
    %932 = vmatprep.subr.mxu0 0.0
    %933 = vmatpush2.msra.mxu0 0.0
    %934 = vmatprep.subr.mxu0 0.0
    %935 = vmatpush2.msra.mxu0 0.0
    %936 = vmatprep.subr.mxu0 0.0
    %937 = vmatpush2.msra.mxu0 0.0
    %938 = vmatprep.mubr.f32.mxu0 0.0
    %939 = vmatmul.mubr.f32.gmra.mxu0 %v869
    %v940 = vpop.f32.mrf.mxu0
    %v941 = vadd.f32 0.0, %v940
    %v942 = vpop.f32.mrf.mxu0
    %v943 = vadd.f32 0.0, %v942
    %944 = vmatprep.mubr.f32.mxu0 0.0
    %945 = vmatmul.mubr.f32.gmra.mxu0 %v872
    %v946 = vpop.f32.mrf.mxu0
    %v947 = vadd.f32 0.0, %v946
    %v948 = vpop.f32.mrf.mxu0
    %v949 = vadd.f32 0.0, %v948
    %950 = vdwg.mxu0
    %v952 = vsel %vm143, %v859, 0
    %v955 = vsel %vm143, %v865, 0
    %957 = vmatprep.subr.mxu0 0.0
    %958 = vmatpush1.msra.mxu0 0.0
    %959 = vmatprep.subr.mxu0 0.0
    %960 = vmatpush1.msra.mxu0 0.0
    %961 = vmatprep.subr.mxu0 0.0
    %962 = vmatpush1.msra.mxu0 0.0
    %963 = vmatprep.subr.mxu0 0.0
    %964 = vmatpush1.msra.mxu0 0.0
    %965 = vmatprep.subr.mxu0 0.0
    %966 = vmatpush1.msra.mxu0 0.0
    %967 = vmatprep.subr.mxu0 0.0
    %968 = vmatpush1.msra.mxu0 0.0
    %969 = vmatprep.subr.mxu0 0.0
    %970 = vmatpush1.msra.mxu0 0.0
    %971 = vmatprep.subr.mxu0 0.0
    %972 = vmatpush1.msra.mxu0 0.0
    %973 = vmatprep.subr.mxu0 0.0
    %974 = vmatpush1.msra.mxu0 0.0
    %975 = vmatprep.subr.mxu0 0.0
    %976 = vmatpush1.msra.mxu0 0.0
    %977 = vmatprep.subr.mxu0 0.0
    %978 = vmatpush1.msra.mxu0 0.0
    %979 = vmatprep.subr.mxu0 0.0
    %980 = vmatpush1.msra.mxu0 0.0
    %981 = vmatprep.subr.mxu0 %v298
    %982 = vmatpush1.msra.mxu0 %v297
    %983 = vmatprep.subr.mxu0 %v296
    %984 = vmatpush1.msra.mxu0 %v295
    %985 = vmatprep.subr.mxu0 %v294
    %986 = vmatpush1.msra.mxu0 %v293
    %987 = vmatprep.subr.mxu0 %v292
    %988 = vmatpush1.msra.mxu0 %v291
    %989 = vmatprep.subr.mxu0 0.0
    %990 = vmatpush2.msra.mxu0 0.0
    %991 = vmatprep.subr.mxu0 0.0
    %992 = vmatpush2.msra.mxu0 0.0
    %993 = vmatprep.subr.mxu0 0.0
    %994 = vmatpush2.msra.mxu0 0.0
    %995 = vmatprep.subr.mxu0 0.0
    %996 = vmatpush2.msra.mxu0 0.0
    %997 = vmatprep.subr.mxu0 0.0
    %998 = vmatpush2.msra.mxu0 0.0
    %999 = vmatprep.subr.mxu0 0.0
    %1000 = vmatpush2.msra.mxu0 0.0
    %1001 = vmatprep.subr.mxu0 0.0
    %1002 = vmatpush2.msra.mxu0 0.0
    %1003 = vmatprep.subr.mxu0 0.0
    %1004 = vmatpush2.msra.mxu0 0.0
    %1005 = vmatprep.subr.mxu0 0.0
    %1006 = vmatpush2.msra.mxu0 0.0
    %1007 = vmatprep.subr.mxu0 0.0
    %1008 = vmatpush2.msra.mxu0 0.0
    %1009 = vmatprep.subr.mxu0 0.0
    %1010 = vmatpush2.msra.mxu0 0.0
    %1011 = vmatprep.subr.mxu0 0.0
    %1012 = vmatpush2.msra.mxu0 0.0
    %1013 = vmatprep.subr.mxu0 0.0
    %1014 = vmatpush2.msra.mxu0 0.0
    %1015 = vmatprep.subr.mxu0 0.0
    %1016 = vmatpush2.msra.mxu0 0.0
    %1017 = vmatprep.subr.mxu0 0.0
    %1018 = vmatpush2.msra.mxu0 0.0
    %1019 = vmatprep.subr.mxu0 0.0
    %1020 = vmatpush2.msra.mxu0 0.0
    %1021 = vmatprep.mubr.f32.mxu0 0.0
    %1022 = vmatmul.mubr.f32.gmra.mxu0 %v952
    %v1023 = vpop.f32.mrf.mxu0
    %v1024 = vadd.f32 %v941, %v1023
    %v1025 = vpop.f32.mrf.mxu0
    %v1026 = vadd.f32 %v943, %v1025
    %1027 = vmatprep.mubr.f32.mxu0 0.0
    %1028 = vmatmul.mubr.f32.gmra.mxu0 %v955
    %v1029 = vpop.f32.mrf.mxu0
    %v1030 = vadd.f32 %v947, %v1029
    %v1031 = vpop.f32.mrf.mxu0
    %v1032 = vadd.f32 %v949, %v1031
    %1033 = vdwg.mxu0
    %v1034 = vadd.f32 %v1024, %v312
    %v1035 = vadd.f32 %v1026, %v316
    %v1036 = vadd.f32 %v1030, %v312
    %v1037 = vadd.f32 %v1032, %v316
    %v1038 = vxor.u32 %v1034, 2147483648
    %v1039 = vxor.u32 %v1036, 2147483648
    %v1040 = vmul.f32 %v1038, 1.442695
    %v1041 = vpow.pop %v1040
    %v1042 = vmul.f32 %v1039, 1.442695
    %v1043 = vpow.pop %v1042
    %v1044 = vadd.f32 %v1041, 1.0
    %v1045 = vadd.f32 %v1043, 1.0
    %v1046 = vrcp.pop %v1044
    %v1047 = vmul.f32 1.0, %v1046
    %v1048 = vrcp.pop %v1045
    %v1049 = vmul.f32 1.0, %v1048
    %v1050 = vtanh.pop %v1034
    %v1051 = vtanh.pop %v1036
    %1054 = vrot.lane.b32.xlu0 %v1050, 32
    %v1055 = vpop.permute.xlu0 %1054
    %1056 = vrot.lane.b32.xlu0 %v1051, 32
    %v1057 = vpop.permute.xlu0 %1056
    %v1060 = vmul.f32 %v1047, %v1055
    %v1061 = vmul.f32 %v1049, %v1057
    %v1062 = vmul.f32 %v1047, %v859
    %v1063 = vmul.f32 %v1049, %v865
    %1066 = vrot.lane.b32.xlu0 %v1062, 96
    %v1067 = vpop.permute.xlu0 %1066
    %1068 = vrot.lane.b32.xlu0 %v1063, 96
    %v1069 = vpop.permute.xlu0 %1068
    %v1072 = vadd.f32 %v1060, %v1067
    %v1073 = vadd.f32 %v1061, %v1069
    %1074 = vrot.lane.b32.xlu0 %v861, 32
    %v1075 = vpop.permute.xlu0 %1074
    %1076 = vrot.lane.b32.xlu0 %v867, 32
    %v1077 = vpop.permute.xlu0 %1076
    %v1080 = vmul.f32 %v1047, %v1075
    %v1081 = vmul.f32 %v1049, %v1077
    %1084 = vrot.lane.b32.xlu0 %v1080, 64
    %v1085 = vpop.permute.xlu0 %1084
    %1086 = vrot.lane.b32.xlu0 %v1081, 64
    %v1087 = vpop.permute.xlu0 %1086
    %v1090 = vadd.f32 %v1072, %v1085
    %v1091 = vadd.f32 %v1073, %v1087
    %v1092 = vxor.u32 %v1035, 2147483648
    %v1093 = vxor.u32 %v1037, 2147483648
    %v1094 = vmul.f32 %v1092, 1.442695
    %v1095 = vpow.pop %v1094
    %v1096 = vmul.f32 %v1093, 1.442695
    %v1097 = vpow.pop %v1096
    %v1098 = vadd.f32 %v1095, 1.0
    %v1099 = vadd.f32 %v1097, 1.0
    %v1100 = vrcp.pop %v1098
    %v1101 = vmul.f32 1.0, %v1100
    %v1102 = vrcp.pop %v1099
    %v1103 = vmul.f32 1.0, %v1102
    %v1104 = vtanh.pop %v1090
    %v1105 = vtanh.pop %v1091
    %v1106 = vmul.f32 %v1101, %v1104
    %v1107 = vmul.f32 %v1103, %v1105
    %1110 = vrot.lane.b32.xlu0 %v1090, 32
    %v1111 = vpop.permute.xlu0 %1110
    %1112 = vrot.lane.b32.xlu0 %v1091, 32
    %v1113 = vpop.permute.xlu0 %1112
    %v1116 = vsel %vm143, %v1106, %v1111
    %v1117 = vsel %vm143, %v1107, %v1113
    %s1118 = sld [smem:[#allocation6 + $0x4]]
    %s1119 = scalar_lea.vmem [#allocation2], %s1118
    %1120 = vst.msk [vmem:[%s1119] sm:$0xff] %vm583, %v1116
    %s1121 = sld [smem:[#allocation6 + $0x5]]
    %s1122 = scalar_lea.vmem [#allocation2], %s1121
    %1123 = vst.msk [vmem:[%s1122] sm:$0xff] %vm583, %v1117
    %s1124 = sld [smem:[#allocation4 + $0x6]]
    %s1125 = sld [smem:[#allocation5 + $0x6]]
    %s1126 = scalar_lea.vmem [#allocation2], %s1124
    %v1127 = vld [vmem:[%s1126] sm:$0xff]
    %s1128 = scalar_lea.vmem [#allocation2], %s1125
    %v1129 = vld [vmem:[%s1128] sm:$0xff]
    %s1130 = sld [smem:[#allocation4 + $0x7]]
    %s1131 = sld [smem:[#allocation5 + $0x7]]
    %s1132 = scalar_lea.vmem [#allocation2], %s1130
    %v1133 = vld [vmem:[%s1132] sm:$0xff]
    %s1134 = scalar_lea.vmem [#allocation2], %s1131
    %v1135 = vld [vmem:[%s1134] sm:$0xff]
    %v1137 = vsel %vm143, %v1129, 0
    %v1140 = vsel %vm143, %v1135, 0
    %1142 = vmatprep.subr.mxu0 0.0
    %1143 = vmatpush1.msra.mxu0 0.0
    %1144 = vmatprep.subr.mxu0 0.0
    %1145 = vmatpush1.msra.mxu0 0.0
    %1146 = vmatprep.subr.mxu0 0.0
    %1147 = vmatpush1.msra.mxu0 0.0
    %1148 = vmatprep.subr.mxu0 0.0
    %1149 = vmatpush1.msra.mxu0 0.0
    %1150 = vmatprep.subr.mxu0 0.0
    %1151 = vmatpush1.msra.mxu0 0.0
    %1152 = vmatprep.subr.mxu0 0.0
    %1153 = vmatpush1.msra.mxu0 0.0
    %1154 = vmatprep.subr.mxu0 0.0
    %1155 = vmatpush1.msra.mxu0 0.0
    %1156 = vmatprep.subr.mxu0 0.0
    %1157 = vmatpush1.msra.mxu0 0.0
    %1158 = vmatprep.subr.mxu0 0.0
    %1159 = vmatpush1.msra.mxu0 0.0
    %1160 = vmatprep.subr.mxu0 0.0
    %1161 = vmatpush1.msra.mxu0 0.0
    %1162 = vmatprep.subr.mxu0 0.0
    %1163 = vmatpush1.msra.mxu0 0.0
    %1164 = vmatprep.subr.mxu0 0.0
    %1165 = vmatpush1.msra.mxu0 0.0
    %1166 = vmatprep.subr.mxu0 %v306
    %1167 = vmatpush1.msra.mxu0 %v305
    %1168 = vmatprep.subr.mxu0 %v304
    %1169 = vmatpush1.msra.mxu0 %v303
    %1170 = vmatprep.subr.mxu0 %v302
    %1171 = vmatpush1.msra.mxu0 %v301
    %1172 = vmatprep.subr.mxu0 %v300
    %1173 = vmatpush1.msra.mxu0 %v299
    %1174 = vmatprep.subr.mxu0 0.0
    %1175 = vmatpush2.msra.mxu0 0.0
    %1176 = vmatprep.subr.mxu0 0.0
    %1177 = vmatpush2.msra.mxu0 0.0
    %1178 = vmatprep.subr.mxu0 0.0
    %1179 = vmatpush2.msra.mxu0 0.0
    %1180 = vmatprep.subr.mxu0 0.0
    %1181 = vmatpush2.msra.mxu0 0.0
    %1182 = vmatprep.subr.mxu0 0.0
    %1183 = vmatpush2.msra.mxu0 0.0
    %1184 = vmatprep.subr.mxu0 0.0
    %1185 = vmatpush2.msra.mxu0 0.0
    %1186 = vmatprep.subr.mxu0 0.0
    %1187 = vmatpush2.msra.mxu0 0.0
    %1188 = vmatprep.subr.mxu0 0.0
    %1189 = vmatpush2.msra.mxu0 0.0
    %1190 = vmatprep.subr.mxu0 0.0
    %1191 = vmatpush2.msra.mxu0 0.0
    %1192 = vmatprep.subr.mxu0 0.0
    %1193 = vmatpush2.msra.mxu0 0.0
    %1194 = vmatprep.subr.mxu0 0.0
    %1195 = vmatpush2.msra.mxu0 0.0
    %1196 = vmatprep.subr.mxu0 0.0
    %1197 = vmatpush2.msra.mxu0 0.0
    %1198 = vmatprep.subr.mxu0 0.0
    %1199 = vmatpush2.msra.mxu0 0.0
    %1200 = vmatprep.subr.mxu0 0.0
    %1201 = vmatpush2.msra.mxu0 0.0
    %1202 = vmatprep.subr.mxu0 0.0
    %1203 = vmatpush2.msra.mxu0 0.0
    %1204 = vmatprep.subr.mxu0 0.0
    %1205 = vmatpush2.msra.mxu0 0.0
    %1206 = vmatprep.mubr.f32.mxu0 0.0
    %1207 = vmatmul.mubr.f32.gmra.mxu0 %v1137
    %v1208 = vpop.f32.mrf.mxu0
    %v1209 = vadd.f32 0.0, %v1208
    %v1210 = vpop.f32.mrf.mxu0
    %v1211 = vadd.f32 0.0, %v1210
    %1212 = vmatprep.mubr.f32.mxu0 0.0
    %1213 = vmatmul.mubr.f32.gmra.mxu0 %v1140
    %v1214 = vpop.f32.mrf.mxu0
    %v1215 = vadd.f32 0.0, %v1214
    %v1216 = vpop.f32.mrf.mxu0
    %v1217 = vadd.f32 0.0, %v1216
    %1218 = vdwg.mxu0
    %v1220 = vsel %vm143, %v1127, 0
    %v1223 = vsel %vm143, %v1133, 0
    %1225 = vmatprep.subr.mxu0 0.0
    %1226 = vmatpush1.msra.mxu0 0.0
    %1227 = vmatprep.subr.mxu0 0.0
    %1228 = vmatpush1.msra.mxu0 0.0
    %1229 = vmatprep.subr.mxu0 0.0
    %1230 = vmatpush1.msra.mxu0 0.0
    %1231 = vmatprep.subr.mxu0 0.0
    %1232 = vmatpush1.msra.mxu0 0.0
    %1233 = vmatprep.subr.mxu0 0.0
    %1234 = vmatpush1.msra.mxu0 0.0
    %1235 = vmatprep.subr.mxu0 0.0
    %1236 = vmatpush1.msra.mxu0 0.0
    %1237 = vmatprep.subr.mxu0 0.0
    %1238 = vmatpush1.msra.mxu0 0.0
    %1239 = vmatprep.subr.mxu0 0.0
    %1240 = vmatpush1.msra.mxu0 0.0
    %1241 = vmatprep.subr.mxu0 0.0
    %1242 = vmatpush1.msra.mxu0 0.0
    %1243 = vmatprep.subr.mxu0 0.0
    %1244 = vmatpush1.msra.mxu0 0.0
    %1245 = vmatprep.subr.mxu0 0.0
    %1246 = vmatpush1.msra.mxu0 0.0
    %1247 = vmatprep.subr.mxu0 0.0
    %1248 = vmatpush1.msra.mxu0 0.0
    %1249 = vmatprep.subr.mxu0 %v298
    %1250 = vmatpush1.msra.mxu0 %v297
    %1251 = vmatprep.subr.mxu0 %v296
    %1252 = vmatpush1.msra.mxu0 %v295
    %1253 = vmatprep.subr.mxu0 %v294
    %1254 = vmatpush1.msra.mxu0 %v293
    %1255 = vmatprep.subr.mxu0 %v292
    %1256 = vmatpush1.msra.mxu0 %v291
    %1257 = vmatprep.subr.mxu0 0.0
    %1258 = vmatpush2.msra.mxu0 0.0
    %1259 = vmatprep.subr.mxu0 0.0
    %1260 = vmatpush2.msra.mxu0 0.0
    %1261 = vmatprep.subr.mxu0 0.0
    %1262 = vmatpush2.msra.mxu0 0.0
    %1263 = vmatprep.subr.mxu0 0.0
    %1264 = vmatpush2.msra.mxu0 0.0
    %1265 = vmatprep.subr.mxu0 0.0
    %1266 = vmatpush2.msra.mxu0 0.0
    %1267 = vmatprep.subr.mxu0 0.0
    %1268 = vmatpush2.msra.mxu0 0.0
    %1269 = vmatprep.subr.mxu0 0.0
    %1270 = vmatpush2.msra.mxu0 0.0
    %1271 = vmatprep.subr.mxu0 0.0
    %1272 = vmatpush2.msra.mxu0 0.0
    %1273 = vmatprep.subr.mxu0 0.0
    %1274 = vmatpush2.msra.mxu0 0.0
    %1275 = vmatprep.subr.mxu0 0.0
    %1276 = vmatpush2.msra.mxu0 0.0
    %1277 = vmatprep.subr.mxu0 0.0
    %1278 = vmatpush2.msra.mxu0 0.0
    %1279 = vmatprep.subr.mxu0 0.0
    %1280 = vmatpush2.msra.mxu0 0.0
    %1281 = vmatprep.subr.mxu0 0.0
    %1282 = vmatpush2.msra.mxu0 0.0
    %1283 = vmatprep.subr.mxu0 0.0
    %1284 = vmatpush2.msra.mxu0 0.0
    %1285 = vmatprep.subr.mxu0 0.0
    %1286 = vmatpush2.msra.mxu0 0.0
    %1287 = vmatprep.subr.mxu0 0.0
    %1288 = vmatpush2.msra.mxu0 0.0
    %1289 = vmatprep.mubr.f32.mxu0 0.0
    %1290 = vmatmul.mubr.f32.gmra.mxu0 %v1220
    %v1291 = vpop.f32.mrf.mxu0
    %v1292 = vadd.f32 %v1209, %v1291
    %v1293 = vpop.f32.mrf.mxu0
    %v1294 = vadd.f32 %v1211, %v1293
    %1295 = vmatprep.mubr.f32.mxu0 0.0
    %1296 = vmatmul.mubr.f32.gmra.mxu0 %v1223
    %v1297 = vpop.f32.mrf.mxu0
    %v1298 = vadd.f32 %v1215, %v1297
    %v1299 = vpop.f32.mrf.mxu0
    %v1300 = vadd.f32 %v1217, %v1299
    %1301 = vdwg.mxu0
    %v1302 = vadd.f32 %v1292, %v312
    %v1303 = vadd.f32 %v1294, %v316
    %v1304 = vadd.f32 %v1298, %v312
    %v1305 = vadd.f32 %v1300, %v316
    %v1306 = vxor.u32 %v1302, 2147483648
    %v1307 = vxor.u32 %v1304, 2147483648
    %v1308 = vmul.f32 %v1306, 1.442695
    %v1309 = vpow.pop %v1308
    %v1310 = vmul.f32 %v1307, 1.442695
    %v1311 = vpow.pop %v1310
    %v1312 = vadd.f32 %v1309, 1.0
    %v1313 = vadd.f32 %v1311, 1.0
    %v1314 = vrcp.pop %v1312
    %v1315 = vmul.f32 1.0, %v1314
    %v1316 = vrcp.pop %v1313
    %v1317 = vmul.f32 1.0, %v1316
    %v1318 = vtanh.pop %v1302
    %v1319 = vtanh.pop %v1304
    %1322 = vrot.lane.b32.xlu0 %v1318, 32
    %v1323 = vpop.permute.xlu0 %1322
    %1324 = vrot.lane.b32.xlu0 %v1319, 32
    %v1325 = vpop.permute.xlu0 %1324
    %v1328 = vmul.f32 %v1315, %v1323
    %v1329 = vmul.f32 %v1317, %v1325
    %v1330 = vmul.f32 %v1315, %v1127
    %v1331 = vmul.f32 %v1317, %v1133
    %1334 = vrot.lane.b32.xlu0 %v1330, 96
    %v1335 = vpop.permute.xlu0 %1334
    %1336 = vrot.lane.b32.xlu0 %v1331, 96
    %v1337 = vpop.permute.xlu0 %1336
    %v1340 = vadd.f32 %v1328, %v1335
    %v1341 = vadd.f32 %v1329, %v1337
    %1342 = vrot.lane.b32.xlu0 %v1129, 32
    %v1343 = vpop.permute.xlu0 %1342
    %1344 = vrot.lane.b32.xlu0 %v1135, 32
    %v1345 = vpop.permute.xlu0 %1344
    %v1348 = vmul.f32 %v1315, %v1343
    %v1349 = vmul.f32 %v1317, %v1345
    %1352 = vrot.lane.b32.xlu0 %v1348, 64
    %v1353 = vpop.permute.xlu0 %1352
    %1354 = vrot.lane.b32.xlu0 %v1349, 64
    %v1355 = vpop.permute.xlu0 %1354
    %v1358 = vadd.f32 %v1340, %v1353
    %v1359 = vadd.f32 %v1341, %v1355
    %v1360 = vxor.u32 %v1303, 2147483648
    %v1361 = vxor.u32 %v1305, 2147483648
    %v1362 = vmul.f32 %v1360, 1.442695
    %v1363 = vpow.pop %v1362
    %v1364 = vmul.f32 %v1361, 1.442695
    %v1365 = vpow.pop %v1364
    %v1366 = vadd.f32 %v1363, 1.0
    %v1367 = vadd.f32 %v1365, 1.0
    %v1368 = vrcp.pop %v1366
    %v1369 = vmul.f32 1.0, %v1368
    %v1370 = vrcp.pop %v1367
    %v1371 = vmul.f32 1.0, %v1370
    %v1372 = vtanh.pop %v1358
    %v1373 = vtanh.pop %v1359
    %v1374 = vmul.f32 %v1369, %v1372
    %v1375 = vmul.f32 %v1371, %v1373
    %1378 = vrot.lane.b32.xlu0 %v1358, 32
    %v1379 = vpop.permute.xlu0 %1378
    %1380 = vrot.lane.b32.xlu0 %v1359, 32
    %v1381 = vpop.permute.xlu0 %1380
    %v1384 = vsel %vm143, %v1374, %v1379
    %v1385 = vsel %vm143, %v1375, %v1381
    %s1386 = sld [smem:[#allocation6 + $0x6]]
    %s1387 = scalar_lea.vmem [#allocation2], %s1386
    %1388 = vst.msk [vmem:[%s1387] sm:$0xff] %vm583, %v1384
    %s1389 = sld [smem:[#allocation6 + $0x7]]
    %s1390 = scalar_lea.vmem [#allocation2], %s1389
    %1391 = vst.msk [vmem:[%s1390] sm:$0xff] %vm583, %v1385
    %s1392 = sld [smem:[#allocation4 + $0x8]]
    %s1393 = sld [smem:[#allocation5 + $0x8]]
    %s1394 = scalar_lea.vmem [#allocation2], %s1392
    %v1395 = vld [vmem:[%s1394] sm:$0xff]
    %s1396 = scalar_lea.vmem [#allocation2], %s1393
    %v1397 = vld [vmem:[%s1396] sm:$0xff]
    %s1398 = sld [smem:[#allocation4 + $0x9]]
    %s1399 = sld [smem:[#allocation5 + $0x9]]
    %s1400 = scalar_lea.vmem [#allocation2], %s1398
    %v1401 = vld [vmem:[%s1400] sm:$0xff]
    %s1402 = scalar_lea.vmem [#allocation2], %s1399
    %v1403 = vld [vmem:[%s1402] sm:$0xff]
    %v1405 = vsel %vm143, %v1397, 0
    %v1408 = vsel %vm143, %v1403, 0
    %1410 = vmatprep.subr.mxu0 0.0
    %1411 = vmatpush1.msra.mxu0 0.0
    %1412 = vmatprep.subr.mxu0 0.0
    %1413 = vmatpush1.msra.mxu0 0.0
    %1414 = vmatprep.subr.mxu0 0.0
    %1415 = vmatpush1.msra.mxu0 0.0
    %1416 = vmatprep.subr.mxu0 0.0
    %1417 = vmatpush1.msra.mxu0 0.0
    %1418 = vmatprep.subr.mxu0 0.0
    %1419 = vmatpush1.msra.mxu0 0.0
    %1420 = vmatprep.subr.mxu0 0.0
    %1421 = vmatpush1.msra.mxu0 0.0
    %1422 = vmatprep.subr.mxu0 0.0
    %1423 = vmatpush1.msra.mxu0 0.0
    %1424 = vmatprep.subr.mxu0 0.0
    %1425 = vmatpush1.msra.mxu0 0.0
    %1426 = vmatprep.subr.mxu0 0.0
    %1427 = vmatpush1.msra.mxu0 0.0
    %1428 = vmatprep.subr.mxu0 0.0
    %1429 = vmatpush1.msra.mxu0 0.0
    %1430 = vmatprep.subr.mxu0 0.0
    %1431 = vmatpush1.msra.mxu0 0.0
    %1432 = vmatprep.subr.mxu0 0.0
    %1433 = vmatpush1.msra.mxu0 0.0
    %1434 = vmatprep.subr.mxu0 %v306
    %1435 = vmatpush1.msra.mxu0 %v305
    %1436 = vmatprep.subr.mxu0 %v304
    %1437 = vmatpush1.msra.mxu0 %v303
    %1438 = vmatprep.subr.mxu0 %v302
    %1439 = vmatpush1.msra.mxu0 %v301
    %1440 = vmatprep.subr.mxu0 %v300
    %1441 = vmatpush1.msra.mxu0 %v299
    %1442 = vmatprep.subr.mxu0 0.0
    %1443 = vmatpush2.msra.mxu0 0.0
    %1444 = vmatprep.subr.mxu0 0.0
    %1445 = vmatpush2.msra.mxu0 0.0
    %1446 = vmatprep.subr.mxu0 0.0
    %1447 = vmatpush2.msra.mxu0 0.0
    %1448 = vmatprep.subr.mxu0 0.0
    %1449 = vmatpush2.msra.mxu0 0.0
    %1450 = vmatprep.subr.mxu0 0.0
    %1451 = vmatpush2.msra.mxu0 0.0
    %1452 = vmatprep.subr.mxu0 0.0
    %1453 = vmatpush2.msra.mxu0 0.0
    %1454 = vmatprep.subr.mxu0 0.0
    %1455 = vmatpush2.msra.mxu0 0.0
    %1456 = vmatprep.subr.mxu0 0.0
    %1457 = vmatpush2.msra.mxu0 0.0
    %1458 = vmatprep.subr.mxu0 0.0
    %1459 = vmatpush2.msra.mxu0 0.0
    %1460 = vmatprep.subr.mxu0 0.0
    %1461 = vmatpush2.msra.mxu0 0.0
    %1462 = vmatprep.subr.mxu0 0.0
    %1463 = vmatpush2.msra.mxu0 0.0
    %1464 = vmatprep.subr.mxu0 0.0
    %1465 = vmatpush2.msra.mxu0 0.0
    %1466 = vmatprep.subr.mxu0 0.0
    %1467 = vmatpush2.msra.mxu0 0.0
    %1468 = vmatprep.subr.mxu0 0.0
    %1469 = vmatpush2.msra.mxu0 0.0
    %1470 = vmatprep.subr.mxu0 0.0
    %1471 = vmatpush2.msra.mxu0 0.0
    %1472 = vmatprep.subr.mxu0 0.0
    %1473 = vmatpush2.msra.mxu0 0.0
    %1474 = vmatprep.mubr.f32.mxu0 0.0
    %1475 = vmatmul.mubr.f32.gmra.mxu0 %v1405
    %v1476 = vpop.f32.mrf.mxu0
    %v1477 = vadd.f32 0.0, %v1476
    %v1478 = vpop.f32.mrf.mxu0
    %v1479 = vadd.f32 0.0, %v1478
    %1480 = vmatprep.mubr.f32.mxu0 0.0
    %1481 = vmatmul.mubr.f32.gmra.mxu0 %v1408
    %v1482 = vpop.f32.mrf.mxu0
    %v1483 = vadd.f32 0.0, %v1482
    %v1484 = vpop.f32.mrf.mxu0
    %v1485 = vadd.f32 0.0, %v1484
    %1486 = vdwg.mxu0
    %v1488 = vsel %vm143, %v1395, 0
    %v1491 = vsel %vm143, %v1401, 0
    %1493 = vmatprep.subr.mxu0 0.0
    %1494 = vmatpush1.msra.mxu0 0.0
    %1495 = vmatprep.subr.mxu0 0.0
    %1496 = vmatpush1.msra.mxu0 0.0
    %1497 = vmatprep.subr.mxu0 0.0
    %1498 = vmatpush1.msra.mxu0 0.0
    %1499 = vmatprep.subr.mxu0 0.0
    %1500 = vmatpush1.msra.mxu0 0.0
    %1501 = vmatprep.subr.mxu0 0.0
    %1502 = vmatpush1.msra.mxu0 0.0
    %1503 = vmatprep.subr.mxu0 0.0
    %1504 = vmatpush1.msra.mxu0 0.0
    %1505 = vmatprep.subr.mxu0 0.0
    %1506 = vmatpush1.msra.mxu0 0.0
    %1507 = vmatprep.subr.mxu0 0.0
    %1508 = vmatpush1.msra.mxu0 0.0
    %1509 = vmatprep.subr.mxu0 0.0
    %1510 = vmatpush1.msra.mxu0 0.0
    %1511 = vmatprep.subr.mxu0 0.0
    %1512 = vmatpush1.msra.mxu0 0.0
    %1513 = vmatprep.subr.mxu0 0.0
    %1514 = vmatpush1.msra.mxu0 0.0
    %1515 = vmatprep.subr.mxu0 0.0
    %1516 = vmatpush1.msra.mxu0 0.0
    %1517 = vmatprep.subr.mxu0 %v298
    %1518 = vmatpush1.msra.mxu0 %v297
    %1519 = vmatprep.subr.mxu0 %v296
    %1520 = vmatpush1.msra.mxu0 %v295
    %1521 = vmatprep.subr.mxu0 %v294
    %1522 = vmatpush1.msra.mxu0 %v293
    %1523 = vmatprep.subr.mxu0 %v292
    %1524 = vmatpush1.msra.mxu0 %v291
    %1525 = vmatprep.subr.mxu0 0.0
    %1526 = vmatpush2.msra.mxu0 0.0
    %1527 = vmatprep.subr.mxu0 0.0
    %1528 = vmatpush2.msra.mxu0 0.0
    %1529 = vmatprep.subr.mxu0 0.0
    %1530 = vmatpush2.msra.mxu0 0.0
    %1531 = vmatprep.subr.mxu0 0.0
    %1532 = vmatpush2.msra.mxu0 0.0
    %1533 = vmatprep.subr.mxu0 0.0
    %1534 = vmatpush2.msra.mxu0 0.0
    %1535 = vmatprep.subr.mxu0 0.0
    %1536 = vmatpush2.msra.mxu0 0.0
    %1537 = vmatprep.subr.mxu0 0.0
    %1538 = vmatpush2.msra.mxu0 0.0
    %1539 = vmatprep.subr.mxu0 0.0
    %1540 = vmatpush2.msra.mxu0 0.0
    %1541 = vmatprep.subr.mxu0 0.0
    %1542 = vmatpush2.msra.mxu0 0.0
    %1543 = vmatprep.subr.mxu0 0.0
    %1544 = vmatpush2.msra.mxu0 0.0
    %1545 = vmatprep.subr.mxu0 0.0
    %1546 = vmatpush2.msra.mxu0 0.0
    %1547 = vmatprep.subr.mxu0 0.0
    %1548 = vmatpush2.msra.mxu0 0.0
    %1549 = vmatprep.subr.mxu0 0.0
    %1550 = vmatpush2.msra.mxu0 0.0
    %1551 = vmatprep.subr.mxu0 0.0
    %1552 = vmatpush2.msra.mxu0 0.0
    %1553 = vmatprep.subr.mxu0 0.0
    %1554 = vmatpush2.msra.mxu0 0.0
    %1555 = vmatprep.subr.mxu0 0.0
    %1556 = vmatpush2.msra.mxu0 0.0
    %1557 = vmatprep.mubr.f32.mxu0 0.0
    %1558 = vmatmul.mubr.f32.gmra.mxu0 %v1488
    %v1559 = vpop.f32.mrf.mxu0
    %v1560 = vadd.f32 %v1477, %v1559
    %v1561 = vpop.f32.mrf.mxu0
    %v1562 = vadd.f32 %v1479, %v1561
    %1563 = vmatprep.mubr.f32.mxu0 0.0
    %1564 = vmatmul.mubr.f32.gmra.mxu0 %v1491
    %v1565 = vpop.f32.mrf.mxu0
    %v1566 = vadd.f32 %v1483, %v1565
    %v1567 = vpop.f32.mrf.mxu0
    %v1568 = vadd.f32 %v1485, %v1567
    %1569 = vdwg.mxu0
    %v1570 = vadd.f32 %v1560, %v312
    %v1571 = vadd.f32 %v1562, %v316
    %v1572 = vadd.f32 %v1566, %v312
    %v1573 = vadd.f32 %v1568, %v316
    %v1574 = vxor.u32 %v1570, 2147483648
    %v1575 = vxor.u32 %v1572, 2147483648
    %v1576 = vmul.f32 %v1574, 1.442695
    %v1577 = vpow.pop %v1576
    %v1578 = vmul.f32 %v1575, 1.442695
    %v1579 = vpow.pop %v1578
    %v1580 = vadd.f32 %v1577, 1.0
    %v1581 = vadd.f32 %v1579, 1.0
    %v1582 = vrcp.pop %v1580
    %v1583 = vmul.f32 1.0, %v1582
    %v1584 = vrcp.pop %v1581
    %v1585 = vmul.f32 1.0, %v1584
    %v1586 = vtanh.pop %v1570
    %v1587 = vtanh.pop %v1572
    %1590 = vrot.lane.b32.xlu0 %v1586, 32
    %v1591 = vpop.permute.xlu0 %1590
    %1592 = vrot.lane.b32.xlu0 %v1587, 32
    %v1593 = vpop.permute.xlu0 %1592
    %v1596 = vmul.f32 %v1583, %v1591
    %v1597 = vmul.f32 %v1585, %v1593
    %v1598 = vmul.f32 %v1583, %v1395
    %v1599 = vmul.f32 %v1585, %v1401
    %1602 = vrot.lane.b32.xlu0 %v1598, 96
    %v1603 = vpop.permute.xlu0 %1602
    %1604 = vrot.lane.b32.xlu0 %v1599, 96
    %v1605 = vpop.permute.xlu0 %1604
    %v1608 = vadd.f32 %v1596, %v1603
    %v1609 = vadd.f32 %v1597, %v1605
    %1610 = vrot.lane.b32.xlu0 %v1397, 32
    %v1611 = vpop.permute.xlu0 %1610
    %1612 = vrot.lane.b32.xlu0 %v1403, 32
    %v1613 = vpop.permute.xlu0 %1612
    %v1616 = vmul.f32 %v1583, %v1611
    %v1617 = vmul.f32 %v1585, %v1613
    %1620 = vrot.lane.b32.xlu0 %v1616, 64
    %v1621 = vpop.permute.xlu0 %1620
    %1622 = vrot.lane.b32.xlu0 %v1617, 64
    %v1623 = vpop.permute.xlu0 %1622
    %v1626 = vadd.f32 %v1608, %v1621
    %v1627 = vadd.f32 %v1609, %v1623
    %v1628 = vxor.u32 %v1571, 2147483648
    %v1629 = vxor.u32 %v1573, 2147483648
    %v1630 = vmul.f32 %v1628, 1.442695
    %v1631 = vpow.pop %v1630
    %v1632 = vmul.f32 %v1629, 1.442695
    %v1633 = vpow.pop %v1632
    %v1634 = vadd.f32 %v1631, 1.0
    %v1635 = vadd.f32 %v1633, 1.0
    %v1636 = vrcp.pop %v1634
    %v1637 = vmul.f32 1.0, %v1636
    %v1638 = vrcp.pop %v1635
    %v1639 = vmul.f32 1.0, %v1638
    %v1640 = vtanh.pop %v1626
    %v1641 = vtanh.pop %v1627
    %v1642 = vmul.f32 %v1637, %v1640
    %v1643 = vmul.f32 %v1639, %v1641
    %1646 = vrot.lane.b32.xlu0 %v1626, 32
    %v1647 = vpop.permute.xlu0 %1646
    %1648 = vrot.lane.b32.xlu0 %v1627, 32
    %v1649 = vpop.permute.xlu0 %1648
    %v1652 = vsel %vm143, %v1642, %v1647
    %v1653 = vsel %vm143, %v1643, %v1649
    %s1654 = sld [smem:[#allocation6 + $0x8]]
    %s1655 = scalar_lea.vmem [#allocation2], %s1654
    %1656 = vst.msk [vmem:[%s1655] sm:$0xff] %vm583, %v1652
    %s1657 = sld [smem:[#allocation6 + $0x9]]
    %s1658 = scalar_lea.vmem [#allocation2], %s1657
    %1659 = vst.msk [vmem:[%s1658] sm:$0xff] %vm583, %v1653
    %s1660 = sld [smem:[#allocation4 + $0xa]]
    %s1661 = sld [smem:[#allocation5 + $0xa]]
    %s1662 = scalar_lea.vmem [#allocation2], %s1660
    %v1663 = vld [vmem:[%s1662] sm:$0xff]
    %s1664 = scalar_lea.vmem [#allocation2], %s1661
    %v1665 = vld [vmem:[%s1664] sm:$0xff]
    %s1666 = sld [smem:[#allocation4 + $0xb]]
    %s1667 = sld [smem:[#allocation5 + $0xb]]
    %s1668 = scalar_lea.vmem [#allocation2], %s1666
    %v1669 = vld [vmem:[%s1668] sm:$0xff]
    %s1670 = scalar_lea.vmem [#allocation2], %s1667
    %v1671 = vld [vmem:[%s1670] sm:$0xff]
    %v1673 = vsel %vm143, %v1665, 0
    %v1676 = vsel %vm143, %v1671, 0
    %1678 = vmatprep.subr.mxu0 0.0
    %1679 = vmatpush1.msra.mxu0 0.0
    %1680 = vmatprep.subr.mxu0 0.0
    %1681 = vmatpush1.msra.mxu0 0.0
    %1682 = vmatprep.subr.mxu0 0.0
    %1683 = vmatpush1.msra.mxu0 0.0
    %1684 = vmatprep.subr.mxu0 0.0
    %1685 = vmatpush1.msra.mxu0 0.0
    %1686 = vmatprep.subr.mxu0 0.0
    %1687 = vmatpush1.msra.mxu0 0.0
    %1688 = vmatprep.subr.mxu0 0.0
    %1689 = vmatpush1.msra.mxu0 0.0
    %1690 = vmatprep.subr.mxu0 0.0
    %1691 = vmatpush1.msra.mxu0 0.0
    %1692 = vmatprep.subr.mxu0 0.0
    %1693 = vmatpush1.msra.mxu0 0.0
    %1694 = vmatprep.subr.mxu0 0.0
    %1695 = vmatpush1.msra.mxu0 0.0
    %1696 = vmatprep.subr.mxu0 0.0
    %1697 = vmatpush1.msra.mxu0 0.0
    %1698 = vmatprep.subr.mxu0 0.0
    %1699 = vmatpush1.msra.mxu0 0.0
    %1700 = vmatprep.subr.mxu0 0.0
    %1701 = vmatpush1.msra.mxu0 0.0
    %1702 = vmatprep.subr.mxu0 %v306
    %1703 = vmatpush1.msra.mxu0 %v305
    %1704 = vmatprep.subr.mxu0 %v304
    %1705 = vmatpush1.msra.mxu0 %v303
    %1706 = vmatprep.subr.mxu0 %v302
    %1707 = vmatpush1.msra.mxu0 %v301
    %1708 = vmatprep.subr.mxu0 %v300
    %1709 = vmatpush1.msra.mxu0 %v299
    %1710 = vmatprep.subr.mxu0 0.0
    %1711 = vmatpush2.msra.mxu0 0.0
    %1712 = vmatprep.subr.mxu0 0.0
    %1713 = vmatpush2.msra.mxu0 0.0
    %1714 = vmatprep.subr.mxu0 0.0
    %1715 = vmatpush2.msra.mxu0 0.0
    %1716 = vmatprep.subr.mxu0 0.0
    %1717 = vmatpush2.msra.mxu0 0.0
    %1718 = vmatprep.subr.mxu0 0.0
    %1719 = vmatpush2.msra.mxu0 0.0
    %1720 = vmatprep.subr.mxu0 0.0
    %1721 = vmatpush2.msra.mxu0 0.0
    %1722 = vmatprep.subr.mxu0 0.0
    %1723 = vmatpush2.msra.mxu0 0.0
    %1724 = vmatprep.subr.mxu0 0.0
    %1725 = vmatpush2.msra.mxu0 0.0
    %1726 = vmatprep.subr.mxu0 0.0
    %1727 = vmatpush2.msra.mxu0 0.0
    %1728 = vmatprep.subr.mxu0 0.0
    %1729 = vmatpush2.msra.mxu0 0.0
    %1730 = vmatprep.subr.mxu0 0.0
    %1731 = vmatpush2.msra.mxu0 0.0
    %1732 = vmatprep.subr.mxu0 0.0
    %1733 = vmatpush2.msra.mxu0 0.0
    %1734 = vmatprep.subr.mxu0 0.0
    %1735 = vmatpush2.msra.mxu0 0.0
    %1736 = vmatprep.subr.mxu0 0.0
    %1737 = vmatpush2.msra.mxu0 0.0
    %1738 = vmatprep.subr.mxu0 0.0
    %1739 = vmatpush2.msra.mxu0 0.0
    %1740 = vmatprep.subr.mxu0 0.0
    %1741 = vmatpush2.msra.mxu0 0.0
    %1742 = vmatprep.mubr.f32.mxu0 0.0
    %1743 = vmatmul.mubr.f32.gmra.mxu0 %v1673
    %v1744 = vpop.f32.mrf.mxu0
    %v1745 = vadd.f32 0.0, %v1744
    %v1746 = vpop.f32.mrf.mxu0
    %v1747 = vadd.f32 0.0, %v1746
    %1748 = vmatprep.mubr.f32.mxu0 0.0
    %1749 = vmatmul.mubr.f32.gmra.mxu0 %v1676
    %v1750 = vpop.f32.mrf.mxu0
    %v1751 = vadd.f32 0.0, %v1750
    %v1752 = vpop.f32.mrf.mxu0
    %v1753 = vadd.f32 0.0, %v1752
    %1754 = vdwg.mxu0
    %v1756 = vsel %vm143, %v1663, 0
    %v1759 = vsel %vm143, %v1669, 0
    %1761 = vmatprep.subr.mxu0 0.0
    %1762 = vmatpush1.msra.mxu0 0.0
    %1763 = vmatprep.subr.mxu0 0.0
    %1764 = vmatpush1.msra.mxu0 0.0
    %1765 = vmatprep.subr.mxu0 0.0
    %1766 = vmatpush1.msra.mxu0 0.0
    %1767 = vmatprep.subr.mxu0 0.0
    %1768 = vmatpush1.msra.mxu0 0.0
    %1769 = vmatprep.subr.mxu0 0.0
    %1770 = vmatpush1.msra.mxu0 0.0
    %1771 = vmatprep.subr.mxu0 0.0
    %1772 = vmatpush1.msra.mxu0 0.0
    %1773 = vmatprep.subr.mxu0 0.0
    %1774 = vmatpush1.msra.mxu0 0.0
    %1775 = vmatprep.subr.mxu0 0.0
    %1776 = vmatpush1.msra.mxu0 0.0
    %1777 = vmatprep.subr.mxu0 0.0
    %1778 = vmatpush1.msra.mxu0 0.0
    %1779 = vmatprep.subr.mxu0 0.0
    %1780 = vmatpush1.msra.mxu0 0.0
    %1781 = vmatprep.subr.mxu0 0.0
    %1782 = vmatpush1.msra.mxu0 0.0
    %1783 = vmatprep.subr.mxu0 0.0
    %1784 = vmatpush1.msra.mxu0 0.0
    %1785 = vmatprep.subr.mxu0 %v298
    %1786 = vmatpush1.msra.mxu0 %v297
    %1787 = vmatprep.subr.mxu0 %v296
    %1788 = vmatpush1.msra.mxu0 %v295
    %1789 = vmatprep.subr.mxu0 %v294
    %1790 = vmatpush1.msra.mxu0 %v293
    %1791 = vmatprep.subr.mxu0 %v292
    %1792 = vmatpush1.msra.mxu0 %v291
    %1793 = vmatprep.subr.mxu0 0.0
    %1794 = vmatpush2.msra.mxu0 0.0
    %1795 = vmatprep.subr.mxu0 0.0
    %1796 = vmatpush2.msra.mxu0 0.0
    %1797 = vmatprep.subr.mxu0 0.0
    %1798 = vmatpush2.msra.mxu0 0.0
    %1799 = vmatprep.subr.mxu0 0.0
    %1800 = vmatpush2.msra.mxu0 0.0
    %1801 = vmatprep.subr.mxu0 0.0
    %1802 = vmatpush2.msra.mxu0 0.0
    %1803 = vmatprep.subr.mxu0 0.0
    %1804 = vmatpush2.msra.mxu0 0.0
    %1805 = vmatprep.subr.mxu0 0.0
    %1806 = vmatpush2.msra.mxu0 0.0
    %1807 = vmatprep.subr.mxu0 0.0
    %1808 = vmatpush2.msra.mxu0 0.0
    %1809 = vmatprep.subr.mxu0 0.0
    %1810 = vmatpush2.msra.mxu0 0.0
    %1811 = vmatprep.subr.mxu0 0.0
    %1812 = vmatpush2.msra.mxu0 0.0
    %1813 = vmatprep.subr.mxu0 0.0
    %1814 = vmatpush2.msra.mxu0 0.0
    %1815 = vmatprep.subr.mxu0 0.0
    %1816 = vmatpush2.msra.mxu0 0.0
    %1817 = vmatprep.subr.mxu0 0.0
    %1818 = vmatpush2.msra.mxu0 0.0
    %1819 = vmatprep.subr.mxu0 0.0
    %1820 = vmatpush2.msra.mxu0 0.0
    %1821 = vmatprep.subr.mxu0 0.0
    %1822 = vmatpush2.msra.mxu0 0.0
    %1823 = vmatprep.subr.mxu0 0.0
    %1824 = vmatpush2.msra.mxu0 0.0
    %1825 = vmatprep.mubr.f32.mxu0 0.0
    %1826 = vmatmul.mubr.f32.gmra.mxu0 %v1756
    %v1827 = vpop.f32.mrf.mxu0
    %v1828 = vadd.f32 %v1745, %v1827
    %v1829 = vpop.f32.mrf.mxu0
    %v1830 = vadd.f32 %v1747, %v1829
    %1831 = vmatprep.mubr.f32.mxu0 0.0
    %1832 = vmatmul.mubr.f32.gmra.mxu0 %v1759
    %v1833 = vpop.f32.mrf.mxu0
    %v1834 = vadd.f32 %v1751, %v1833
    %v1835 = vpop.f32.mrf.mxu0
    %v1836 = vadd.f32 %v1753, %v1835
    %1837 = vdwg.mxu0
    %v1838 = vadd.f32 %v1828, %v312
    %v1839 = vadd.f32 %v1830, %v316
    %v1840 = vadd.f32 %v1834, %v312
    %v1841 = vadd.f32 %v1836, %v316
    %v1842 = vxor.u32 %v1838, 2147483648
    %v1843 = vxor.u32 %v1840, 2147483648
    %v1844 = vmul.f32 %v1842, 1.442695
    %v1845 = vpow.pop %v1844
    %v1846 = vmul.f32 %v1843, 1.442695
    %v1847 = vpow.pop %v1846
    %v1848 = vadd.f32 %v1845, 1.0
    %v1849 = vadd.f32 %v1847, 1.0
    %v1850 = vrcp.pop %v1848
    %v1851 = vmul.f32 1.0, %v1850
    %v1852 = vrcp.pop %v1849
    %v1853 = vmul.f32 1.0, %v1852
    %v1854 = vtanh.pop %v1838
    %v1855 = vtanh.pop %v1840
    %1858 = vrot.lane.b32.xlu0 %v1854, 32
    %v1859 = vpop.permute.xlu0 %1858
    %1860 = vrot.lane.b32.xlu0 %v1855, 32
    %v1861 = vpop.permute.xlu0 %1860
    %v1864 = vmul.f32 %v1851, %v1859
    %v1865 = vmul.f32 %v1853, %v1861
    %v1866 = vmul.f32 %v1851, %v1663
    %v1867 = vmul.f32 %v1853, %v1669
    %1870 = vrot.lane.b32.xlu0 %v1866, 96
    %v1871 = vpop.permute.xlu0 %1870
    %1872 = vrot.lane.b32.xlu0 %v1867, 96
    %v1873 = vpop.permute.xlu0 %1872
    %v1876 = vadd.f32 %v1864, %v1871
    %v1877 = vadd.f32 %v1865, %v1873
    %1878 = vrot.lane.b32.xlu0 %v1665, 32
    %v1879 = vpop.permute.xlu0 %1878
    %1880 = vrot.lane.b32.xlu0 %v1671, 32
    %v1881 = vpop.permute.xlu0 %1880
    %v1884 = vmul.f32 %v1851, %v1879
    %v1885 = vmul.f32 %v1853, %v1881
    %1888 = vrot.lane.b32.xlu0 %v1884, 64
    %v1889 = vpop.permute.xlu0 %1888
    %1890 = vrot.lane.b32.xlu0 %v1885, 64
    %v1891 = vpop.permute.xlu0 %1890
    %v1894 = vadd.f32 %v1876, %v1889
    %v1895 = vadd.f32 %v1877, %v1891
    %v1896 = vxor.u32 %v1839, 2147483648
    %v1897 = vxor.u32 %v1841, 2147483648
    %v1898 = vmul.f32 %v1896, 1.442695
    %v1899 = vpow.pop %v1898
    %v1900 = vmul.f32 %v1897, 1.442695
    %v1901 = vpow.pop %v1900
    %v1902 = vadd.f32 %v1899, 1.0
    %v1903 = vadd.f32 %v1901, 1.0
    %v1904 = vrcp.pop %v1902
    %v1905 = vmul.f32 1.0, %v1904
    %v1906 = vrcp.pop %v1903
    %v1907 = vmul.f32 1.0, %v1906
    %v1908 = vtanh.pop %v1894
    %v1909 = vtanh.pop %v1895
    %v1910 = vmul.f32 %v1905, %v1908
    %v1911 = vmul.f32 %v1907, %v1909
    %1914 = vrot.lane.b32.xlu0 %v1894, 32
    %v1915 = vpop.permute.xlu0 %1914
    %1916 = vrot.lane.b32.xlu0 %v1895, 32
    %v1917 = vpop.permute.xlu0 %1916
    %v1920 = vsel %vm143, %v1910, %v1915
    %v1921 = vsel %vm143, %v1911, %v1917
    %s1922 = sld [smem:[#allocation6 + $0xa]]
    %s1923 = scalar_lea.vmem [#allocation2], %s1922
    %1924 = vst.msk [vmem:[%s1923] sm:$0xff] %vm583, %v1920
    %s1925 = sld [smem:[#allocation6 + $0xb]]
    %s1926 = scalar_lea.vmem [#allocation2], %s1925
    %1927 = vst.msk [vmem:[%s1926] sm:$0xff] %vm583, %v1921
    %s1928 = sld [smem:[#allocation4 + $0xc]]
    %s1929 = sld [smem:[#allocation5 + $0xc]]
    %s1930 = scalar_lea.vmem [#allocation2], %s1928
    %v1931 = vld [vmem:[%s1930] sm:$0xff]
    %s1932 = scalar_lea.vmem [#allocation2], %s1929
    %v1933 = vld [vmem:[%s1932] sm:$0xff]
    %s1934 = sld [smem:[#allocation4 + $0xd]]
    %s1935 = sld [smem:[#allocation5 + $0xd]]
    %s1936 = scalar_lea.vmem [#allocation2], %s1934
    %v1937 = vld [vmem:[%s1936] sm:$0xff]
    %s1938 = scalar_lea.vmem [#allocation2], %s1935
    %v1939 = vld [vmem:[%s1938] sm:$0xff]
    %v1941 = vsel %vm143, %v1933, 0
    %v1944 = vsel %vm143, %v1939, 0
    %1946 = vmatprep.subr.mxu0 0.0
    %1947 = vmatpush1.msra.mxu0 0.0
    %1948 = vmatprep.subr.mxu0 0.0
    %1949 = vmatpush1.msra.mxu0 0.0
    %1950 = vmatprep.subr.mxu0 0.0
    %1951 = vmatpush1.msra.mxu0 0.0
    %1952 = vmatprep.subr.mxu0 0.0
    %1953 = vmatpush1.msra.mxu0 0.0
    %1954 = vmatprep.subr.mxu0 0.0
    %1955 = vmatpush1.msra.mxu0 0.0
    %1956 = vmatprep.subr.mxu0 0.0
    %1957 = vmatpush1.msra.mxu0 0.0
    %1958 = vmatprep.subr.mxu0 0.0
    %1959 = vmatpush1.msra.mxu0 0.0
    %1960 = vmatprep.subr.mxu0 0.0
    %1961 = vmatpush1.msra.mxu0 0.0
    %1962 = vmatprep.subr.mxu0 0.0
    %1963 = vmatpush1.msra.mxu0 0.0
    %1964 = vmatprep.subr.mxu0 0.0
    %1965 = vmatpush1.msra.mxu0 0.0
    %1966 = vmatprep.subr.mxu0 0.0
    %1967 = vmatpush1.msra.mxu0 0.0
    %1968 = vmatprep.subr.mxu0 0.0
    %1969 = vmatpush1.msra.mxu0 0.0
    %1970 = vmatprep.subr.mxu0 %v306
    %1971 = vmatpush1.msra.mxu0 %v305
    %1972 = vmatprep.subr.mxu0 %v304
    %1973 = vmatpush1.msra.mxu0 %v303
    %1974 = vmatprep.subr.mxu0 %v302
    %1975 = vmatpush1.msra.mxu0 %v301
    %1976 = vmatprep.subr.mxu0 %v300
    %1977 = vmatpush1.msra.mxu0 %v299
    %1978 = vmatprep.subr.mxu0 0.0
    %1979 = vmatpush2.msra.mxu0 0.0
    %1980 = vmatprep.subr.mxu0 0.0
    %1981 = vmatpush2.msra.mxu0 0.0
    %1982 = vmatprep.subr.mxu0 0.0
    %1983 = vmatpush2.msra.mxu0 0.0
    %1984 = vmatprep.subr.mxu0 0.0
    %1985 = vmatpush2.msra.mxu0 0.0
    %1986 = vmatprep.subr.mxu0 0.0
    %1987 = vmatpush2.msra.mxu0 0.0
    %1988 = vmatprep.subr.mxu0 0.0
    %1989 = vmatpush2.msra.mxu0 0.0
    %1990 = vmatprep.subr.mxu0 0.0
    %1991 = vmatpush2.msra.mxu0 0.0
    %1992 = vmatprep.subr.mxu0 0.0
    %1993 = vmatpush2.msra.mxu0 0.0
    %1994 = vmatprep.subr.mxu0 0.0
    %1995 = vmatpush2.msra.mxu0 0.0
    %1996 = vmatprep.subr.mxu0 0.0
    %1997 = vmatpush2.msra.mxu0 0.0
    %1998 = vmatprep.subr.mxu0 0.0
    %1999 = vmatpush2.msra.mxu0 0.0
    %2000 = vmatprep.subr.mxu0 0.0
    %2001 = vmatpush2.msra.mxu0 0.0
    %2002 = vmatprep.subr.mxu0 0.0
    %2003 = vmatpush2.msra.mxu0 0.0
    %2004 = vmatprep.subr.mxu0 0.0
    %2005 = vmatpush2.msra.mxu0 0.0
    %2006 = vmatprep.subr.mxu0 0.0
    %2007 = vmatpush2.msra.mxu0 0.0
    %2008 = vmatprep.subr.mxu0 0.0
    %2009 = vmatpush2.msra.mxu0 0.0
    %2010 = vmatprep.mubr.f32.mxu0 0.0
    %2011 = vmatmul.mubr.f32.gmra.mxu0 %v1941
    %v2012 = vpop.f32.mrf.mxu0
    %v2013 = vadd.f32 0.0, %v2012
    %v2014 = vpop.f32.mrf.mxu0
    %v2015 = vadd.f32 0.0, %v2014
    %2016 = vmatprep.mubr.f32.mxu0 0.0
    %2017 = vmatmul.mubr.f32.gmra.mxu0 %v1944
    %v2018 = vpop.f32.mrf.mxu0
    %v2019 = vadd.f32 0.0, %v2018
    %v2020 = vpop.f32.mrf.mxu0
    %v2021 = vadd.f32 0.0, %v2020
    %2022 = vdwg.mxu0
    %v2024 = vsel %vm143, %v1931, 0
    %v2027 = vsel %vm143, %v1937, 0
    %2029 = vmatprep.subr.mxu0 0.0
    %2030 = vmatpush1.msra.mxu0 0.0
    %2031 = vmatprep.subr.mxu0 0.0
    %2032 = vmatpush1.msra.mxu0 0.0
    %2033 = vmatprep.subr.mxu0 0.0
    %2034 = vmatpush1.msra.mxu0 0.0
    %2035 = vmatprep.subr.mxu0 0.0
    %2036 = vmatpush1.msra.mxu0 0.0
    %2037 = vmatprep.subr.mxu0 0.0
    %2038 = vmatpush1.msra.mxu0 0.0
    %2039 = vmatprep.subr.mxu0 0.0
    %2040 = vmatpush1.msra.mxu0 0.0
    %2041 = vmatprep.subr.mxu0 0.0
    %2042 = vmatpush1.msra.mxu0 0.0
    %2043 = vmatprep.subr.mxu0 0.0
    %2044 = vmatpush1.msra.mxu0 0.0
    %2045 = vmatprep.subr.mxu0 0.0
    %2046 = vmatpush1.msra.mxu0 0.0
    %2047 = vmatprep.subr.mxu0 0.0
    %2048 = vmatpush1.msra.mxu0 0.0
    %2049 = vmatprep.subr.mxu0 0.0
    %2050 = vmatpush1.msra.mxu0 0.0
    %2051 = vmatprep.subr.mxu0 0.0
    %2052 = vmatpush1.msra.mxu0 0.0
    %2053 = vmatprep.subr.mxu0 %v298
    %2054 = vmatpush1.msra.mxu0 %v297
    %2055 = vmatprep.subr.mxu0 %v296
    %2056 = vmatpush1.msra.mxu0 %v295
    %2057 = vmatprep.subr.mxu0 %v294
    %2058 = vmatpush1.msra.mxu0 %v293
    %2059 = vmatprep.subr.mxu0 %v292
    %2060 = vmatpush1.msra.mxu0 %v291
    %2061 = vmatprep.subr.mxu0 0.0
    %2062 = vmatpush2.msra.mxu0 0.0
    %2063 = vmatprep.subr.mxu0 0.0
    %2064 = vmatpush2.msra.mxu0 0.0
    %2065 = vmatprep.subr.mxu0 0.0
    %2066 = vmatpush2.msra.mxu0 0.0
    %2067 = vmatprep.subr.mxu0 0.0
    %2068 = vmatpush2.msra.mxu0 0.0
    %2069 = vmatprep.subr.mxu0 0.0
    %2070 = vmatpush2.msra.mxu0 0.0
    %2071 = vmatprep.subr.mxu0 0.0
    %2072 = vmatpush2.msra.mxu0 0.0
    %2073 = vmatprep.subr.mxu0 0.0
    %2074 = vmatpush2.msra.mxu0 0.0
    %2075 = vmatprep.subr.mxu0 0.0
    %2076 = vmatpush2.msra.mxu0 0.0
    %2077 = vmatprep.subr.mxu0 0.0
    %2078 = vmatpush2.msra.mxu0 0.0
    %2079 = vmatprep.subr.mxu0 0.0
    %2080 = vmatpush2.msra.mxu0 0.0
    %2081 = vmatprep.subr.mxu0 0.0
    %2082 = vmatpush2.msra.mxu0 0.0
    %2083 = vmatprep.subr.mxu0 0.0
    %2084 = vmatpush2.msra.mxu0 0.0
    %2085 = vmatprep.subr.mxu0 0.0
    %2086 = vmatpush2.msra.mxu0 0.0
    %2087 = vmatprep.subr.mxu0 0.0
    %2088 = vmatpush2.msra.mxu0 0.0
    %2089 = vmatprep.subr.mxu0 0.0
    %2090 = vmatpush2.msra.mxu0 0.0
    %2091 = vmatprep.subr.mxu0 0.0
    %2092 = vmatpush2.msra.mxu0 0.0
    %2093 = vmatprep.mubr.f32.mxu0 0.0
    %2094 = vmatmul.mubr.f32.gmra.mxu0 %v2024
    %v2095 = vpop.f32.mrf.mxu0
    %v2096 = vadd.f32 %v2013, %v2095
    %v2097 = vpop.f32.mrf.mxu0
    %v2098 = vadd.f32 %v2015, %v2097
    %2099 = vmatprep.mubr.f32.mxu0 0.0
    %2100 = vmatmul.mubr.f32.gmra.mxu0 %v2027
    %v2101 = vpop.f32.mrf.mxu0
    %v2102 = vadd.f32 %v2019, %v2101
    %v2103 = vpop.f32.mrf.mxu0
    %v2104 = vadd.f32 %v2021, %v2103
    %2105 = vdwg.mxu0
    %v2106 = vadd.f32 %v2096, %v312
    %v2107 = vadd.f32 %v2098, %v316
    %v2108 = vadd.f32 %v2102, %v312
    %v2109 = vadd.f32 %v2104, %v316
    %v2110 = vxor.u32 %v2106, 2147483648
    %v2111 = vxor.u32 %v2108, 2147483648
    %v2112 = vmul.f32 %v2110, 1.442695
    %v2113 = vpow.pop %v2112
    %v2114 = vmul.f32 %v2111, 1.442695
    %v2115 = vpow.pop %v2114
    %v2116 = vadd.f32 %v2113, 1.0
    %v2117 = vadd.f32 %v2115, 1.0
    %v2118 = vrcp.pop %v2116
    %v2119 = vmul.f32 1.0, %v2118
    %v2120 = vrcp.pop %v2117
    %v2121 = vmul.f32 1.0, %v2120
    %v2122 = vtanh.pop %v2106
    %v2123 = vtanh.pop %v2108
    %2126 = vrot.lane.b32.xlu0 %v2122, 32
    %v2127 = vpop.permute.xlu0 %2126
    %2128 = vrot.lane.b32.xlu0 %v2123, 32
    %v2129 = vpop.permute.xlu0 %2128
    %v2132 = vmul.f32 %v2119, %v2127
    %v2133 = vmul.f32 %v2121, %v2129
    %v2134 = vmul.f32 %v2119, %v1931
    %v2135 = vmul.f32 %v2121, %v1937
    %2138 = vrot.lane.b32.xlu0 %v2134, 96
    %v2139 = vpop.permute.xlu0 %2138
    %2140 = vrot.lane.b32.xlu0 %v2135, 96
    %v2141 = vpop.permute.xlu0 %2140
    %v2144 = vadd.f32 %v2132, %v2139
    %v2145 = vadd.f32 %v2133, %v2141
    %2146 = vrot.lane.b32.xlu0 %v1933, 32
    %v2147 = vpop.permute.xlu0 %2146
    %2148 = vrot.lane.b32.xlu0 %v1939, 32
    %v2149 = vpop.permute.xlu0 %2148
    %v2152 = vmul.f32 %v2119, %v2147
    %v2153 = vmul.f32 %v2121, %v2149
    %2156 = vrot.lane.b32.xlu0 %v2152, 64
    %v2157 = vpop.permute.xlu0 %2156
    %2158 = vrot.lane.b32.xlu0 %v2153, 64
    %v2159 = vpop.permute.xlu0 %2158
    %v2162 = vadd.f32 %v2144, %v2157
    %v2163 = vadd.f32 %v2145, %v2159
    %v2164 = vxor.u32 %v2107, 2147483648
    %v2165 = vxor.u32 %v2109, 2147483648
    %v2166 = vmul.f32 %v2164, 1.442695
    %v2167 = vpow.pop %v2166
    %v2168 = vmul.f32 %v2165, 1.442695
    %v2169 = vpow.pop %v2168
    %v2170 = vadd.f32 %v2167, 1.0
    %v2171 = vadd.f32 %v2169, 1.0
    %v2172 = vrcp.pop %v2170
    %v2173 = vmul.f32 1.0, %v2172
    %v2174 = vrcp.pop %v2171
    %v2175 = vmul.f32 1.0, %v2174
    %v2176 = vtanh.pop %v2162
    %v2177 = vtanh.pop %v2163
    %v2178 = vmul.f32 %v2173, %v2176
    %v2179 = vmul.f32 %v2175, %v2177
    %2182 = vrot.lane.b32.xlu0 %v2162, 32
    %v2183 = vpop.permute.xlu0 %2182
    %2184 = vrot.lane.b32.xlu0 %v2163, 32
    %v2185 = vpop.permute.xlu0 %2184
    %v2188 = vsel %vm143, %v2178, %v2183
    %v2189 = vsel %vm143, %v2179, %v2185
    %s2190 = sld [smem:[#allocation6 + $0xc]]
    %s2191 = scalar_lea.vmem [#allocation2], %s2190
    %2192 = vst.msk [vmem:[%s2191] sm:$0xff] %vm583, %v2188
    %s2193 = sld [smem:[#allocation6 + $0xd]]
    %s2194 = scalar_lea.vmem [#allocation2], %s2193
    %2195 = vst.msk [vmem:[%s2194] sm:$0xff] %vm583, %v2189
    %s2196 = sld [smem:[#allocation4 + $0xe]]
    %s2197 = sld [smem:[#allocation5 + $0xe]]
    %s2198 = scalar_lea.vmem [#allocation2], %s2196
    %v2199 = vld [vmem:[%s2198] sm:$0xff]
    %s2200 = scalar_lea.vmem [#allocation2], %s2197
    %v2201 = vld [vmem:[%s2200] sm:$0xff]
    %s2202 = sld [smem:[#allocation4 + $0xf]]
    %s2203 = sld [smem:[#allocation5 + $0xf]]
    %s2204 = scalar_lea.vmem [#allocation2], %s2202
    %v2205 = vld [vmem:[%s2204] sm:$0xff]
    %s2206 = scalar_lea.vmem [#allocation2], %s2203
    %v2207 = vld [vmem:[%s2206] sm:$0xff]
    %v2209 = vsel %vm143, %v2201, 0
    %v2212 = vsel %vm143, %v2207, 0
    %2214 = vmatprep.subr.mxu0 0.0
    %2215 = vmatpush1.msra.mxu0 0.0
    %2216 = vmatprep.subr.mxu0 0.0
    %2217 = vmatpush1.msra.mxu0 0.0
    %2218 = vmatprep.subr.mxu0 0.0
    %2219 = vmatpush1.msra.mxu0 0.0
    %2220 = vmatprep.subr.mxu0 0.0
    %2221 = vmatpush1.msra.mxu0 0.0
    %2222 = vmatprep.subr.mxu0 0.0
    %2223 = vmatpush1.msra.mxu0 0.0
    %2224 = vmatprep.subr.mxu0 0.0
    %2225 = vmatpush1.msra.mxu0 0.0
    %2226 = vmatprep.subr.mxu0 0.0
    %2227 = vmatpush1.msra.mxu0 0.0
    %2228 = vmatprep.subr.mxu0 0.0
    %2229 = vmatpush1.msra.mxu0 0.0
    %2230 = vmatprep.subr.mxu0 0.0
    %2231 = vmatpush1.msra.mxu0 0.0
    %2232 = vmatprep.subr.mxu0 0.0
    %2233 = vmatpush1.msra.mxu0 0.0
    %2234 = vmatprep.subr.mxu0 0.0
    %2235 = vmatpush1.msra.mxu0 0.0
    %2236 = vmatprep.subr.mxu0 0.0
    %2237 = vmatpush1.msra.mxu0 0.0
    %2238 = vmatprep.subr.mxu0 %v306
    %2239 = vmatpush1.msra.mxu0 %v305
    %2240 = vmatprep.subr.mxu0 %v304
    %2241 = vmatpush1.msra.mxu0 %v303
    %2242 = vmatprep.subr.mxu0 %v302
    %2243 = vmatpush1.msra.mxu0 %v301
    %2244 = vmatprep.subr.mxu0 %v300
    %2245 = vmatpush1.msra.mxu0 %v299
    %2246 = vmatprep.subr.mxu0 0.0
    %2247 = vmatpush2.msra.mxu0 0.0
    %2248 = vmatprep.subr.mxu0 0.0
    %2249 = vmatpush2.msra.mxu0 0.0
    %2250 = vmatprep.subr.mxu0 0.0
    %2251 = vmatpush2.msra.mxu0 0.0
    %2252 = vmatprep.subr.mxu0 0.0
    %2253 = vmatpush2.msra.mxu0 0.0
    %2254 = vmatprep.subr.mxu0 0.0
    %2255 = vmatpush2.msra.mxu0 0.0
    %2256 = vmatprep.subr.mxu0 0.0
    %2257 = vmatpush2.msra.mxu0 0.0
    %2258 = vmatprep.subr.mxu0 0.0
    %2259 = vmatpush2.msra.mxu0 0.0
    %2260 = vmatprep.subr.mxu0 0.0
    %2261 = vmatpush2.msra.mxu0 0.0
    %2262 = vmatprep.subr.mxu0 0.0
    %2263 = vmatpush2.msra.mxu0 0.0
    %2264 = vmatprep.subr.mxu0 0.0
    %2265 = vmatpush2.msra.mxu0 0.0
    %2266 = vmatprep.subr.mxu0 0.0
    %2267 = vmatpush2.msra.mxu0 0.0
    %2268 = vmatprep.subr.mxu0 0.0
    %2269 = vmatpush2.msra.mxu0 0.0
    %2270 = vmatprep.subr.mxu0 0.0
    %2271 = vmatpush2.msra.mxu0 0.0
    %2272 = vmatprep.subr.mxu0 0.0
    %2273 = vmatpush2.msra.mxu0 0.0
    %2274 = vmatprep.subr.mxu0 0.0
    %2275 = vmatpush2.msra.mxu0 0.0
    %2276 = vmatprep.subr.mxu0 0.0
    %2277 = vmatpush2.msra.mxu0 0.0
    %2278 = vmatprep.mubr.f32.mxu0 0.0
    %2279 = vmatmul.mubr.f32.gmra.mxu0 %v2209
    %v2280 = vpop.f32.mrf.mxu0
    %v2281 = vadd.f32 0.0, %v2280
    %v2282 = vpop.f32.mrf.mxu0
    %v2283 = vadd.f32 0.0, %v2282
    %2284 = vmatprep.mubr.f32.mxu0 0.0
    %2285 = vmatmul.mubr.f32.gmra.mxu0 %v2212
    %v2286 = vpop.f32.mrf.mxu0
    %v2287 = vadd.f32 0.0, %v2286
    %v2288 = vpop.f32.mrf.mxu0
    %v2289 = vadd.f32 0.0, %v2288
    %2290 = vdwg.mxu0
    %v2292 = vsel %vm143, %v2199, 0
    %v2295 = vsel %vm143, %v2205, 0
    %2297 = vmatprep.subr.mxu0 0.0
    %2298 = vmatpush1.msra.mxu0 0.0
    %2299 = vmatprep.subr.mxu0 0.0
    %2300 = vmatpush1.msra.mxu0 0.0
    %2301 = vmatprep.subr.mxu0 0.0
    %2302 = vmatpush1.msra.mxu0 0.0
    %2303 = vmatprep.subr.mxu0 0.0
    %2304 = vmatpush1.msra.mxu0 0.0
    %2305 = vmatprep.subr.mxu0 0.0
    %2306 = vmatpush1.msra.mxu0 0.0
    %2307 = vmatprep.subr.mxu0 0.0
    %2308 = vmatpush1.msra.mxu0 0.0
    %2309 = vmatprep.subr.mxu0 0.0
    %2310 = vmatpush1.msra.mxu0 0.0
    %2311 = vmatprep.subr.mxu0 0.0
    %2312 = vmatpush1.msra.mxu0 0.0
    %2313 = vmatprep.subr.mxu0 0.0
    %2314 = vmatpush1.msra.mxu0 0.0
    %2315 = vmatprep.subr.mxu0 0.0
    %2316 = vmatpush1.msra.mxu0 0.0
    %2317 = vmatprep.subr.mxu0 0.0
    %2318 = vmatpush1.msra.mxu0 0.0
    %2319 = vmatprep.subr.mxu0 0.0
    %2320 = vmatpush1.msra.mxu0 0.0
    %2321 = vmatprep.subr.mxu0 %v298
    %2322 = vmatpush1.msra.mxu0 %v297
    %2323 = vmatprep.subr.mxu0 %v296
    %2324 = vmatpush1.msra.mxu0 %v295
    %2325 = vmatprep.subr.mxu0 %v294
    %2326 = vmatpush1.msra.mxu0 %v293
    %2327 = vmatprep.subr.mxu0 %v292
    %2328 = vmatpush1.msra.mxu0 %v291
    %2329 = vmatprep.subr.mxu0 0.0
    %2330 = vmatpush2.msra.mxu0 0.0
    %2331 = vmatprep.subr.mxu0 0.0
    %2332 = vmatpush2.msra.mxu0 0.0
    %2333 = vmatprep.subr.mxu0 0.0
    %2334 = vmatpush2.msra.mxu0 0.0
    %2335 = vmatprep.subr.mxu0 0.0
    %2336 = vmatpush2.msra.mxu0 0.0
    %2337 = vmatprep.subr.mxu0 0.0
    %2338 = vmatpush2.msra.mxu0 0.0
    %2339 = vmatprep.subr.mxu0 0.0
    %2340 = vmatpush2.msra.mxu0 0.0
    %2341 = vmatprep.subr.mxu0 0.0
    %2342 = vmatpush2.msra.mxu0 0.0
    %2343 = vmatprep.subr.mxu0 0.0
    %2344 = vmatpush2.msra.mxu0 0.0
    %2345 = vmatprep.subr.mxu0 0.0
    %2346 = vmatpush2.msra.mxu0 0.0
    %2347 = vmatprep.subr.mxu0 0.0
    %2348 = vmatpush2.msra.mxu0 0.0
    %2349 = vmatprep.subr.mxu0 0.0
    %2350 = vmatpush2.msra.mxu0 0.0
    %2351 = vmatprep.subr.mxu0 0.0
    %2352 = vmatpush2.msra.mxu0 0.0
    %2353 = vmatprep.subr.mxu0 0.0
    %2354 = vmatpush2.msra.mxu0 0.0
    %2355 = vmatprep.subr.mxu0 0.0
    %2356 = vmatpush2.msra.mxu0 0.0
    %2357 = vmatprep.subr.mxu0 0.0
    %2358 = vmatpush2.msra.mxu0 0.0
    %2359 = vmatprep.subr.mxu0 0.0
    %2360 = vmatpush2.msra.mxu0 0.0
    %2361 = vmatprep.mubr.f32.mxu0 0.0
    %2362 = vmatmul.mubr.f32.gmra.mxu0 %v2292
    %v2363 = vpop.f32.mrf.mxu0
    %v2364 = vadd.f32 %v2281, %v2363
    %v2365 = vpop.f32.mrf.mxu0
    %v2366 = vadd.f32 %v2283, %v2365
    %2367 = vmatprep.mubr.f32.mxu0 0.0
    %2368 = vmatmul.mubr.f32.gmra.mxu0 %v2295
    %v2369 = vpop.f32.mrf.mxu0
    %v2370 = vadd.f32 %v2287, %v2369
    %v2371 = vpop.f32.mrf.mxu0
    %v2372 = vadd.f32 %v2289, %v2371
    %2373 = vdwg.mxu0
    %v2374 = vadd.f32 %v2364, %v312
    %v2375 = vadd.f32 %v2366, %v316
    %v2376 = vadd.f32 %v2370, %v312
    %v2377 = vadd.f32 %v2372, %v316
    %v2378 = vxor.u32 %v2374, 2147483648
    %v2379 = vxor.u32 %v2376, 2147483648
    %v2380 = vmul.f32 %v2378, 1.442695
    %v2381 = vpow.pop %v2380
    %v2382 = vmul.f32 %v2379, 1.442695
    %v2383 = vpow.pop %v2382
    %v2384 = vadd.f32 %v2381, 1.0
    %v2385 = vadd.f32 %v2383, 1.0
    %v2386 = vrcp.pop %v2384
    %v2387 = vmul.f32 1.0, %v2386
    %v2388 = vrcp.pop %v2385
    %v2389 = vmul.f32 1.0, %v2388
    %v2390 = vtanh.pop %v2374
    %v2391 = vtanh.pop %v2376
    %2394 = vrot.lane.b32.xlu0 %v2390, 32
    %v2395 = vpop.permute.xlu0 %2394
    %2396 = vrot.lane.b32.xlu0 %v2391, 32
    %v2397 = vpop.permute.xlu0 %2396
    %v2400 = vmul.f32 %v2387, %v2395
    %v2401 = vmul.f32 %v2389, %v2397
    %v2402 = vmul.f32 %v2387, %v2199
    %v2403 = vmul.f32 %v2389, %v2205
    %2406 = vrot.lane.b32.xlu0 %v2402, 96
    %v2407 = vpop.permute.xlu0 %2406
    %2408 = vrot.lane.b32.xlu0 %v2403, 96
    %v2409 = vpop.permute.xlu0 %2408
    %v2412 = vadd.f32 %v2400, %v2407
    %v2413 = vadd.f32 %v2401, %v2409
    %2414 = vrot.lane.b32.xlu0 %v2201, 32
    %v2415 = vpop.permute.xlu0 %2414
    %2416 = vrot.lane.b32.xlu0 %v2207, 32
    %v2417 = vpop.permute.xlu0 %2416
    %v2420 = vmul.f32 %v2387, %v2415
    %v2421 = vmul.f32 %v2389, %v2417
    %2424 = vrot.lane.b32.xlu0 %v2420, 64
    %v2425 = vpop.permute.xlu0 %2424
    %2426 = vrot.lane.b32.xlu0 %v2421, 64
    %v2427 = vpop.permute.xlu0 %2426
    %v2430 = vadd.f32 %v2412, %v2425
    %v2431 = vadd.f32 %v2413, %v2427
    %v2432 = vxor.u32 %v2375, 2147483648
    %v2433 = vxor.u32 %v2377, 2147483648
    %v2434 = vmul.f32 %v2432, 1.442695
    %v2435 = vpow.pop %v2434
    %v2436 = vmul.f32 %v2433, 1.442695
    %v2437 = vpow.pop %v2436
    %v2438 = vadd.f32 %v2435, 1.0
    %v2439 = vadd.f32 %v2437, 1.0
    %v2440 = vrcp.pop %v2438
    %v2441 = vmul.f32 1.0, %v2440
    %v2442 = vrcp.pop %v2439
    %v2443 = vmul.f32 1.0, %v2442
    %v2444 = vtanh.pop %v2430
    %v2445 = vtanh.pop %v2431
    %v2446 = vmul.f32 %v2441, %v2444
    %v2447 = vmul.f32 %v2443, %v2445
    %2450 = vrot.lane.b32.xlu0 %v2430, 32
    %v2451 = vpop.permute.xlu0 %2450
    %2452 = vrot.lane.b32.xlu0 %v2431, 32
    %v2453 = vpop.permute.xlu0 %2452
    %v2456 = vsel %vm143, %v2446, %v2451
    %v2457 = vsel %vm143, %v2447, %v2453
    %s2458 = sld [smem:[#allocation6 + $0xe]]
    %s2459 = scalar_lea.vmem [#allocation2], %s2458
    %2460 = vst.msk [vmem:[%s2459] sm:$0xff] %vm583, %v2456
    %s2461 = sld [smem:[#allocation6 + $0xf]]
    %s2462 = scalar_lea.vmem [#allocation2], %s2461
    %2463 = vst.msk [vmem:[%s2462] sm:$0xff] %vm583, %v2457
    %s2464 = sld [smem:[#allocation4 + $0x10]]
    %s2465 = sld [smem:[#allocation5 + $0x10]]
    %s2466 = scalar_lea.vmem [#allocation2], %s2464
    %v2467 = vld [vmem:[%s2466] sm:$0xff]
    %s2468 = scalar_lea.vmem [#allocation2], %s2465
    %v2469 = vld [vmem:[%s2468] sm:$0xff]
    %s2470 = sld [smem:[#allocation4 + $0x11]]
    %s2471 = sld [smem:[#allocation5 + $0x11]]
    %s2472 = scalar_lea.vmem [#allocation2], %s2470
    %v2473 = vld [vmem:[%s2472] sm:$0xff]
    %s2474 = scalar_lea.vmem [#allocation2], %s2471
    %v2475 = vld [vmem:[%s2474] sm:$0xff]
    %v2477 = vsel %vm143, %v2469, 0
    %v2480 = vsel %vm143, %v2475, 0
    %2482 = vmatprep.subr.mxu0 0.0
    %2483 = vmatpush1.msra.mxu0 0.0
    %2484 = vmatprep.subr.mxu0 0.0
    %2485 = vmatpush1.msra.mxu0 0.0
    %2486 = vmatprep.subr.mxu0 0.0
    %2487 = vmatpush1.msra.mxu0 0.0
    %2488 = vmatprep.subr.mxu0 0.0
    %2489 = vmatpush1.msra.mxu0 0.0
    %2490 = vmatprep.subr.mxu0 0.0
    %2491 = vmatpush1.msra.mxu0 0.0
    %2492 = vmatprep.subr.mxu0 0.0
    %2493 = vmatpush1.msra.mxu0 0.0
    %2494 = vmatprep.subr.mxu0 0.0
    %2495 = vmatpush1.msra.mxu0 0.0
    %2496 = vmatprep.subr.mxu0 0.0
    %2497 = vmatpush1.msra.mxu0 0.0
    %2498 = vmatprep.subr.mxu0 0.0
    %2499 = vmatpush1.msra.mxu0 0.0
    %2500 = vmatprep.subr.mxu0 0.0
    %2501 = vmatpush1.msra.mxu0 0.0
    %2502 = vmatprep.subr.mxu0 0.0
    %2503 = vmatpush1.msra.mxu0 0.0
    %2504 = vmatprep.subr.mxu0 0.0
    %2505 = vmatpush1.msra.mxu0 0.0
    %2506 = vmatprep.subr.mxu0 %v306
    %2507 = vmatpush1.msra.mxu0 %v305
    %2508 = vmatprep.subr.mxu0 %v304
    %2509 = vmatpush1.msra.mxu0 %v303
    %2510 = vmatprep.subr.mxu0 %v302
    %2511 = vmatpush1.msra.mxu0 %v301
    %2512 = vmatprep.subr.mxu0 %v300
    %2513 = vmatpush1.msra.mxu0 %v299
    %2514 = vmatprep.subr.mxu0 0.0
    %2515 = vmatpush2.msra.mxu0 0.0
    %2516 = vmatprep.subr.mxu0 0.0
    %2517 = vmatpush2.msra.mxu0 0.0
    %2518 = vmatprep.subr.mxu0 0.0
    %2519 = vmatpush2.msra.mxu0 0.0
    %2520 = vmatprep.subr.mxu0 0.0
    %2521 = vmatpush2.msra.mxu0 0.0
    %2522 = vmatprep.subr.mxu0 0.0
    %2523 = vmatpush2.msra.mxu0 0.0
    %2524 = vmatprep.subr.mxu0 0.0
    %2525 = vmatpush2.msra.mxu0 0.0
    %2526 = vmatprep.subr.mxu0 0.0
    %2527 = vmatpush2.msra.mxu0 0.0
    %2528 = vmatprep.subr.mxu0 0.0
    %2529 = vmatpush2.msra.mxu0 0.0
    %2530 = vmatprep.subr.mxu0 0.0
    %2531 = vmatpush2.msra.mxu0 0.0
    %2532 = vmatprep.subr.mxu0 0.0
    %2533 = vmatpush2.msra.mxu0 0.0
    %2534 = vmatprep.subr.mxu0 0.0
    %2535 = vmatpush2.msra.mxu0 0.0
    %2536 = vmatprep.subr.mxu0 0.0
    %2537 = vmatpush2.msra.mxu0 0.0
    %2538 = vmatprep.subr.mxu0 0.0
    %2539 = vmatpush2.msra.mxu0 0.0
    %2540 = vmatprep.subr.mxu0 0.0
    %2541 = vmatpush2.msra.mxu0 0.0
    %2542 = vmatprep.subr.mxu0 0.0
    %2543 = vmatpush2.msra.mxu0 0.0
    %2544 = vmatprep.subr.mxu0 0.0
    %2545 = vmatpush2.msra.mxu0 0.0
    %2546 = vmatprep.mubr.f32.mxu0 0.0
    %2547 = vmatmul.mubr.f32.gmra.mxu0 %v2477
    %v2548 = vpop.f32.mrf.mxu0
    %v2549 = vadd.f32 0.0, %v2548
    %v2550 = vpop.f32.mrf.mxu0
    %v2551 = vadd.f32 0.0, %v2550
    %2552 = vmatprep.mubr.f32.mxu0 0.0
    %2553 = vmatmul.mubr.f32.gmra.mxu0 %v2480
    %v2554 = vpop.f32.mrf.mxu0
    %v2555 = vadd.f32 0.0, %v2554
    %v2556 = vpop.f32.mrf.mxu0
    %v2557 = vadd.f32 0.0, %v2556
    %2558 = vdwg.mxu0
    %v2560 = vsel %vm143, %v2467, 0
    %v2563 = vsel %vm143, %v2473, 0
    %2565 = vmatprep.subr.mxu0 0.0
    %2566 = vmatpush1.msra.mxu0 0.0
    %2567 = vmatprep.subr.mxu0 0.0
    %2568 = vmatpush1.msra.mxu0 0.0
    %2569 = vmatprep.subr.mxu0 0.0
    %2570 = vmatpush1.msra.mxu0 0.0
    %2571 = vmatprep.subr.mxu0 0.0
    %2572 = vmatpush1.msra.mxu0 0.0
    %2573 = vmatprep.subr.mxu0 0.0
    %2574 = vmatpush1.msra.mxu0 0.0
    %2575 = vmatprep.subr.mxu0 0.0
    %2576 = vmatpush1.msra.mxu0 0.0
    %2577 = vmatprep.subr.mxu0 0.0
    %2578 = vmatpush1.msra.mxu0 0.0
    %2579 = vmatprep.subr.mxu0 0.0
    %2580 = vmatpush1.msra.mxu0 0.0
    %2581 = vmatprep.subr.mxu0 0.0
    %2582 = vmatpush1.msra.mxu0 0.0
    %2583 = vmatprep.subr.mxu0 0.0
    %2584 = vmatpush1.msra.mxu0 0.0
    %2585 = vmatprep.subr.mxu0 0.0
    %2586 = vmatpush1.msra.mxu0 0.0
    %2587 = vmatprep.subr.mxu0 0.0
    %2588 = vmatpush1.msra.mxu0 0.0
    %2589 = vmatprep.subr.mxu0 %v298
    %2590 = vmatpush1.msra.mxu0 %v297
    %2591 = vmatprep.subr.mxu0 %v296
    %2592 = vmatpush1.msra.mxu0 %v295
    %2593 = vmatprep.subr.mxu0 %v294
    %2594 = vmatpush1.msra.mxu0 %v293
    %2595 = vmatprep.subr.mxu0 %v292
    %2596 = vmatpush1.msra.mxu0 %v291
    %2597 = vmatprep.subr.mxu0 0.0
    %2598 = vmatpush2.msra.mxu0 0.0
    %2599 = vmatprep.subr.mxu0 0.0
    %2600 = vmatpush2.msra.mxu0 0.0
    %2601 = vmatprep.subr.mxu0 0.0
    %2602 = vmatpush2.msra.mxu0 0.0
    %2603 = vmatprep.subr.mxu0 0.0
    %2604 = vmatpush2.msra.mxu0 0.0
    %2605 = vmatprep.subr.mxu0 0.0
    %2606 = vmatpush2.msra.mxu0 0.0
    %2607 = vmatprep.subr.mxu0 0.0
    %2608 = vmatpush2.msra.mxu0 0.0
    %2609 = vmatprep.subr.mxu0 0.0
    %2610 = vmatpush2.msra.mxu0 0.0
    %2611 = vmatprep.subr.mxu0 0.0
    %2612 = vmatpush2.msra.mxu0 0.0
    %2613 = vmatprep.subr.mxu0 0.0
    %2614 = vmatpush2.msra.mxu0 0.0
    %2615 = vmatprep.subr.mxu0 0.0
    %2616 = vmatpush2.msra.mxu0 0.0
    %2617 = vmatprep.subr.mxu0 0.0
    %2618 = vmatpush2.msra.mxu0 0.0
    %2619 = vmatprep.subr.mxu0 0.0
    %2620 = vmatpush2.msra.mxu0 0.0
    %2621 = vmatprep.subr.mxu0 0.0
    %2622 = vmatpush2.msra.mxu0 0.0
    %2623 = vmatprep.subr.mxu0 0.0
    %2624 = vmatpush2.msra.mxu0 0.0
    %2625 = vmatprep.subr.mxu0 0.0
    %2626 = vmatpush2.msra.mxu0 0.0
    %2627 = vmatprep.subr.mxu0 0.0
    %2628 = vmatpush2.msra.mxu0 0.0
    %2629 = vmatprep.mubr.f32.mxu0 0.0
    %2630 = vmatmul.mubr.f32.gmra.mxu0 %v2560
    %v2631 = vpop.f32.mrf.mxu0
    %v2632 = vadd.f32 %v2549, %v2631
    %v2633 = vpop.f32.mrf.mxu0
    %v2634 = vadd.f32 %v2551, %v2633
    %2635 = vmatprep.mubr.f32.mxu0 0.0
    %2636 = vmatmul.mubr.f32.gmra.mxu0 %v2563
    %v2637 = vpop.f32.mrf.mxu0
    %v2638 = vadd.f32 %v2555, %v2637
    %v2639 = vpop.f32.mrf.mxu0
    %v2640 = vadd.f32 %v2557, %v2639
    %2641 = vdwg.mxu0
    %v2642 = vadd.f32 %v2632, %v312
    %v2643 = vadd.f32 %v2634, %v316
    %v2644 = vadd.f32 %v2638, %v312
    %v2645 = vadd.f32 %v2640, %v316
    %v2646 = vxor.u32 %v2642, 2147483648
    %v2647 = vxor.u32 %v2644, 2147483648
    %v2648 = vmul.f32 %v2646, 1.442695
    %v2649 = vpow.pop %v2648
    %v2650 = vmul.f32 %v2647, 1.442695
    %v2651 = vpow.pop %v2650
    %v2652 = vadd.f32 %v2649, 1.0
    %v2653 = vadd.f32 %v2651, 1.0
    %v2654 = vrcp.pop %v2652
    %v2655 = vmul.f32 1.0, %v2654
    %v2656 = vrcp.pop %v2653
    %v2657 = vmul.f32 1.0, %v2656
    %v2658 = vtanh.pop %v2642
    %v2659 = vtanh.pop %v2644
    %2662 = vrot.lane.b32.xlu0 %v2658, 32
    %v2663 = vpop.permute.xlu0 %2662
    %2664 = vrot.lane.b32.xlu0 %v2659, 32
    %v2665 = vpop.permute.xlu0 %2664
    %v2668 = vmul.f32 %v2655, %v2663
    %v2669 = vmul.f32 %v2657, %v2665
    %v2670 = vmul.f32 %v2655, %v2467
    %v2671 = vmul.f32 %v2657, %v2473
    %2674 = vrot.lane.b32.xlu0 %v2670, 96
    %v2675 = vpop.permute.xlu0 %2674
    %2676 = vrot.lane.b32.xlu0 %v2671, 96
    %v2677 = vpop.permute.xlu0 %2676
    %v2680 = vadd.f32 %v2668, %v2675
    %v2681 = vadd.f32 %v2669, %v2677
    %2682 = vrot.lane.b32.xlu0 %v2469, 32
    %v2683 = vpop.permute.xlu0 %2682
    %2684 = vrot.lane.b32.xlu0 %v2475, 32
    %v2685 = vpop.permute.xlu0 %2684
    %v2688 = vmul.f32 %v2655, %v2683
    %v2689 = vmul.f32 %v2657, %v2685
    %2692 = vrot.lane.b32.xlu0 %v2688, 64
    %v2693 = vpop.permute.xlu0 %2692
    %2694 = vrot.lane.b32.xlu0 %v2689, 64
    %v2695 = vpop.permute.xlu0 %2694
    %v2698 = vadd.f32 %v2680, %v2693
    %v2699 = vadd.f32 %v2681, %v2695
    %v2700 = vxor.u32 %v2643, 2147483648
    %v2701 = vxor.u32 %v2645, 2147483648
    %v2702 = vmul.f32 %v2700, 1.442695
    %v2703 = vpow.pop %v2702
    %v2704 = vmul.f32 %v2701, 1.442695
    %v2705 = vpow.pop %v2704
    %v2706 = vadd.f32 %v2703, 1.0
    %v2707 = vadd.f32 %v2705, 1.0
    %v2708 = vrcp.pop %v2706
    %v2709 = vmul.f32 1.0, %v2708
    %v2710 = vrcp.pop %v2707
    %v2711 = vmul.f32 1.0, %v2710
    %v2712 = vtanh.pop %v2698
    %v2713 = vtanh.pop %v2699
    %v2714 = vmul.f32 %v2709, %v2712
    %v2715 = vmul.f32 %v2711, %v2713
    %2718 = vrot.lane.b32.xlu0 %v2698, 32
    %v2719 = vpop.permute.xlu0 %2718
    %2720 = vrot.lane.b32.xlu0 %v2699, 32
    %v2721 = vpop.permute.xlu0 %2720
    %v2724 = vsel %vm143, %v2714, %v2719
    %v2725 = vsel %vm143, %v2715, %v2721
    %s2726 = sld [smem:[#allocation6 + $0x10]]
    %s2727 = scalar_lea.vmem [#allocation2], %s2726
    %2728 = vst.msk [vmem:[%s2727] sm:$0xff] %vm583, %v2724
    %s2729 = sld [smem:[#allocation6 + $0x11]]
    %s2730 = scalar_lea.vmem [#allocation2], %s2729
    %2731 = vst.msk [vmem:[%s2730] sm:$0xff] %vm583, %v2725
    %s2732 = sld [smem:[#allocation4 + $0x12]]
    %s2733 = sld [smem:[#allocation5 + $0x12]]
    %s2734 = scalar_lea.vmem [#allocation2], %s2732
    %v2735 = vld [vmem:[%s2734] sm:$0xff]
    %s2736 = scalar_lea.vmem [#allocation2], %s2733
    %v2737 = vld [vmem:[%s2736] sm:$0xff]
    %s2738 = sld [smem:[#allocation4 + $0x13]]
    %s2739 = sld [smem:[#allocation5 + $0x13]]
    %s2740 = scalar_lea.vmem [#allocation2], %s2738
    %v2741 = vld [vmem:[%s2740] sm:$0xff]
    %s2742 = scalar_lea.vmem [#allocation2], %s2739
    %v2743 = vld [vmem:[%s2742] sm:$0xff]
    %v2745 = vsel %vm143, %v2737, 0
    %v2748 = vsel %vm143, %v2743, 0
    %2750 = vmatprep.subr.mxu0 0.0
    %2751 = vmatpush1.msra.mxu0 0.0
    %2752 = vmatprep.subr.mxu0 0.0
    %2753 = vmatpush1.msra.mxu0 0.0
    %2754 = vmatprep.subr.mxu0 0.0
    %2755 = vmatpush1.msra.mxu0 0.0
    %2756 = vmatprep.subr.mxu0 0.0
    %2757 = vmatpush1.msra.mxu0 0.0
    %2758 = vmatprep.subr.mxu0 0.0
    %2759 = vmatpush1.msra.mxu0 0.0
    %2760 = vmatprep.subr.mxu0 0.0
    %2761 = vmatpush1.msra.mxu0 0.0
    %2762 = vmatprep.subr.mxu0 0.0
    %2763 = vmatpush1.msra.mxu0 0.0
    %2764 = vmatprep.subr.mxu0 0.0
    %2765 = vmatpush1.msra.mxu0 0.0
    %2766 = vmatprep.subr.mxu0 0.0
    %2767 = vmatpush1.msra.mxu0 0.0
    %2768 = vmatprep.subr.mxu0 0.0
    %2769 = vmatpush1.msra.mxu0 0.0
    %2770 = vmatprep.subr.mxu0 0.0
    %2771 = vmatpush1.msra.mxu0 0.0
    %2772 = vmatprep.subr.mxu0 0.0
    %2773 = vmatpush1.msra.mxu0 0.0
    %2774 = vmatprep.subr.mxu0 %v306
    %2775 = vmatpush1.msra.mxu0 %v305
    %2776 = vmatprep.subr.mxu0 %v304
    %2777 = vmatpush1.msra.mxu0 %v303
    %2778 = vmatprep.subr.mxu0 %v302
    %2779 = vmatpush1.msra.mxu0 %v301
    %2780 = vmatprep.subr.mxu0 %v300
    %2781 = vmatpush1.msra.mxu0 %v299
    %2782 = vmatprep.subr.mxu0 0.0
    %2783 = vmatpush2.msra.mxu0 0.0
    %2784 = vmatprep.subr.mxu0 0.0
    %2785 = vmatpush2.msra.mxu0 0.0
    %2786 = vmatprep.subr.mxu0 0.0
    %2787 = vmatpush2.msra.mxu0 0.0
    %2788 = vmatprep.subr.mxu0 0.0
    %2789 = vmatpush2.msra.mxu0 0.0
    %2790 = vmatprep.subr.mxu0 0.0
    %2791 = vmatpush2.msra.mxu0 0.0
    %2792 = vmatprep.subr.mxu0 0.0
    %2793 = vmatpush2.msra.mxu0 0.0
    %2794 = vmatprep.subr.mxu0 0.0
    %2795 = vmatpush2.msra.mxu0 0.0
    %2796 = vmatprep.subr.mxu0 0.0
    %2797 = vmatpush2.msra.mxu0 0.0
    %2798 = vmatprep.subr.mxu0 0.0
    %2799 = vmatpush2.msra.mxu0 0.0
    %2800 = vmatprep.subr.mxu0 0.0
    %2801 = vmatpush2.msra.mxu0 0.0
    %2802 = vmatprep.subr.mxu0 0.0
    %2803 = vmatpush2.msra.mxu0 0.0
    %2804 = vmatprep.subr.mxu0 0.0
    %2805 = vmatpush2.msra.mxu0 0.0
    %2806 = vmatprep.subr.mxu0 0.0
    %2807 = vmatpush2.msra.mxu0 0.0
    %2808 = vmatprep.subr.mxu0 0.0
    %2809 = vmatpush2.msra.mxu0 0.0
    %2810 = vmatprep.subr.mxu0 0.0
    %2811 = vmatpush2.msra.mxu0 0.0
    %2812 = vmatprep.subr.mxu0 0.0
    %2813 = vmatpush2.msra.mxu0 0.0
    %2814 = vmatprep.mubr.f32.mxu0 0.0
    %2815 = vmatmul.mubr.f32.gmra.mxu0 %v2745
    %v2816 = vpop.f32.mrf.mxu0
    %v2817 = vadd.f32 0.0, %v2816
    %v2818 = vpop.f32.mrf.mxu0
    %v2819 = vadd.f32 0.0, %v2818
    %2820 = vmatprep.mubr.f32.mxu0 0.0
    %2821 = vmatmul.mubr.f32.gmra.mxu0 %v2748
    %v2822 = vpop.f32.mrf.mxu0
    %v2823 = vadd.f32 0.0, %v2822
    %v2824 = vpop.f32.mrf.mxu0
    %v2825 = vadd.f32 0.0, %v2824
    %2826 = vdwg.mxu0
    %v2828 = vsel %vm143, %v2735, 0
    %v2831 = vsel %vm143, %v2741, 0
    %2833 = vmatprep.subr.mxu0 0.0
    %2834 = vmatpush1.msra.mxu0 0.0
    %2835 = vmatprep.subr.mxu0 0.0
    %2836 = vmatpush1.msra.mxu0 0.0
    %2837 = vmatprep.subr.mxu0 0.0
    %2838 = vmatpush1.msra.mxu0 0.0
    %2839 = vmatprep.subr.mxu0 0.0
    %2840 = vmatpush1.msra.mxu0 0.0
    %2841 = vmatprep.subr.mxu0 0.0
    %2842 = vmatpush1.msra.mxu0 0.0
    %2843 = vmatprep.subr.mxu0 0.0
    %2844 = vmatpush1.msra.mxu0 0.0
    %2845 = vmatprep.subr.mxu0 0.0
    %2846 = vmatpush1.msra.mxu0 0.0
    %2847 = vmatprep.subr.mxu0 0.0
    %2848 = vmatpush1.msra.mxu0 0.0
    %2849 = vmatprep.subr.mxu0 0.0
    %2850 = vmatpush1.msra.mxu0 0.0
    %2851 = vmatprep.subr.mxu0 0.0
    %2852 = vmatpush1.msra.mxu0 0.0
    %2853 = vmatprep.subr.mxu0 0.0
    %2854 = vmatpush1.msra.mxu0 0.0
    %2855 = vmatprep.subr.mxu0 0.0
    %2856 = vmatpush1.msra.mxu0 0.0
    %2857 = vmatprep.subr.mxu0 %v298
    %2858 = vmatpush1.msra.mxu0 %v297
    %2859 = vmatprep.subr.mxu0 %v296
    %2860 = vmatpush1.msra.mxu0 %v295
    %2861 = vmatprep.subr.mxu0 %v294
    %2862 = vmatpush1.msra.mxu0 %v293
    %2863 = vmatprep.subr.mxu0 %v292
    %2864 = vmatpush1.msra.mxu0 %v291
    %2865 = vmatprep.subr.mxu0 0.0
    %2866 = vmatpush2.msra.mxu0 0.0
    %2867 = vmatprep.subr.mxu0 0.0
    %2868 = vmatpush2.msra.mxu0 0.0
    %2869 = vmatprep.subr.mxu0 0.0
    %2870 = vmatpush2.msra.mxu0 0.0
    %2871 = vmatprep.subr.mxu0 0.0
    %2872 = vmatpush2.msra.mxu0 0.0
    %2873 = vmatprep.subr.mxu0 0.0
    %2874 = vmatpush2.msra.mxu0 0.0
    %2875 = vmatprep.subr.mxu0 0.0
    %2876 = vmatpush2.msra.mxu0 0.0
    %2877 = vmatprep.subr.mxu0 0.0
    %2878 = vmatpush2.msra.mxu0 0.0
    %2879 = vmatprep.subr.mxu0 0.0
    %2880 = vmatpush2.msra.mxu0 0.0
    %2881 = vmatprep.subr.mxu0 0.0
    %2882 = vmatpush2.msra.mxu0 0.0
    %2883 = vmatprep.subr.mxu0 0.0
    %2884 = vmatpush2.msra.mxu0 0.0
    %2885 = vmatprep.subr.mxu0 0.0
    %2886 = vmatpush2.msra.mxu0 0.0
    %2887 = vmatprep.subr.mxu0 0.0
    %2888 = vmatpush2.msra.mxu0 0.0
    %2889 = vmatprep.subr.mxu0 0.0
    %2890 = vmatpush2.msra.mxu0 0.0
    %2891 = vmatprep.subr.mxu0 0.0
    %2892 = vmatpush2.msra.mxu0 0.0
    %2893 = vmatprep.subr.mxu0 0.0
    %2894 = vmatpush2.msra.mxu0 0.0
    %2895 = vmatprep.subr.mxu0 0.0
    %2896 = vmatpush2.msra.mxu0 0.0
    %2897 = vmatprep.mubr.f32.mxu0 0.0
    %2898 = vmatmul.mubr.f32.gmra.mxu0 %v2828
    %v2899 = vpop.f32.mrf.mxu0
    %v2900 = vadd.f32 %v2817, %v2899
    %v2901 = vpop.f32.mrf.mxu0
    %v2902 = vadd.f32 %v2819, %v2901
    %2903 = vmatprep.mubr.f32.mxu0 0.0
    %2904 = vmatmul.mubr.f32.gmra.mxu0 %v2831
    %v2905 = vpop.f32.mrf.mxu0
    %v2906 = vadd.f32 %v2823, %v2905
    %v2907 = vpop.f32.mrf.mxu0
    %v2908 = vadd.f32 %v2825, %v2907
    %2909 = vdwg.mxu0
    %v2910 = vadd.f32 %v2900, %v312
    %v2911 = vadd.f32 %v2902, %v316
    %v2912 = vadd.f32 %v2906, %v312
    %v2913 = vadd.f32 %v2908, %v316
    %v2914 = vxor.u32 %v2910, 2147483648
    %v2915 = vxor.u32 %v2912, 2147483648
    %v2916 = vmul.f32 %v2914, 1.442695
    %v2917 = vpow.pop %v2916
    %v2918 = vmul.f32 %v2915, 1.442695
    %v2919 = vpow.pop %v2918
    %v2920 = vadd.f32 %v2917, 1.0
    %v2921 = vadd.f32 %v2919, 1.0
    %v2922 = vrcp.pop %v2920
    %v2923 = vmul.f32 1.0, %v2922
    %v2924 = vrcp.pop %v2921
    %v2925 = vmul.f32 1.0, %v2924
    %v2926 = vtanh.pop %v2910
    %v2927 = vtanh.pop %v2912
    %2930 = vrot.lane.b32.xlu0 %v2926, 32
    %v2931 = vpop.permute.xlu0 %2930
    %2932 = vrot.lane.b32.xlu0 %v2927, 32
    %v2933 = vpop.permute.xlu0 %2932
    %v2936 = vmul.f32 %v2923, %v2931
    %v2937 = vmul.f32 %v2925, %v2933
    %v2938 = vmul.f32 %v2923, %v2735
    %v2939 = vmul.f32 %v2925, %v2741
    %2942 = vrot.lane.b32.xlu0 %v2938, 96
    %v2943 = vpop.permute.xlu0 %2942
    %2944 = vrot.lane.b32.xlu0 %v2939, 96
    %v2945 = vpop.permute.xlu0 %2944
    %v2948 = vadd.f32 %v2936, %v2943
    %v2949 = vadd.f32 %v2937, %v2945
    %2950 = vrot.lane.b32.xlu0 %v2737, 32
    %v2951 = vpop.permute.xlu0 %2950
    %2952 = vrot.lane.b32.xlu0 %v2743, 32
    %v2953 = vpop.permute.xlu0 %2952
    %v2956 = vmul.f32 %v2923, %v2951
    %v2957 = vmul.f32 %v2925, %v2953
    %2960 = vrot.lane.b32.xlu0 %v2956, 64
    %v2961 = vpop.permute.xlu0 %2960
    %2962 = vrot.lane.b32.xlu0 %v2957, 64
    %v2963 = vpop.permute.xlu0 %2962
    %v2966 = vadd.f32 %v2948, %v2961
    %v2967 = vadd.f32 %v2949, %v2963
    %v2968 = vxor.u32 %v2911, 2147483648
    %v2969 = vxor.u32 %v2913, 2147483648
    %v2970 = vmul.f32 %v2968, 1.442695
    %v2971 = vpow.pop %v2970
    %v2972 = vmul.f32 %v2969, 1.442695
    %v2973 = vpow.pop %v2972
    %v2974 = vadd.f32 %v2971, 1.0
    %v2975 = vadd.f32 %v2973, 1.0
    %v2976 = vrcp.pop %v2974
    %v2977 = vmul.f32 1.0, %v2976
    %v2978 = vrcp.pop %v2975
    %v2979 = vmul.f32 1.0, %v2978
    %v2980 = vtanh.pop %v2966
    %v2981 = vtanh.pop %v2967
    %v2982 = vmul.f32 %v2977, %v2980
    %v2983 = vmul.f32 %v2979, %v2981
    %2986 = vrot.lane.b32.xlu0 %v2966, 32
    %v2987 = vpop.permute.xlu0 %2986
    %2988 = vrot.lane.b32.xlu0 %v2967, 32
    %v2989 = vpop.permute.xlu0 %2988
    %v2992 = vsel %vm143, %v2982, %v2987
    %v2993 = vsel %vm143, %v2983, %v2989
    %s2994 = sld [smem:[#allocation6 + $0x12]]
    %s2995 = scalar_lea.vmem [#allocation2], %s2994
    %2996 = vst.msk [vmem:[%s2995] sm:$0xff] %vm583, %v2992
    %s2997 = sld [smem:[#allocation6 + $0x13]]
    %s2998 = scalar_lea.vmem [#allocation2], %s2997
    %2999 = vst.msk [vmem:[%s2998] sm:$0xff] %vm583, %v2993
    %s3000 = sld [smem:[#allocation4 + $0x14]]
    %s3001 = sld [smem:[#allocation5 + $0x14]]
    %s3002 = scalar_lea.vmem [#allocation2], %s3000
    %v3003 = vld [vmem:[%s3002] sm:$0xff]
    %s3004 = scalar_lea.vmem [#allocation2], %s3001
    %v3005 = vld [vmem:[%s3004] sm:$0xff]
    %s3006 = sld [smem:[#allocation4 + $0x15]]
    %s3007 = sld [smem:[#allocation5 + $0x15]]
    %s3008 = scalar_lea.vmem [#allocation2], %s3006
    %v3009 = vld [vmem:[%s3008] sm:$0xff]
    %s3010 = scalar_lea.vmem [#allocation2], %s3007
    %v3011 = vld [vmem:[%s3010] sm:$0xff]
    %v3013 = vsel %vm143, %v3005, 0
    %v3016 = vsel %vm143, %v3011, 0
    %3018 = vmatprep.subr.mxu0 0.0
    %3019 = vmatpush1.msra.mxu0 0.0
    %3020 = vmatprep.subr.mxu0 0.0
    %3021 = vmatpush1.msra.mxu0 0.0
    %3022 = vmatprep.subr.mxu0 0.0
    %3023 = vmatpush1.msra.mxu0 0.0
    %3024 = vmatprep.subr.mxu0 0.0
    %3025 = vmatpush1.msra.mxu0 0.0
    %3026 = vmatprep.subr.mxu0 0.0
    %3027 = vmatpush1.msra.mxu0 0.0
    %3028 = vmatprep.subr.mxu0 0.0
    %3029 = vmatpush1.msra.mxu0 0.0
    %3030 = vmatprep.subr.mxu0 0.0
    %3031 = vmatpush1.msra.mxu0 0.0
    %3032 = vmatprep.subr.mxu0 0.0
    %3033 = vmatpush1.msra.mxu0 0.0
    %3034 = vmatprep.subr.mxu0 0.0
    %3035 = vmatpush1.msra.mxu0 0.0
    %3036 = vmatprep.subr.mxu0 0.0
    %3037 = vmatpush1.msra.mxu0 0.0
    %3038 = vmatprep.subr.mxu0 0.0
    %3039 = vmatpush1.msra.mxu0 0.0
    %3040 = vmatprep.subr.mxu0 0.0
    %3041 = vmatpush1.msra.mxu0 0.0
    %3042 = vmatprep.subr.mxu0 %v306
    %3043 = vmatpush1.msra.mxu0 %v305
    %3044 = vmatprep.subr.mxu0 %v304
    %3045 = vmatpush1.msra.mxu0 %v303
    %3046 = vmatprep.subr.mxu0 %v302
    %3047 = vmatpush1.msra.mxu0 %v301
    %3048 = vmatprep.subr.mxu0 %v300
    %3049 = vmatpush1.msra.mxu0 %v299
    %3050 = vmatprep.subr.mxu0 0.0
    %3051 = vmatpush2.msra.mxu0 0.0
    %3052 = vmatprep.subr.mxu0 0.0
    %3053 = vmatpush2.msra.mxu0 0.0
    %3054 = vmatprep.subr.mxu0 0.0
    %3055 = vmatpush2.msra.mxu0 0.0
    %3056 = vmatprep.subr.mxu0 0.0
    %3057 = vmatpush2.msra.mxu0 0.0
    %3058 = vmatprep.subr.mxu0 0.0
    %3059 = vmatpush2.msra.mxu0 0.0
    %3060 = vmatprep.subr.mxu0 0.0
    %3061 = vmatpush2.msra.mxu0 0.0
    %3062 = vmatprep.subr.mxu0 0.0
    %3063 = vmatpush2.msra.mxu0 0.0
    %3064 = vmatprep.subr.mxu0 0.0
    %3065 = vmatpush2.msra.mxu0 0.0
    %3066 = vmatprep.subr.mxu0 0.0
    %3067 = vmatpush2.msra.mxu0 0.0
    %3068 = vmatprep.subr.mxu0 0.0
    %3069 = vmatpush2.msra.mxu0 0.0
    %3070 = vmatprep.subr.mxu0 0.0
    %3071 = vmatpush2.msra.mxu0 0.0
    %3072 = vmatprep.subr.mxu0 0.0
    %3073 = vmatpush2.msra.mxu0 0.0
    %3074 = vmatprep.subr.mxu0 0.0
    %3075 = vmatpush2.msra.mxu0 0.0
    %3076 = vmatprep.subr.mxu0 0.0
    %3077 = vmatpush2.msra.mxu0 0.0
    %3078 = vmatprep.subr.mxu0 0.0
    %3079 = vmatpush2.msra.mxu0 0.0
    %3080 = vmatprep.subr.mxu0 0.0
    %3081 = vmatpush2.msra.mxu0 0.0
    %3082 = vmatprep.mubr.f32.mxu0 0.0
    %3083 = vmatmul.mubr.f32.gmra.mxu0 %v3013
    %v3084 = vpop.f32.mrf.mxu0
    %v3085 = vadd.f32 0.0, %v3084
    %v3086 = vpop.f32.mrf.mxu0
    %v3087 = vadd.f32 0.0, %v3086
    %3088 = vmatprep.mubr.f32.mxu0 0.0
    %3089 = vmatmul.mubr.f32.gmra.mxu0 %v3016
    %v3090 = vpop.f32.mrf.mxu0
    %v3091 = vadd.f32 0.0, %v3090
    %v3092 = vpop.f32.mrf.mxu0
    %v3093 = vadd.f32 0.0, %v3092
    %3094 = vdwg.mxu0
    %v3096 = vsel %vm143, %v3003, 0
    %v3099 = vsel %vm143, %v3009, 0
    %3101 = vmatprep.subr.mxu0 0.0
    %3102 = vmatpush1.msra.mxu0 0.0
    %3103 = vmatprep.subr.mxu0 0.0
    %3104 = vmatpush1.msra.mxu0 0.0
    %3105 = vmatprep.subr.mxu0 0.0
    %3106 = vmatpush1.msra.mxu0 0.0
    %3107 = vmatprep.subr.mxu0 0.0
    %3108 = vmatpush1.msra.mxu0 0.0
    %3109 = vmatprep.subr.mxu0 0.0
    %3110 = vmatpush1.msra.mxu0 0.0
    %3111 = vmatprep.subr.mxu0 0.0
    %3112 = vmatpush1.msra.mxu0 0.0
    %3113 = vmatprep.subr.mxu0 0.0
    %3114 = vmatpush1.msra.mxu0 0.0
    %3115 = vmatprep.subr.mxu0 0.0
    %3116 = vmatpush1.msra.mxu0 0.0
    %3117 = vmatprep.subr.mxu0 0.0
    %3118 = vmatpush1.msra.mxu0 0.0
    %3119 = vmatprep.subr.mxu0 0.0
    %3120 = vmatpush1.msra.mxu0 0.0
    %3121 = vmatprep.subr.mxu0 0.0
    %3122 = vmatpush1.msra.mxu0 0.0
    %3123 = vmatprep.subr.mxu0 0.0
    %3124 = vmatpush1.msra.mxu0 0.0
    %3125 = vmatprep.subr.mxu0 %v298
    %3126 = vmatpush1.msra.mxu0 %v297
    %3127 = vmatprep.subr.mxu0 %v296
    %3128 = vmatpush1.msra.mxu0 %v295
    %3129 = vmatprep.subr.mxu0 %v294
    %3130 = vmatpush1.msra.mxu0 %v293
    %3131 = vmatprep.subr.mxu0 %v292
    %3132 = vmatpush1.msra.mxu0 %v291
    %3133 = vmatprep.subr.mxu0 0.0
    %3134 = vmatpush2.msra.mxu0 0.0
    %3135 = vmatprep.subr.mxu0 0.0
    %3136 = vmatpush2.msra.mxu0 0.0
    %3137 = vmatprep.subr.mxu0 0.0
    %3138 = vmatpush2.msra.mxu0 0.0
    %3139 = vmatprep.subr.mxu0 0.0
    %3140 = vmatpush2.msra.mxu0 0.0
    %3141 = vmatprep.subr.mxu0 0.0
    %3142 = vmatpush2.msra.mxu0 0.0
    %3143 = vmatprep.subr.mxu0 0.0
    %3144 = vmatpush2.msra.mxu0 0.0
    %3145 = vmatprep.subr.mxu0 0.0
    %3146 = vmatpush2.msra.mxu0 0.0
    %3147 = vmatprep.subr.mxu0 0.0
    %3148 = vmatpush2.msra.mxu0 0.0
    %3149 = vmatprep.subr.mxu0 0.0
    %3150 = vmatpush2.msra.mxu0 0.0
    %3151 = vmatprep.subr.mxu0 0.0
    %3152 = vmatpush2.msra.mxu0 0.0
    %3153 = vmatprep.subr.mxu0 0.0
    %3154 = vmatpush2.msra.mxu0 0.0
    %3155 = vmatprep.subr.mxu0 0.0
    %3156 = vmatpush2.msra.mxu0 0.0
    %3157 = vmatprep.subr.mxu0 0.0
    %3158 = vmatpush2.msra.mxu0 0.0
    %3159 = vmatprep.subr.mxu0 0.0
    %3160 = vmatpush2.msra.mxu0 0.0
    %3161 = vmatprep.subr.mxu0 0.0
    %3162 = vmatpush2.msra.mxu0 0.0
    %3163 = vmatprep.subr.mxu0 0.0
    %3164 = vmatpush2.msra.mxu0 0.0
    %3165 = vmatprep.mubr.f32.mxu0 0.0
    %3166 = vmatmul.mubr.f32.gmra.mxu0 %v3096
    %v3167 = vpop.f32.mrf.mxu0
    %v3168 = vadd.f32 %v3085, %v3167
    %v3169 = vpop.f32.mrf.mxu0
    %v3170 = vadd.f32 %v3087, %v3169
    %3171 = vmatprep.mubr.f32.mxu0 0.0
    %3172 = vmatmul.mubr.f32.gmra.mxu0 %v3099
    %v3173 = vpop.f32.mrf.mxu0
    %v3174 = vadd.f32 %v3091, %v3173
    %v3175 = vpop.f32.mrf.mxu0
    %v3176 = vadd.f32 %v3093, %v3175
    %3177 = vdwg.mxu0
    %v3178 = vadd.f32 %v3168, %v312
    %v3179 = vadd.f32 %v3170, %v316
    %v3180 = vadd.f32 %v3174, %v312
    %v3181 = vadd.f32 %v3176, %v316
    %v3182 = vxor.u32 %v3178, 2147483648
    %v3183 = vxor.u32 %v3180, 2147483648
    %v3184 = vmul.f32 %v3182, 1.442695
    %v3185 = vpow.pop %v3184
    %v3186 = vmul.f32 %v3183, 1.442695
    %v3187 = vpow.pop %v3186
    %v3188 = vadd.f32 %v3185, 1.0
    %v3189 = vadd.f32 %v3187, 1.0
    %v3190 = vrcp.pop %v3188
    %v3191 = vmul.f32 1.0, %v3190
    %v3192 = vrcp.pop %v3189
    %v3193 = vmul.f32 1.0, %v3192
    %v3194 = vtanh.pop %v3178
    %v3195 = vtanh.pop %v3180
    %3198 = vrot.lane.b32.xlu0 %v3194, 32
    %v3199 = vpop.permute.xlu0 %3198
    %3200 = vrot.lane.b32.xlu0 %v3195, 32
    %v3201 = vpop.permute.xlu0 %3200
    %v3204 = vmul.f32 %v3191, %v3199
    %v3205 = vmul.f32 %v3193, %v3201
    %v3206 = vmul.f32 %v3191, %v3003
    %v3207 = vmul.f32 %v3193, %v3009
    %3210 = vrot.lane.b32.xlu0 %v3206, 96
    %v3211 = vpop.permute.xlu0 %3210
    %3212 = vrot.lane.b32.xlu0 %v3207, 96
    %v3213 = vpop.permute.xlu0 %3212
    %v3216 = vadd.f32 %v3204, %v3211
    %v3217 = vadd.f32 %v3205, %v3213
    %3218 = vrot.lane.b32.xlu0 %v3005, 32
    %v3219 = vpop.permute.xlu0 %3218
    %3220 = vrot.lane.b32.xlu0 %v3011, 32
    %v3221 = vpop.permute.xlu0 %3220
    %v3224 = vmul.f32 %v3191, %v3219
    %v3225 = vmul.f32 %v3193, %v3221
    %3228 = vrot.lane.b32.xlu0 %v3224, 64
    %v3229 = vpop.permute.xlu0 %3228
    %3230 = vrot.lane.b32.xlu0 %v3225, 64
    %v3231 = vpop.permute.xlu0 %3230
    %v3234 = vadd.f32 %v3216, %v3229
    %v3235 = vadd.f32 %v3217, %v3231
    %v3236 = vxor.u32 %v3179, 2147483648
    %v3237 = vxor.u32 %v3181, 2147483648
    %v3238 = vmul.f32 %v3236, 1.442695
    %v3239 = vpow.pop %v3238
    %v3240 = vmul.f32 %v3237, 1.442695
    %v3241 = vpow.pop %v3240
    %v3242 = vadd.f32 %v3239, 1.0
    %v3243 = vadd.f32 %v3241, 1.0
    %v3244 = vrcp.pop %v3242
    %v3245 = vmul.f32 1.0, %v3244
    %v3246 = vrcp.pop %v3243
    %v3247 = vmul.f32 1.0, %v3246
    %v3248 = vtanh.pop %v3234
    %v3249 = vtanh.pop %v3235
    %v3250 = vmul.f32 %v3245, %v3248
    %v3251 = vmul.f32 %v3247, %v3249
    %3254 = vrot.lane.b32.xlu0 %v3234, 32
    %v3255 = vpop.permute.xlu0 %3254
    %3256 = vrot.lane.b32.xlu0 %v3235, 32
    %v3257 = vpop.permute.xlu0 %3256
    %v3260 = vsel %vm143, %v3250, %v3255
    %v3261 = vsel %vm143, %v3251, %v3257
    %s3262 = sld [smem:[#allocation6 + $0x14]]
    %s3263 = scalar_lea.vmem [#allocation2], %s3262
    %3264 = vst.msk [vmem:[%s3263] sm:$0xff] %vm583, %v3260
    %s3265 = sld [smem:[#allocation6 + $0x15]]
    %s3266 = scalar_lea.vmem [#allocation2], %s3265
    %3267 = vst.msk [vmem:[%s3266] sm:$0xff] %vm583, %v3261
    %s3268 = sld [smem:[#allocation7]]
    %s3269 = scalar_lea.vmem [#allocation2], %s3268
    %v3270 = vld [vmem:[%s3269] sm:$0x1]
    %s3271 = sld [smem:[#allocation7 + $0x1]]
    %s3272 = scalar_lea.vmem [#allocation2], %s3271
    %v3273 = vld [vmem:[%s3272] sm:$0x1]
    %v3275 = vrot.slane %v3273, 7
    %vm3277 = vcmask 1040384
    %v3278 = vsel %vm3277, %v3270, %v3275
    %vm3279 = vcmask 254976
    %3280 = vst.msk [vmem:[#allocation16] sm:$0x3] %vm3279, %v3278
    // Predicated region
    $region42: #{tpu_custom_call.1} parent=1 // pred_check
      _
    $region43: #{tpu_custom_call.1} parent=1 // pred_check_branch
      %3282 = sbr.rel (0) target = $region45
    $region44: #{tpu_custom_call.1} parent=1 // pred_region
      %s3284 = ssub.s32 32, 32
      %3285 = vsyncadd [#allocation10], %s3284
      %s3287 = sshll.u32 [#allocation16], 4
      %s3288 = int_to_ptr.vmem [resolvable:$true] %s3287
      %3290 = dma.vmem_to_hbm [thread:$0]  %s3288, 32, %s10, [#allocation10]
    $region45: #{tpu_custom_call.1} parent=1 // pred_fallthru
      _
    // Predicated region
    $region46: #{tpu_custom_call.1} parent=1 // pred_check
      _
    $region47: #{tpu_custom_call.1} parent=1 // pred_check_branch
      %3292 = sbr.rel (0) target = $region49
    $region48: #{tpu_custom_call.1} parent=1 // pred_region
      %3293 = dma.done [#allocation10], 32
    $region49: #{tpu_custom_call.1} parent=1 // pred_fallthru
      _
    %3294 = vsyncpa [#allocation9], 1
    %3295 = vsyncpa [#allocation12], 1
    %3296 = vsyncpa [#allocation15], 1
    %3297 = vsyncpa [#allocation10], 1

</llo_original>
